<compile_context>
chip_gen: v7x
topology: tpu7x:2x2x1
jax: 0.10.0
libtpu: 0.0.40
codegen_flags: <defaults>
</compile_context>

<pallas_src>
import functools

import jax
import jax.numpy as jnp
from jax.experimental import pallas as pl
from jax.experimental.pallas import tpu as pltpu


_VMEM_SPEC = pl.BlockSpec(memory_space=pltpu.MemorySpace.VMEM)


def _round_up(x, m):
    return (x + m - 1) // m * m


def _vmem_limit_bytes(*nbytes):
    total = sum(int(n) for n in nbytes)
    # generous headroom for double buffering + Mosaic internal scratch,
    # clamped to something safe on every generation (v7x physical = 64 MiB).
    return int(min(max(3 * total + (1 << 20), 16 << 20), 64 << 20))


# ----------------------------------------------------------------------------
# Pallas kernels
# ----------------------------------------------------------------------------
def _linear_kernel(x_ref, wT_ref, b_ref, o_ref, *, relu):
    # y = x @ W^T + b  (bf16 operands on the MXU, f32 accumulate / bias / relu)
    y = jnp.dot(x_ref[...].astype(jnp.bfloat16), wT_ref[...],
                preferred_element_type=jnp.float32) + b_ref[...]
    if relu:
        y = jnp.maximum(y, 0.0)
    o_ref[...] = y


def _bilstm_rec_kernel(gx_ref, whhT_f_ref, whhT_b_ref, o_ref,
                       hf_sc, cf_sc, hb_sc, cb_sc):
    """Fused fwd+bwd LSTM recurrence (input projection already applied).

    gx_ref:     (T, Bp, 8H)  precomputed x@W_ih^T + b for [fwd | bwd]
    whhT_*_ref: (H, 4H)      hidden->hidden weights (transposed, bf16)
    o_ref:      (T, Bp, 2H)  per-step hidden states [fwd | bwd]
    h*_sc/c*_sc:(Bp, H)      recurrent state scratch (f32)
    PyTorch gate order: [i, f, g, o].
    """
    T = gx_ref.shape[0]
    H = whhT_f_ref.shape[0]

    hf_sc[...] = jnp.zeros_like(hf_sc)
    cf_sc[...] = jnp.zeros_like(cf_sc)
    hb_sc[...] = jnp.zeros_like(hb_sc)
    cb_sc[...] = jnp.zeros_like(cb_sc)

    def cell(gates, c_prev):
        i_g = jax.nn.sigmoid(gates[:, 0:H])
        f_g = jax.nn.sigmoid(gates[:, H:2 * H])
        g_g = jnp.tanh(gates[:, 2 * H:3 * H])
        o_g = jax.nn.sigmoid(gates[:, 3 * H:4 * H])
        c_new = f_g * c_prev + i_g * g_g
        h_new = o_g * jnp.tanh(c_new)
        return h_new, c_new

    def step(t, carry):
        rt = T - 1 - t
        gx_t = gx_ref[t]        # (Bp, 8H)  fwd gates live in [:, :4H]
        gx_rt = gx_ref[rt]      # (Bp, 8H)  bwd gates live in [:, 4H:]
        gates_f = gx_t[:, 0:4 * H] + jnp.dot(
            hf_sc[...].astype(jnp.bfloat16), whhT_f_ref[...],
            preferred_element_type=jnp.float32)
        gates_b = gx_rt[:, 4 * H:8 * H] + jnp.dot(
            hb_sc[...].astype(jnp.bfloat16), whhT_b_ref[...],
            preferred_element_type=jnp.float32)
        h_f, c_f = cell(gates_f, cf_sc[...])
        h_b, c_b = cell(gates_b, cb_sc[...])
        hf_sc[...] = h_f
        cf_sc[...] = c_f
        hb_sc[...] = h_b
        cb_sc[...] = c_b
        o_ref[t, :, 0:H] = h_f
        o_ref[rt, :, H:2 * H] = h_b
        return carry

    unroll = True if T <= 16 else 4
    jax.lax.fori_loop(0, T, step, 0, unroll=unroll)


# ----------------------------------------------------------------------------
# Pallas wrappers
# ----------------------------------------------------------------------------
def pallas_linear(x, wT, b, relu=False):
    """y = x @ wT + b (optionally ReLU).  x: (N, F) f32, wT: (F, O) bf16, b: (1, O) f32."""
    N, F = x.shape
    O = wT.shape[1]
    block_rows = min(512, _round_up(max(N, 1), 8))
    Np = _round_up(N, block_rows)
    if Np != N:
        x = jnp.pad(x, ((0, Np - N), (0, 0)))
    grid = (Np // block_rows,)
    vmem_limit = _vmem_limit_bytes(
        block_rows * F * 4, F * O * 2, O * 4, block_rows * O * 4)
    out = pl.pallas_call(
        functools.partial(_linear_kernel, relu=relu),
        out_shape=jax.ShapeDtypeStruct((Np, O), jnp.float32),
        grid_spec=pltpu.PrefetchScalarGridSpec(
            num_scalar_prefetch=0,
            grid=grid,
            in_specs=[
                pl.BlockSpec((block_rows, F), lambda i: (i, 0)),   # streamed rows
                pl.BlockSpec((F, O), lambda i: (0, 0)),            # resident weights
                pl.BlockSpec((1, O), lambda i: (0, 0)),            # resident bias
            ],
            out_specs=pl.BlockSpec((block_rows, O), lambda i: (i, 0)),
        ),
        compiler_params=pltpu.CompilerParams(
            dimension_semantics=("parallel",),
            vmem_limit_bytes=vmem_limit),
    )(x, wT, b)
    return out[:N]


def pallas_bilstm_recurrence(gx, whhT_f, whhT_b):
    """gx: (T, Bp, 8H) precomputed gates -> (T, Bp, 2H) [fwd | bwd] hidden states."""
    T, Bp, G8 = gx.shape
    H = whhT_f.shape[0]
    vmem_limit = _vmem_limit_bytes(
        T * Bp * G8 * 4,          # gates_x
        2 * H * 4 * H * 2,        # both W_hh (bf16)
        T * Bp * 2 * H * 4,       # output
        4 * Bp * H * 4)           # h/c scratch
    return pl.pallas_call(
        _bilstm_rec_kernel,
        out_shape=jax.ShapeDtypeStruct((T, Bp, 2 * H), jnp.float32),
        in_specs=[_VMEM_SPEC] * 3,
        out_specs=_VMEM_SPEC,
        scratch_shapes=[pltpu.VMEM((Bp, H), jnp.float32) for _ in range(4)],
        compiler_params=pltpu.CompilerParams(vmem_limit_bytes=vmem_limit),
    )(gx, whhT_f, whhT_b)


def bilstm_layer(x, layer_p):
    """x: (T, B, I) time-major -> (T, B, 2H)."""
    T, B, I = x.shape
    H = layer_p["whhT_f"].shape[0]
    # Hoisted input projection for both directions: one big MXU matmul.
    gx = pallas_linear(x.reshape(T * B, I), layer_p["wih_catT"], layer_p["b_cat"])
    gx = gx.reshape(T, B, 8 * H)
    Bp = _round_up(B, 8)                       # pad recurrent batch to 8 sublanes
    if Bp != B:
        gx = jnp.pad(gx, ((0, 0), (0, Bp - B), (0, 0)))
    out = pallas_bilstm_recurrence(gx, layer_p["whhT_f"], layer_p["whhT_b"])
    return out[:, :B, :]


# ----------------------------------------------------------------------------
# Parameter init (deterministic, PyTorch-like uniform bounds); weights -> bf16
# ----------------------------------------------------------------------------
def _uniform(key, shape, bound):
    return jax.random.uniform(key, shape, jnp.float32, -bound, bound)


def init_tracker(key, input_size, hidden_size, output_size, num_layers=2):
    H = hidden_size
    keys = jax.random.split(key, 4 + num_layers * 2)
    k_idx = 0

    def nk():
        nonlocal k_idx
        k = keys[k_idx]
        k_idx += 1
        return k

    bnd1 = 1.0 / float(input_size) ** 0.5
    params = {
        "l1_wT": _uniform(nk(), (input_size, H), bnd1).astype(jnp.bfloat16),
        "l1_b": _uniform(nk(), (1, H), bnd1),
    }
    bnd_h = 1.0 / float(H) ** 0.5
    lstm = []
    for layer in range(num_layers):
        in_dim = H if layer == 0 else 2 * H
        dirs = {}
        for dname in ("fwd", "bwd"):
            sub = jax.random.split(nk(), 4)
            wih = _uniform(sub[0], (4 * H, in_dim), bnd_h)
            whh = _uniform(sub[1], (4 * H, H), bnd_h)
            bih = _uniform(sub[2], (4 * H,), bnd_h)
            bhh = _uniform(sub[3], (4 * H,), bnd_h)
            dirs[dname] = (wih, whh, bih, bhh)
        wih_f, whh_f, bih_f, bhh_f = dirs["fwd"]
        wih_b, whh_b, bih_b, bhh_b = dirs["bwd"]
        lstm.append({
            # fused input->hidden weights of both directions: (I, 8H) bf16
            "wih_catT": jnp.concatenate([wih_f.T, wih_b.T], axis=1).astype(jnp.bfloat16),
            # combined bias (b_ih + b_hh) of both directions: (1, 8H) f32
            "b_cat": jnp.concatenate([bih_f + bhh_f, bih_b + bhh_b]).reshape(1, 8 * H),
            # hidden->hidden weights per direction: (H, 4H) bf16
            "whhT_f": whh_f.T.astype(jnp.bfloat16),
            "whhT_b": whh_b.T.astype(jnp.bfloat16),
        })
    params["lstm"] = lstm
    bnd2 = 1.0 / float(2 * H) ** 0.5
    params["l2_wT"] = _uniform(nk(), (2 * H, output_size), bnd2).astype(jnp.bfloat16)
    params["l2_b"] = _uniform(nk(), (1, output_size), bnd2)
    return params


def init_lipnet(key, imu=4, hidden_size=1024):
    k1, k2 = jax.random.split(key)
    return {
        "joint_tracker": init_tracker(k1, imu * 12 + 78, hidden_size, 72),
        "hybrik": init_tracker(k2, imu * 12 + 72 + 78, hidden_size, 24 * 6),
    }


# ----------------------------------------------------------------------------
# Forward passes
# ----------------------------------------------------------------------------
def tracker_forward(params, x):
    """x: (B, T, F) -> (B, T, output_size)."""
    B, T, F = x.shape
    # dropout(p=0.2) is identity in eval mode.
    h = pallas_linear(x.reshape(B * T, F), params["l1_wT"], params["l1_b"], relu=True)
    H = h.shape[-1]
    h = h.reshape(B, T, H).transpose(1, 0, 2)        # (T, B, H) time-major
    for layer in params["lstm"]:
        h = bilstm_layer(h, layer)                   # (T, B, 2H)
    h = h.transpose(1, 0, 2).reshape(B * T, -1)      # (B*T, 2H)
    out = pallas_linear(h, params["l2_wT"], params["l2_b"], relu=False)
    return out.reshape(B, T, -1)


@functools.partial(jax.jit, static_argnames=("imu_num",))
def lipnet_multi_imu_forward(params, pc_input, imu_input, imu_acc, imu_num=4):
    """Mirrors LIPNet_multiIMU.forward for imu_num in {2, 4, 5}.

    pc_input:  (B, T, 78)
    imu_input: (B, T, 6, 9)   per-sensor 3x3 rotations flattened
    imu_acc:   (B, T, 6, 3)   per-sensor accelerations
    """
    B, T = imu_input.shape[0], imu_input.shape[1]
    imu_p = jnp.transpose(imu_input, (2, 0, 1, 3))  # (6, B, T, 9)
    acc_p = jnp.transpose(imu_acc, (2, 0, 1, 3))    # (6, B, T, 3)
    (leftForeArm_imu, rightForeArm_imu, leftLeg_imu,
     rightLeg_imu, _, root_imu) = [imu_p[i] for i in range(6)]
    (leftForeArm_acc, rightForeArm_acc, leftLeg_acc,
     rightLeg_acc, _, root_acc) = [acc_p[i] for i in range(6)]

    if imu_num == 2:
        imu_input_cat = jnp.concatenate(
            [rightLeg_imu.reshape(B, T, 9), leftForeArm_imu.reshape(B, T, 9),
             rightLeg_acc.reshape(B, T, 3), leftForeArm_acc.reshape(B, T, 3)],
            axis=2)
    elif imu_num == 4:
        imu_input_cat = jnp.concatenate(
            [leftLeg_imu.reshape(B, T, 9), rightLeg_imu.reshape(B, T, 9),
             leftForeArm_imu.reshape(B, T, 9), rightForeArm_imu.reshape(B, T, 9),
             leftLeg_acc.reshape(B, T, 3), rightLeg_acc.reshape(B, T, 3),
             leftForeArm_acc.reshape(B, T, 3), rightForeArm_acc.reshape(B, T, 3)],
            axis=2)
    elif imu_num == 5:
        imu_input_cat = jnp.concatenate(
            [leftLeg_imu.reshape(B, T, 9), rightLeg_imu.reshape(B, T, 9),
             leftForeArm_imu.reshape(B, T, 9), rightForeArm_imu.reshape(B, T, 9),
             root_imu.reshape(B, T, 9),
             leftLeg_acc.reshape(B, T, 3), rightLeg_acc.reshape(B, T, 3),
             leftForeArm_acc.reshape(B, T, 3), rightForeArm_acc.reshape(B, T, 3),
             root_acc.reshape(B, T, 3)],
            axis=2)
    else:
        raise ValueError("unsupported imu_num in this synthetic setup")

    jointTracker_input = jnp.concatenate([pc_input, imu_input_cat], axis=2)
    joint_position = tracker_forward(params["joint_tracker"], jointTracker_input)
    hybriIK_input = jnp.concatenate([jointTracker_input, joint_position], axis=2)
    body_pose = tracker_forward(params["hybrik"], hybriIK_input)
    return {"joint_position": joint_position, "body_pose": body_pose}


# ----------------------------------------------------------------------------
# Main
# ----------------------------------------------------------------------------
if __name__ == "__main__":
    key = jax.random.PRNGKey(0)
    k_params, k_pc, k_imu, k_acc = jax.random.split(key, 4)

    IMU = 4          # imu_num = 4 path
    HIDDEN = 32      # small hidden size for the synthetic run
    B, T = 2, 8

    params = init_lipnet(k_params, imu=IMU, hidden_size=HIDDEN)

    pc_input = jax.random.normal(k_pc, (B, T, 78), jnp.float32)
    imu_input = jax.random.normal(k_imu, (B, T, 6, 9), jnp.float32)
    imu_acc = jax.random.normal(k_acc, (B, T, 6, 3), jnp.float32)

    out = lipnet_multi_imu_forward(params, pc_input, imu_input, imu_acc, imu_num=4)
    out = jax.block_until_ready(out)

    assert out["joint_position"].shape == (B, T, 72)
    assert out["body_pose"].shape == (B, T, 24 * 6)
    assert jnp.all(jnp.isfinite(out["joint_position"]))
    assert jnp.all(jnp.isfinite(out["body_pose"]))
    print("KERNEL_OK")
</pallas_src>

<mosaic_0001>
module attributes {stable_mosaic.version = 11 : i64} {
  func.func @_linear_kernel(%arg0: i32, %arg1: memref<16x32xf32, #tpu.memory_space<vmem>>, %arg2: memref<32x256xbf16, #tpu.memory_space<vmem>>, %arg3: memref<1x256xf32, #tpu.memory_space<vmem>>, %arg4: memref<16x256xf32, #tpu.memory_space<vmem>>) attributes {dimension_semantics = [#tpu.dimension_semantics<parallel>], iteration_bounds = array<i64: 1>, scalar_prefetch = 0 : i64, scratch_operands = 0 : i64, tpu.core_type = #tpu.core_type<tc>, window_params = [{transform_indices = @transform_0, window_bounds = array<i64: 16, 32>}, {pipeline_mode = #tpu.pipeline_mode<synchronous>, transform_indices = @transform_1, window_bounds = array<i64: 32, 256>}, {pipeline_mode = #tpu.pipeline_mode<synchronous>, transform_indices = @transform_2, window_bounds = array<i64: 1, 256>}, {transform_indices = @transform_3, window_bounds = array<i64: 16, 256>}]} {
    %c0 = arith.constant 0 : index
    %c0_0 = arith.constant 0 : index
    %0 = vector.load %arg1[%c0, %c0_0] : memref<16x32xf32, #tpu.memory_space<vmem>>, vector<16x32xf32>
    %1 = arith.truncf %0 : vector<16x32xf32> to vector<16x32xbf16>
    %c0_1 = arith.constant 0 : index
    %c0_2 = arith.constant 0 : index
    %2 = vector.load %arg2[%c0_1, %c0_2] : memref<32x256xbf16, #tpu.memory_space<vmem>>, vector<32x256xbf16>
    %cst = arith.constant dense<0.000000e+00> : vector<16x256xf32>
    %3 = tpu.matmul %1, %2, %cst {dimension_numbers = #tpu.dot_dimension_numbers<[1], [0], [0], [1], [0, 0, 1, 1], [], []>} : vector<16x32xbf16>, vector<32x256xbf16>, vector<16x256xf32> -> vector<16x256xf32>
    %c0_3 = arith.constant 0 : index
    %c0_4 = arith.constant 0 : index
    %4 = vector.load %arg3[%c0_3, %c0_4] : memref<1x256xf32, #tpu.memory_space<vmem>>, vector<1x256xf32>
    %5 = vector.broadcast %4 : vector<1x256xf32> to vector<16x256xf32>
    %6 = arith.addf %3, %5 : vector<16x256xf32>
    %c0_5 = arith.constant 0 : index
    %c0_6 = arith.constant 0 : index
    %7 = vector.load %arg4[%c0_5, %c0_6] : memref<16x256xf32, #tpu.memory_space<vmem>>, vector<16x256xf32>
    tpu.vector_store %arg4[%c0_5, %c0_6], %6 {strides = array<i32>} : memref<16x256xf32, #tpu.memory_space<vmem>>, vector<16x256xf32>,
    return
  }
  func.func @transform_0(%arg0: i32) -> (i32, i32) {
    %c0_i32 = arith.constant 0 : i32
    %c0_i32_0 = arith.constant 0 : i32
    return %arg0, %c0_i32 : i32, i32
  }
  func.func @transform_1(%arg0: i32) -> (i32, i32) {
    %c0_i32 = arith.constant 0 : i32
    %c0_i32_0 = arith.constant 0 : i32
    %c0_i32_1 = arith.constant 0 : i32
    return %c0_i32, %c0_i32_0 : i32, i32
  }
  func.func @transform_2(%arg0: i32) -> (i32, i32) {
    %c0_i32 = arith.constant 0 : i32
    %c0_i32_0 = arith.constant 0 : i32
    %c0_i32_1 = arith.constant 0 : i32
    return %c0_i32, %c0_i32_0 : i32, i32
  }
  func.func @transform_3(%arg0: i32) -> (i32, i32) {
    %c0_i32 = arith.constant 0 : i32
    %c0_i32_0 = arith.constant 0 : i32
    return %arg0, %c0_i32 : i32, i32
  }
}

module attributes {stable_mosaic.version = 11 : i64} {
  func.func @_linear_kernel(%arg0: i32, %arg1: memref<16x126xf32, #tpu.memory_space<vmem>>, %arg2: memref<126x32xbf16, #tpu.memory_space<vmem>>, %arg3: memref<1x32xf32, #tpu.memory_space<vmem>>, %arg4: memref<16x32xf32, #tpu.memory_space<vmem>>) attributes {dimension_semantics = [#tpu.dimension_semantics<parallel>], iteration_bounds = array<i64: 1>, scalar_prefetch = 0 : i64, scratch_operands = 0 : i64, tpu.core_type = #tpu.core_type<tc>, window_params = [{transform_indices = @transform_0, window_bounds = array<i64: 16, 126>}, {pipeline_mode = #tpu.pipeline_mode<synchronous>, transform_indices = @transform_1, window_bounds = array<i64: 126, 32>}, {pipeline_mode = #tpu.pipeline_mode<synchronous>, transform_indices = @transform_2, window_bounds = array<i64: 1, 32>}, {transform_indices = @transform_3, window_bounds = array<i64: 16, 32>}]} {
    %c0 = arith.constant 0 : index
    %c0_0 = arith.constant 0 : index
    %0 = vector.load %arg1[%c0, %c0_0] : memref<16x126xf32, #tpu.memory_space<vmem>>, vector<16x126xf32>
    %1 = arith.truncf %0 : vector<16x126xf32> to vector<16x126xbf16>
    %c0_1 = arith.constant 0 : index
    %c0_2 = arith.constant 0 : index
    %2 = vector.load %arg2[%c0_1, %c0_2] : memref<126x32xbf16, #tpu.memory_space<vmem>>, vector<126x32xbf16>
    %cst = arith.constant dense<0.000000e+00> : vector<16x32xf32>
    %3 = tpu.matmul %1, %2, %cst {dimension_numbers = #tpu.dot_dimension_numbers<[1], [0], [0], [1], [0, 0, 1, 1], [], []>} : vector<16x126xbf16>, vector<126x32xbf16>, vector<16x32xf32> -> vector<16x32xf32>
    %c0_3 = arith.constant 0 : index
    %c0_4 = arith.constant 0 : index
    %4 = vector.load %arg3[%c0_3, %c0_4] : memref<1x32xf32, #tpu.memory_space<vmem>>, vector<1x32xf32>
    %5 = vector.broadcast %4 : vector<1x32xf32> to vector<16x32xf32>
    %6 = arith.addf %3, %5 : vector<16x32xf32>
    %cst_5 = arith.constant 0.000000e+00 : f32
    %7 = vector.broadcast %cst_5 : f32 to vector<16x32xf32>
    %8 = arith.maximumf %6, %7 : vector<16x32xf32>
    %c0_6 = arith.constant 0 : index
    %c0_7 = arith.constant 0 : index
    %9 = vector.load %arg4[%c0_6, %c0_7] : memref<16x32xf32, #tpu.memory_space<vmem>>, vector<16x32xf32>
    tpu.vector_store %arg4[%c0_6, %c0_7], %8 {strides = array<i32>} : memref<16x32xf32, #tpu.memory_space<vmem>>, vector<16x32xf32>,
    return
  }
  func.func @transform_0(%arg0: i32) -> (i32, i32) {
    %c0_i32 = arith.constant 0 : i32
    %c0_i32_0 = arith.constant 0 : i32
    return %arg0, %c0_i32 : i32, i32
  }
  func.func @transform_1(%arg0: i32) -> (i32, i32) {
    %c0_i32 = arith.constant 0 : i32
    %c0_i32_0 = arith.constant 0 : i32
    %c0_i32_1 = arith.constant 0 : i32
    return %c0_i32, %c0_i32_0 : i32, i32
  }
  func.func @transform_2(%arg0: i32) -> (i32, i32) {
    %c0_i32 = arith.constant 0 : i32
    %c0_i32_0 = arith.constant 0 : i32
    %c0_i32_1 = arith.constant 0 : i32
    return %c0_i32, %c0_i32_0 : i32, i32
  }
  func.func @transform_3(%arg0: i32) -> (i32, i32) {
    %c0_i32 = arith.constant 0 : i32
    %c0_i32_0 = arith.constant 0 : i32
    return %arg0, %c0_i32 : i32, i32
  }
}

module attributes {stable_mosaic.version = 11 : i64} {
  func.func @_linear_kernel(%arg0: i32, %arg1: memref<16x64xf32, #tpu.memory_space<vmem>>, %arg2: memref<64x256xbf16, #tpu.memory_space<vmem>>, %arg3: memref<1x256xf32, #tpu.memory_space<vmem>>, %arg4: memref<16x256xf32, #tpu.memory_space<vmem>>) attributes {dimension_semantics = [#tpu.dimension_semantics<parallel>], iteration_bounds = array<i64: 1>, scalar_prefetch = 0 : i64, scratch_operands = 0 : i64, tpu.core_type = #tpu.core_type<tc>, window_params = [{transform_indices = @transform_0, window_bounds = array<i64: 16, 64>}, {pipeline_mode = #tpu.pipeline_mode<synchronous>, transform_indices = @transform_1, window_bounds = array<i64: 64, 256>}, {pipeline_mode = #tpu.pipeline_mode<synchronous>, transform_indices = @transform_2, window_bounds = array<i64: 1, 256>}, {transform_indices = @transform_3, window_bounds = array<i64: 16, 256>}]} {
    %c0 = arith.constant 0 : index
    %c0_0 = arith.constant 0 : index
    %0 = vector.load %arg1[%c0, %c0_0] : memref<16x64xf32, #tpu.memory_space<vmem>>, vector<16x64xf32>
    %1 = arith.truncf %0 : vector<16x64xf32> to vector<16x64xbf16>
    %c0_1 = arith.constant 0 : index
    %c0_2 = arith.constant 0 : index
    %2 = vector.load %arg2[%c0_1, %c0_2] : memref<64x256xbf16, #tpu.memory_space<vmem>>, vector<64x256xbf16>
    %cst = arith.constant dense<0.000000e+00> : vector<16x256xf32>
    %3 = tpu.matmul %1, %2, %cst {dimension_numbers = #tpu.dot_dimension_numbers<[1], [0], [0], [1], [0, 0, 1, 1], [], []>} : vector<16x64xbf16>, vector<64x256xbf16>, vector<16x256xf32> -> vector<16x256xf32>
    %c0_3 = arith.constant 0 : index
    %c0_4 = arith.constant 0 : index
    %4 = vector.load %arg3[%c0_3, %c0_4] : memref<1x256xf32, #tpu.memory_space<vmem>>, vector<1x256xf32>
    %5 = vector.broadcast %4 : vector<1x256xf32> to vector<16x256xf32>
    %6 = arith.addf %3, %5 : vector<16x256xf32>
    %c0_5 = arith.constant 0 : index
    %c0_6 = arith.constant 0 : index
    %7 = vector.load %arg4[%c0_5, %c0_6] : memref<16x256xf32, #tpu.memory_space<vmem>>, vector<16x256xf32>
    tpu.vector_store %arg4[%c0_5, %c0_6], %6 {strides = array<i32>} : memref<16x256xf32, #tpu.memory_space<vmem>>, vector<16x256xf32>,
    return
  }
  func.func @transform_0(%arg0: i32) -> (i32, i32) {
    %c0_i32 = arith.constant 0 : i32
    %c0_i32_0 = arith.constant 0 : i32
    return %arg0, %c0_i32 : i32, i32
  }
  func.func @transform_1(%arg0: i32) -> (i32, i32) {
    %c0_i32 = arith.constant 0 : i32
    %c0_i32_0 = arith.constant 0 : i32
    %c0_i32_1 = arith.constant 0 : i32
    return %c0_i32, %c0_i32_0 : i32, i32
  }
  func.func @transform_2(%arg0: i32) -> (i32, i32) {
    %c0_i32 = arith.constant 0 : i32
    %c0_i32_0 = arith.constant 0 : i32
    %c0_i32_1 = arith.constant 0 : i32
    return %c0_i32, %c0_i32_0 : i32, i32
  }
  func.func @transform_3(%arg0: i32) -> (i32, i32) {
    %c0_i32 = arith.constant 0 : i32
    %c0_i32_0 = arith.constant 0 : i32
    return %arg0, %c0_i32 : i32, i32
  }
}

module attributes {stable_mosaic.version = 11 : i64} {
  func.func @_bilstm_rec_kernel(%arg0: memref<8x8x256xf32, #tpu.memory_space<vmem>>, %arg1: memref<32x128xbf16, #tpu.memory_space<vmem>>, %arg2: memref<32x128xbf16, #tpu.memory_space<vmem>>, %arg3: memref<8x8x64xf32, #tpu.memory_space<vmem>>, %arg4: memref<8x32xf32, #tpu.memory_space<vmem>>, %arg5: memref<8x32xf32, #tpu.memory_space<vmem>>, %arg6: memref<8x32xf32, #tpu.memory_space<vmem>>, %arg7: memref<8x32xf32, #tpu.memory_space<vmem>>) attributes {dimension_semantics = [], scalar_prefetch = 0 : i64, scratch_operands = 4 : i64, tpu.core_type = #tpu.core_type<tc>} {
    %cst = arith.constant 0.000000e+00 : f32
    %0 = vector.broadcast %cst : f32 to vector<8x32xf32>
    %c0 = arith.constant 0 : index
    %c0_0 = arith.constant 0 : index
    %1 = vector.load %arg4[%c0, %c0_0] : memref<8x32xf32, #tpu.memory_space<vmem>>, vector<8x32xf32>
    tpu.vector_store %arg4[%c0, %c0_0], %0 {strides = array<i32>} : memref<8x32xf32, #tpu.memory_space<vmem>>, vector<8x32xf32>,
    %cst_1 = arith.constant 0.000000e+00 : f32
    %2 = vector.broadcast %cst_1 : f32 to vector<8x32xf32>
    %c0_2 = arith.constant 0 : index
    %c0_3 = arith.constant 0 : index
    %3 = vector.load %arg5[%c0_2, %c0_3] : memref<8x32xf32, #tpu.memory_space<vmem>>, vector<8x32xf32>
    tpu.vector_store %arg5[%c0_2, %c0_3], %2 {strides = array<i32>} : memref<8x32xf32, #tpu.memory_space<vmem>>, vector<8x32xf32>,
    %cst_4 = arith.constant 0.000000e+00 : f32
    %4 = vector.broadcast %cst_4 : f32 to vector<8x32xf32>
    %c0_5 = arith.constant 0 : index
    %c0_6 = arith.constant 0 : index
    %5 = vector.load %arg6[%c0_5, %c0_6] : memref<8x32xf32, #tpu.memory_space<vmem>>, vector<8x32xf32>
    tpu.vector_store %arg6[%c0_5, %c0_6], %4 {strides = array<i32>} : memref<8x32xf32, #tpu.memory_space<vmem>>, vector<8x32xf32>,
    %cst_7 = arith.constant 0.000000e+00 : f32
    %6 = vector.broadcast %cst_7 : f32 to vector<8x32xf32>
    %c0_8 = arith.constant 0 : index
    %c0_9 = arith.constant 0 : index
    %7 = vector.load %arg7[%c0_8, %c0_9] : memref<8x32xf32, #tpu.memory_space<vmem>>, vector<8x32xf32>
    tpu.vector_store %arg7[%c0_8, %c0_9], %6 {strides = array<i32>} : memref<8x32xf32, #tpu.memory_space<vmem>>, vector<8x32xf32>,
    %c0_i32 = arith.constant 0 : i32
    %c7_i32 = arith.constant 7 : i32
    %8 = arith.subi %c7_i32, %c0_i32 : i32
    %9 = arith.index_cast %c0_i32 : i32 to index
    %c0_10 = arith.constant 0 : index
    %c0_11 = arith.constant 0 : index
    %10 = vector.load %arg0[%9, %c0_10, %c0_11] : memref<8x8x256xf32, #tpu.memory_space<vmem>>, vector<1x8x256xf32>
    %11 = vector.shape_cast %10 : vector<1x8x256xf32> to vector<8x256xf32>
    %12 = arith.index_cast %8 : i32 to index
    %c0_12 = arith.constant 0 : index
    %c0_13 = arith.constant 0 : index
    %13 = vector.load %arg0[%12, %c0_12, %c0_13] : memref<8x8x256xf32, #tpu.memory_space<vmem>>, vector<1x8x256xf32>
    %14 = vector.shape_cast %13 : vector<1x8x256xf32> to vector<8x256xf32>
    %15 = vector.extract_strided_slice %11 {offsets = [0, 0], sizes = [8, 128], strides = [1, 1]} : vector<8x256xf32> to vector<8x128xf32>
    %c0_14 = arith.constant 0 : index
    %c0_15 = arith.constant 0 : index
    %16 = vector.load %arg4[%c0_14, %c0_15] : memref<8x32xf32, #tpu.memory_space<vmem>>, vector<8x32xf32>
    %17 = arith.truncf %16 : vector<8x32xf32> to vector<8x32xbf16>
    %c0_16 = arith.constant 0 : index
    %c0_17 = arith.constant 0 : index
    %18 = vector.load %arg1[%c0_16, %c0_17] : memref<32x128xbf16, #tpu.memory_space<vmem>>, vector<32x128xbf16>
    %cst_18 = arith.constant dense<0.000000e+00> : vector<8x128xf32>
    %19 = tpu.matmul %17, %18, %cst_18 {dimension_numbers = #tpu.dot_dimension_numbers<[1], [0], [0], [1], [0, 0, 1, 1], [], []>} : vector<8x32xbf16>, vector<32x128xbf16>, vector<8x128xf32> -> vector<8x128xf32>
    %20 = arith.addf %15, %19 : vector<8x128xf32>
    %21 = vector.extract_strided_slice %14 {offsets = [0, 128], sizes = [8, 128], strides = [1, 1]} : vector<8x256xf32> to vector<8x128xf32>
    %c0_19 = arith.constant 0 : index
    %c0_20 = arith.constant 0 : index
    %22 = vector.load %arg6[%c0_19, %c0_20] : memref<8x32xf32, #tpu.memory_space<vmem>>, vector<8x32xf32>
    %23 = arith.truncf %22 : vector<8x32xf32> to vector<8x32xbf16>
    %c0_21 = arith.constant 0 : index
    %c0_22 = arith.constant 0 : index
    %24 = vector.load %arg2[%c0_21, %c0_22] : memref<32x128xbf16, #tpu.memory_space<vmem>>, vector<32x128xbf16>
    %cst_23 = arith.constant dense<0.000000e+00> : vector<8x128xf32>
    %25 = tpu.matmul %23, %24, %cst_23 {dimension_numbers = #tpu.dot_dimension_numbers<[1], [0], [0], [1], [0, 0, 1, 1], [], []>} : vector<8x32xbf16>, vector<32x128xbf16>, vector<8x128xf32> -> vector<8x128xf32>
    %26 = arith.addf %21, %25 : vector<8x128xf32>
    %c0_24 = arith.constant 0 : index
    %c0_25 = arith.constant 0 : index
    %27 = vector.load %arg5[%c0_24, %c0_25] : memref<8x32xf32, #tpu.memory_space<vmem>>, vector<8x32xf32>
    %28 = vector.extract_strided_slice %20 {offsets = [0, 0], sizes = [8, 32], strides = [1, 1]} : vector<8x128xf32> to vector<8x32xf32>
    %29 = arith.negf %28 : vector<8x32xf32>
    %30 = math.exp %29 : vector<8x32xf32>
    %cst_26 = arith.constant 1.000000e+00 : f32
    %31 = vector.broadcast %cst_26 : f32 to vector<8x32xf32>
    %32 = arith.addf %31, %30 : vector<8x32xf32>
    %33 = arith.divf %31, %32 : vector<8x32xf32>
    %34 = vector.extract_strided_slice %20 {offsets = [0, 32], sizes = [8, 32], strides = [1, 1]} : vector<8x128xf32> to vector<8x32xf32>
    %35 = arith.negf %34 : vector<8x32xf32>
    %36 = math.exp %35 : vector<8x32xf32>
    %cst_27 = arith.constant 1.000000e+00 : f32
    %37 = vector.broadcast %cst_27 : f32 to vector<8x32xf32>
    %38 = arith.addf %37, %36 : vector<8x32xf32>
    %39 = arith.divf %37, %38 : vector<8x32xf32>
    %40 = vector.extract_strided_slice %20 {offsets = [0, 64], sizes = [8, 32], strides = [1, 1]} : vector<8x128xf32> to vector<8x32xf32>
    %41 = math.tanh %40 : vector<8x32xf32>
    %42 = vector.extract_strided_slice %20 {offsets = [0, 96], sizes = [8, 32], strides = [1, 1]} : vector<8x128xf32> to vector<8x32xf32>
    %43 = arith.negf %42 : vector<8x32xf32>
    %44 = math.exp %43 : vector<8x32xf32>
    %cst_28 = arith.constant 1.000000e+00 : f32
    %45 = vector.broadcast %cst_28 : f32 to vector<8x32xf32>
    %46 = arith.addf %45, %44 : vector<8x32xf32>
    %47 = arith.divf %45, %46 : vector<8x32xf32>
    %48 = arith.mulf %39, %27 : vector<8x32xf32>
    %49 = arith.mulf %33, %41 : vector<8x32xf32>
    %50 = arith.addf %48, %49 : vector<8x32xf32>
    %51 = math.tanh %50 : vector<8x32xf32>
    %52 = arith.mulf %47, %51 : vector<8x32xf32>
    %c0_29 = arith.constant 0 : index
    %c0_30 = arith.constant 0 : index
    %53 = vector.load %arg7[%c0_29, %c0_30] : memref<8x32xf32, #tpu.memory_space<vmem>>, vector<8x32xf32>
    %54 = vector.extract_strided_slice %26 {offsets = [0, 0], sizes = [8, 32], strides = [1, 1]} : vector<8x128xf32> to vector<8x32xf32>
    %55 = arith.negf %54 : vector<8x32xf32>
    %56 = math.exp %55 : vector<8x32xf32>
    %cst_31 = arith.constant 1.000000e+00 : f32
    %57 = vector.broadcast %cst_31 : f32 to vector<8x32xf32>
    %58 = arith.addf %57, %56 : vector<8x32xf32>
    %59 = arith.divf %57, %58 : vector<8x32xf32>
    %60 = vector.extract_strided_slice %26 {offsets = [0, 32], sizes = [8, 32], strides = [1, 1]} : vector<8x128xf32> to vector<8x32xf32>
    %61 = arith.negf %60 : vector<8x32xf32>
    %62 = math.exp %61 : vector<8x32xf32>
    %cst_32 = arith.constant 1.000000e+00 : f32
    %63 = vector.broadcast %cst_32 : f32 to vector<8x32xf32>
    %64 = arith.addf %63, %62 : vector<8x32xf32>
    %65 = arith.divf %63, %64 : vector<8x32xf32>
    %66 = vector.extract_strided_slice %26 {offsets = [0, 64], sizes = [8, 32], strides = [1, 1]} : vector<8x128xf32> to vector<8x32xf32>
    %67 = math.tanh %66 : vector<8x32xf32>
    %68 = vector.extract_strided_slice %26 {offsets = [0, 96], sizes = [8, 32], strides = [1, 1]} : vector<8x128xf32> to vector<8x32xf32>
    %69 = arith.negf %68 : vector<8x32xf32>
    %70 = math.exp %69 : vector<8x32xf32>
    %cst_33 = arith.constant 1.000000e+00 : f32
    %71 = vector.broadcast %cst_33 : f32 to vector<8x32xf32>
    %72 = arith.addf %71, %70 : vector<8x32xf32>
    %73 = arith.divf %71, %72 : vector<8x32xf32>
    %74 = arith.mulf %65, %53 : vector<8x32xf32>
    %75 = arith.mulf %59, %67 : vector<8x32xf32>
    %76 = arith.addf %74, %75 : vector<8x32xf32>
    %77 = math.tanh %76 : vector<8x32xf32>
    %78 = arith.mulf %73, %77 : vector<8x32xf32>
    %c0_34 = arith.constant 0 : index
    %c0_35 = arith.constant 0 : index
    %79 = vector.load %arg4[%c0_34, %c0_35] : memref<8x32xf32, #tpu.memory_space<vmem>>, vector<8x32xf32>
    tpu.vector_store %arg4[%c0_34, %c0_35], %52 {strides = array<i32>} : memref<8x32xf32, #tpu.memory_space<vmem>>, vector<8x32xf32>,
    %c0_36 = arith.constant 0 : index
    %c0_37 = arith.constant 0 : index
    %80 = vector.load %arg5[%c0_36, %c0_37] : memref<8x32xf32, #tpu.memory_space<vmem>>, vector<8x32xf32>
    tpu.vector_store %arg5[%c0_36, %c0_37], %50 {strides = array<i32>} : memref<8x32xf32, #tpu.memory_space<vmem>>, vector<8x32xf32>,
    %c0_38 = arith.constant 0 : index
    %c0_39 = arith.constant 0 : index
    %81 = vector.load %arg6[%c0_38, %c0_39] : memref<8x32xf32, #tpu.memory_space<vmem>>, vector<8x32xf32>
    tpu.vector_store %arg6[%c0_38, %c0_39], %78 {strides = array<i32>} : memref<8x32xf32, #tpu.memory_space<vmem>>, vector<8x32xf32>,
    %c0_40 = arith.constant 0 : index
    %c0_41 = arith.constant 0 : index
    %82 = vector.load %arg7[%c0_40, %c0_41] : memref<8x32xf32, #tpu.memory_space<vmem>>, vector<8x32xf32>
    tpu.vector_store %arg7[%c0_40, %c0_41], %76 {strides = array<i32>} : memref<8x32xf32, #tpu.memory_space<vmem>>, vector<8x32xf32>,
    %83 = arith.index_cast %c0_i32 : i32 to index
    %c0_42 = arith.constant 0 : index
    %c0_43 = arith.constant 0 : index
    %84 = vector.load %arg3[%83, %c0_42, %c0_43] : memref<8x8x64xf32, #tpu.memory_space<vmem>>, vector<1x8x32xf32>
    %85 = vector.shape_cast %84 : vector<1x8x32xf32> to vector<8x32xf32>
    %86 = vector.shape_cast %52 : vector<8x32xf32> to vector<1x8x32xf32>
    tpu.vector_store %arg3[%83, %c0_42, %c0_43], %86 {strides = array<i32>} : memref<8x8x64xf32, #tpu.memory_space<vmem>>, vector<1x8x32xf32>,
    %87 = arith.index_cast %8 : i32 to index
    %c0_44 = arith.constant 0 : index
    %c32 = arith.constant 32 : index
    %88 = vector.load %arg3[%87, %c0_44, %c32] : memref<8x8x64xf32, #tpu.memory_space<vmem>>, vector<1x8x32xf32>
    %89 = vector.shape_cast %88 : vector<1x8x32xf32> to vector<8x32xf32>
    %90 = vector.shape_cast %78 : vector<8x32xf32> to vector<1x8x32xf32>
    tpu.vector_store %arg3[%87, %c0_44, %c32], %90 {strides = array<i32>} : memref<8x8x64xf32, #tpu.memory_space<vmem>>, vector<1x8x32xf32>,
    %c1_i32 = arith.constant 1 : i32
    %c7_i32_45 = arith.constant 7 : i32
    %91 = arith.subi %c7_i32_45, %c1_i32 : i32
    %92 = arith.index_cast %c1_i32 : i32 to index
    %c0_46 = arith.constant 0 : index
    %c0_47 = arith.constant 0 : index
    %93 = vector.load %arg0[%92, %c0_46, %c0_47] : memref<8x8x256xf32, #tpu.memory_space<vmem>>, vector<1x8x256xf32>
    %94 = vector.shape_cast %93 : vector<1x8x256xf32> to vector<8x256xf32>
    %95 = arith.index_cast %91 : i32 to index
    %c0_48 = arith.constant 0 : index
    %c0_49 = arith.constant 0 : index
    %96 = vector.load %arg0[%95, %c0_48, %c0_49] : memref<8x8x256xf32, #tpu.memory_space<vmem>>, vector<1x8x256xf32>
    %97 = vector.shape_cast %96 : vector<1x8x256xf32> to vector<8x256xf32>
    %98 = vector.extract_strided_slice %94 {offsets = [0, 0], sizes = [8, 128], strides = [1, 1]} : vector<8x256xf32> to vector<8x128xf32>
    %c0_50 = arith.constant 0 : index
    %c0_51 = arith.constant 0 : index
    %99 = vector.load %arg4[%c0_50, %c0_51] : memref<8x32xf32, #tpu.memory_space<vmem>>, vector<8x32xf32>
    %100 = arith.truncf %99 : vector<8x32xf32> to vector<8x32xbf16>
    %c0_52 = arith.constant 0 : index
    %c0_53 = arith.constant 0 : index
    %101 = vector.load %arg1[%c0_52, %c0_53] : memref<32x128xbf16, #tpu.memory_space<vmem>>, vector<32x128xbf16>
    %cst_54 = arith.constant dense<0.000000e+00> : vector<8x128xf32>
    %102 = tpu.matmul %100, %101, %cst_54 {dimension_numbers = #tpu.dot_dimension_numbers<[1], [0], [0], [1], [0, 0, 1, 1], [], []>} : vector<8x32xbf16>, vector<32x128xbf16>, vector<8x128xf32> -> vector<8x128xf32>
    %103 = arith.addf %98, %102 : vector<8x128xf32>
    %104 = vector.extract_strided_slice %97 {offsets = [0, 128], sizes = [8, 128], strides = [1, 1]} : vector<8x256xf32> to vector<8x128xf32>
    %c0_55 = arith.constant 0 : index
    %c0_56 = arith.constant 0 : index
    %105 = vector.load %arg6[%c0_55, %c0_56] : memref<8x32xf32, #tpu.memory_space<vmem>>, vector<8x32xf32>
    %106 = arith.truncf %105 : vector<8x32xf32> to vector<8x32xbf16>
    %c0_57 = arith.constant 0 : index
    %c0_58 = arith.constant 0 : index
    %107 = vector.load %arg2[%c0_57, %c0_58] : memref<32x128xbf16, #tpu.memory_space<vmem>>, vector<32x128xbf16>
    %cst_59 = arith.constant dense<0.000000e+00> : vector<8x128xf32>
    %108 = tpu.matmul %106, %107, %cst_59 {dimension_numbers = #tpu.dot_dimension_numbers<[1], [0], [0], [1], [0, 0, 1, 1], [], []>} : vector<8x32xbf16>, vector<32x128xbf16>, vector<8x128xf32> -> vector<8x128xf32>
    %109 = arith.addf %104, %108 : vector<8x128xf32>
    %c0_60 = arith.constant 0 : index
    %c0_61 = arith.constant 0 : index
    %110 = vector.load %arg5[%c0_60, %c0_61] : memref<8x32xf32, #tpu.memory_space<vmem>>, vector<8x32xf32>
    %111 = vector.extract_strided_slice %103 {offsets = [0, 0], sizes = [8, 32], strides = [1, 1]} : vector<8x128xf32> to vector<8x32xf32>
    %112 = arith.negf %111 : vector<8x32xf32>
    %113 = math.exp %112 : vector<8x32xf32>
    %cst_62 = arith.constant 1.000000e+00 : f32
    %114 = vector.broadcast %cst_62 : f32 to vector<8x32xf32>
    %115 = arith.addf %114, %113 : vector<8x32xf32>
    %116 = arith.divf %114, %115 : vector<8x32xf32>
    %117 = vector.extract_strided_slice %103 {offsets = [0, 32], sizes = [8, 32], strides = [1, 1]} : vector<8x128xf32> to vector<8x32xf32>
    %118 = arith.negf %117 : vector<8x32xf32>
    %119 = math.exp %118 : vector<8x32xf32>
    %cst_63 = arith.constant 1.000000e+00 : f32
    %120 = vector.broadcast %cst_63 : f32 to vector<8x32xf32>
    %121 = arith.addf %120, %119 : vector<8x32xf32>
    %122 = arith.divf %120, %121 : vector<8x32xf32>
    %123 = vector.extract_strided_slice %103 {offsets = [0, 64], sizes = [8, 32], strides = [1, 1]} : vector<8x128xf32> to vector<8x32xf32>
    %124 = math.tanh %123 : vector<8x32xf32>
    %125 = vector.extract_strided_slice %103 {offsets = [0, 96], sizes = [8, 32], strides = [1, 1]} : vector<8x128xf32> to vector<8x32xf32>
    %126 = arith.negf %125 : vector<8x32xf32>
    %127 = math.exp %126 : vector<8x32xf32>
    %cst_64 = arith.constant 1.000000e+00 : f32
    %128 = vector.broadcast %cst_64 : f32 to vector<8x32xf32>
    %129 = arith.addf %128, %127 : vector<8x32xf32>
    %130 = arith.divf %128, %129 : vector<8x32xf32>
    %131 = arith.mulf %122, %110 : vector<8x32xf32>
    %132 = arith.mulf %116, %124 : vector<8x32xf32>
    %133 = arith.addf %131, %132 : vector<8x32xf32>
    %134 = math.tanh %133 : vector<8x32xf32>
    %135 = arith.mulf %130, %134 : vector<8x32xf32>
    %c0_65 = arith.constant 0 : index
    %c0_66 = arith.constant 0 : index
    %136 = vector.load %arg7[%c0_65, %c0_66] : memref<8x32xf32, #tpu.memory_space<vmem>>, vector<8x32xf32>
    %137 = vector.extract_strided_slice %109 {offsets = [0, 0], sizes = [8, 32], strides = [1, 1]} : vector<8x128xf32> to vector<8x32xf32>
    %138 = arith.negf %137 : vector<8x32xf32>
    %139 = math.exp %138 : vector<8x32xf32>
    %cst_67 = arith.constant 1.000000e+00 : f32
    %140 = vector.broadcast %cst_67 : f32 to vector<8x32xf32>
    %141 = arith.addf %140, %139 : vector<8x32xf32>
    %142 = arith.divf %140, %141 : vector<8x32xf32>
    %143 = vector.extract_strided_slice %109 {offsets = [0, 32], sizes = [8, 32], strides = [1, 1]} : vector<8x128xf32> to vector<8x32xf32>
    %144 = arith.negf %143 : vector<8x32xf32>
    %145 = math.exp %144 : vector<8x32xf32>
    %cst_68 = arith.constant 1.000000e+00 : f32
    %146 = vector.broadcast %cst_68 : f32 to vector<8x32xf32>
    %147 = arith.addf %146, %145 : vector<8x32xf32>
    %148 = arith.divf %146, %147 : vector<8x32xf32>
    %149 = vector.extract_strided_slice %109 {offsets = [0, 64], sizes = [8, 32], strides = [1, 1]} : vector<8x128xf32> to vector<8x32xf32>
    %150 = math.tanh %149 : vector<8x32xf32>
    %151 = vector.extract_strided_slice %109 {offsets = [0, 96], sizes = [8, 32], strides = [1, 1]} : vector<8x128xf32> to vector<8x32xf32>
    %152 = arith.negf %151 : vector<8x32xf32>
    %153 = math.exp %152 : vector<8x32xf32>
    %cst_69 = arith.constant 1.000000e+00 : f32
    %154 = vector.broadcast %cst_69 : f32 to vector<8x32xf32>
    %155 = arith.addf %154, %153 : vector<8x32xf32>
    %156 = arith.divf %154, %155 : vector<8x32xf32>
    %157 = arith.mulf %148, %136 : vector<8x32xf32>
    %158 = arith.mulf %142, %150 : vector<8x32xf32>
    %159 = arith.addf %157, %158 : vector<8x32xf32>
    %160 = math.tanh %159 : vector<8x32xf32>
    %161 = arith.mulf %156, %160 : vector<8x32xf32>
    %c0_70 = arith.constant 0 : index
    %c0_71 = arith.constant 0 : index
    %162 = vector.load %arg4[%c0_70, %c0_71] : memref<8x32xf32, #tpu.memory_space<vmem>>, vector<8x32xf32>
    tpu.vector_store %arg4[%c0_70, %c0_71], %135 {strides = array<i32>} : memref<8x32xf32, #tpu.memory_space<vmem>>, vector<8x32xf32>,
    %c0_72 = arith.constant 0 : index
    %c0_73 = arith.constant 0 : index
    %163 = vector.load %arg5[%c0_72, %c0_73] : memref<8x32xf32, #tpu.memory_space<vmem>>, vector<8x32xf32>
    tpu.vector_store %arg5[%c0_72, %c0_73], %133 {strides = array<i32>} : memref<8x32xf32, #tpu.memory_space<vmem>>, vector<8x32xf32>,
    %c0_74 = arith.constant 0 : index
    %c0_75 = arith.constant 0 : index
    %164 = vector.load %arg6[%c0_74, %c0_75] : memref<8x32xf32, #tpu.memory_space<vmem>>, vector<8x32xf32>
    tpu.vector_store %arg6[%c0_74, %c0_75], %161 {strides = array<i32>} : memref<8x32xf32, #tpu.memory_space<vmem>>, vector<8x32xf32>,
    %c0_76 = arith.constant 0 : index
    %c0_77 = arith.constant 0 : index
    %165 = vector.load %arg7[%c0_76, %c0_77] : memref<8x32xf32, #tpu.memory_space<vmem>>, vector<8x32xf32>
    tpu.vector_store %arg7[%c0_76, %c0_77], %159 {strides = array<i32>} : memref<8x32xf32, #tpu.memory_space<vmem>>, vector<8x32xf32>,
    %166 = arith.index_cast %c1_i32 : i32 to index
    %c0_78 = arith.constant 0 : index
    %c0_79 = arith.constant 0 : index
    %167 = vector.load %arg3[%166, %c0_78, %c0_79] : memref<8x8x64xf32, #tpu.memory_space<vmem>>, vector<1x8x32xf32>
    %168 = vector.shape_cast %167 : vector<1x8x32xf32> to vector<8x32xf32>
    %169 = vector.shape_cast %135 : vector<8x32xf32> to vector<1x8x32xf32>
    tpu.vector_store %arg3[%166, %c0_78, %c0_79], %169 {strides = array<i32>} : memref<8x8x64xf32, #tpu.memory_space<vmem>>, vector<1x8x32xf32>,
    %170 = arith.index_cast %91 : i32 to index
    %c0_80 = arith.constant 0 : index
    %c32_81 = arith.constant 32 : index
    %171 = vector.load %arg3[%170, %c0_80, %c32_81] : memref<8x8x64xf32, #tpu.memory_space<vmem>>, vector<1x8x32xf32>
    %172 = vector.shape_cast %171 : vector<1x8x32xf32> to vector<8x32xf32>
    %173 = vector.shape_cast %161 : vector<8x32xf32> to vector<1x8x32xf32>
    tpu.vector_store %arg3[%170, %c0_80, %c32_81], %173 {strides = array<i32>} : memref<8x8x64xf32, #tpu.memory_space<vmem>>, vector<1x8x32xf32>,
    %c2_i32 = arith.constant 2 : i32
    %c7_i32_82 = arith.constant 7 : i32
    %174 = arith.subi %c7_i32_82, %c2_i32 : i32
    %175 = arith.index_cast %c2_i32 : i32 to index
    %c0_83 = arith.constant 0 : index
    %c0_84 = arith.constant 0 : index
    %176 = vector.load %arg0[%175, %c0_83, %c0_84] : memref<8x8x256xf32, #tpu.memory_space<vmem>>, vector<1x8x256xf32>
    %177 = vector.shape_cast %176 : vector<1x8x256xf32> to vector<8x256xf32>
    %178 = arith.index_cast %174 : i32 to index
    %c0_85 = arith.constant 0 : index
    %c0_86 = arith.constant 0 : index
    %179 = vector.load %arg0[%178, %c0_85, %c0_86] : memref<8x8x256xf32, #tpu.memory_space<vmem>>, vector<1x8x256xf32>
    %180 = vector.shape_cast %179 : vector<1x8x256xf32> to vector<8x256xf32>
    %181 = vector.extract_strided_slice %177 {offsets = [0, 0], sizes = [8, 128], strides = [1, 1]} : vector<8x256xf32> to vector<8x128xf32>
    %c0_87 = arith.constant 0 : index
    %c0_88 = arith.constant 0 : index
    %182 = vector.load %arg4[%c0_87, %c0_88] : memref<8x32xf32, #tpu.memory_space<vmem>>, vector<8x32xf32>
    %183 = arith.truncf %182 : vector<8x32xf32> to vector<8x32xbf16>
    %c0_89 = arith.constant 0 : index
    %c0_90 = arith.constant 0 : index
    %184 = vector.load %arg1[%c0_89, %c0_90] : memref<32x128xbf16, #tpu.memory_space<vmem>>, vector<32x128xbf16>
    %cst_91 = arith.constant dense<0.000000e+00> : vector<8x128xf32>
    %185 = tpu.matmul %183, %184, %cst_91 {dimension_numbers = #tpu.dot_dimension_numbers<[1], [0], [0], [1], [0, 0, 1, 1], [], []>} : vector<8x32xbf16>, vector<32x128xbf16>, vector<8x128xf32> -> vector<8x128xf32>
    %186 = arith.addf %181, %185 : vector<8x128xf32>
    %187 = vector.extract_strided_slice %180 {offsets = [0, 128], sizes = [8, 128], strides = [1, 1]} : vector<8x256xf32> to vector<8x128xf32>
    %c0_92 = arith.constant 0 : index
    %c0_93 = arith.constant 0 : index
    %188 = vector.load %arg6[%c0_92, %c0_93] : memref<8x32xf32, #tpu.memory_space<vmem>>, vector<8x32xf32>
    %189 = arith.truncf %188 : vector<8x32xf32> to vector<8x32xbf16>
    %c0_94 = arith.constant 0 : index
    %c0_95 = arith.constant 0 : index
    %190 = vector.load %arg2[%c0_94, %c0_95] : memref<32x128xbf16, #tpu.memory_space<vmem>>, vector<32x128xbf16>
    %cst_96 = arith.constant dense<0.000000e+00> : vector<8x128xf32>
    %191 = tpu.matmul %189, %190, %cst_96 {dimension_numbers = #tpu.dot_dimension_numbers<[1], [0], [0], [1], [0, 0, 1, 1], [], []>} : vector<8x32xbf16>, vector<32x128xbf16>, vector<8x128xf32> -> vector<8x128xf32>
    %192 = arith.addf %187, %191 : vector<8x128xf32>
    %c0_97 = arith.constant 0 : index
    %c0_98 = arith.constant 0 : index
    %193 = vector.load %arg5[%c0_97, %c0_98] : memref<8x32xf32, #tpu.memory_space<vmem>>, vector<8x32xf32>
    %194 = vector.extract_strided_slice %186 {offsets = [0, 0], sizes = [8, 32], strides = [1, 1]} : vector<8x128xf32> to vector<8x32xf32>
    %195 = arith.negf %194 : vector<8x32xf32>
    %196 = math.exp %195 : vector<8x32xf32>
    %cst_99 = arith.constant 1.000000e+00 : f32
    %197 = vector.broadcast %cst_99 : f32 to vector<8x32xf32>
    %198 = arith.addf %197, %196 : vector<8x32xf32>
    %199 = arith.divf %197, %198 : vector<8x32xf32>
    %200 = vector.extract_strided_slice %186 {offsets = [0, 32], sizes = [8, 32], strides = [1, 1]} : vector<8x128xf32> to vector<8x32xf32>
    %201 = arith.negf %200 : vector<8x32xf32>
    %202 = math.exp %201 : vector<8x32xf32>
    %cst_100 = arith.constant 1.000000e+00 : f32
    %203 = vector.broadcast %cst_100 : f32 to vector<8x32xf32>
    %204 = arith.addf %203, %202 : vector<8x32xf32>
    %205 = arith.divf %203, %204 : vector<8x32xf32>
    %206 = vector.extract_strided_slice %186 {offsets = [0, 64], sizes = [8, 32], strides = [1, 1]} : vector<8x128xf32> to vector<8x32xf32>
    %207 = math.tanh %206 : vector<8x32xf32>
    %208 = vector.extract_strided_slice %186 {offsets = [0, 96], sizes = [8, 32], strides = [1, 1]} : vector<8x128xf32> to vector<8x32xf32>
    %209 = arith.negf %208 : vector<8x32xf32>
    %210 = math.exp %209 : vector<8x32xf32>
    %cst_101 = arith.constant 1.000000e+00 : f32
    %211 = vector.broadcast %cst_101 : f32 to vector<8x32xf32>
    %212 = arith.addf %211, %210 : vector<8x32xf32>
    %213 = arith.divf %211, %212 : vector<8x32xf32>
    %214 = arith.mulf %205, %193 : vector<8x32xf32>
    %215 = arith.mulf %199, %207 : vector<8x32xf32>
    %216 = arith.addf %214, %215 : vector<8x32xf32>
    %217 = math.tanh %216 : vector<8x32xf32>
    %218 = arith.mulf %213, %217 : vector<8x32xf32>
    %c0_102 = arith.constant 0 : index
    %c0_103 = arith.constant 0 : index
    %219 = vector.load %arg7[%c0_102, %c0_103] : memref<8x32xf32, #tpu.memory_space<vmem>>, vector<8x32xf32>
    %220 = vector.extract_strided_slice %192 {offsets = [0, 0], sizes = [8, 32], strides = [1, 1]} : vector<8x128xf32> to vector<8x32xf32>
    %221 = arith.negf %220 : vector<8x32xf32>
    %222 = math.exp %221 : vector<8x32xf32>
    %cst_104 = arith.constant 1.000000e+00 : f32
    %223 = vector.broadcast %cst_104 : f32 to vector<8x32xf32>
    %224 = arith.addf %223, %222 : vector<8x32xf32>
    %225 = arith.divf %223, %224 : vector<8x32xf32>
    %226 = vector.extract_strided_slice %192 {offsets = [0, 32], sizes = [8, 32], strides = [1, 1]} : vector<8x128xf32> to vector<8x32xf32>
    %227 = arith.negf %226 : vector<8x32xf32>
    %228 = math.exp %227 : vector<8x32xf32>
    %cst_105 = arith.constant 1.000000e+00 : f32
    %229 = vector.broadcast %cst_105 : f32 to vector<8x32xf32>
    %230 = arith.addf %229, %228 : vector<8x32xf32>
    %231 = arith.divf %229, %230 : vector<8x32xf32>
    %232 = vector.extract_strided_slice %192 {offsets = [0, 64], sizes = [8, 32], strides = [1, 1]} : vector<8x128xf32> to vector<8x32xf32>
    %233 = math.tanh %232 : vector<8x32xf32>
    %234 = vector.extract_strided_slice %192 {offsets = [0, 96], sizes = [8, 32], strides = [1, 1]} : vector<8x128xf32> to vector<8x32xf32>
    %235 = arith.negf %234 : vector<8x32xf32>
    %236 = math.exp %235 : vector<8x32xf32>
    %cst_106 = arith.constant 1.000000e+00 : f32
    %237 = vector.broadcast %cst_106 : f32 to vector<8x32xf32>
    %238 = arith.addf %237, %236 : vector<8x32xf32>
    %239 = arith.divf %237, %238 : vector<8x32xf32>
    %240 = arith.mulf %231, %219 : vector<8x32xf32>
    %241 = arith.mulf %225, %233 : vector<8x32xf32>
    %242 = arith.addf %240, %241 : vector<8x32xf32>
    %243 = math.tanh %242 : vector<8x32xf32>
    %244 = arith.mulf %239, %243 : vector<8x32xf32>
    %c0_107 = arith.constant 0 : index
    %c0_108 = arith.constant 0 : index
    %245 = vector.load %arg4[%c0_107, %c0_108] : memref<8x32xf32, #tpu.memory_space<vmem>>, vector<8x32xf32>
    tpu.vector_store %arg4[%c0_107, %c0_108], %218 {strides = array<i32>} : memref<8x32xf32, #tpu.memory_space<vmem>>, vector<8x32xf32>,
    %c0_109 = arith.constant 0 : index
    %c0_110 = arith.constant 0 : index
    %246 = vector.load %arg5[%c0_109, %c0_110] : memref<8x32xf32, #tpu.memory_space<vmem>>, vector<8x32xf32>
    tpu.vector_store %arg5[%c0_109, %c0_110], %216 {strides = array<i32>} : memref<8x32xf32, #tpu.memory_space<vmem>>, vector<8x32xf32>,
    %c0_111 = arith.constant 0 : index
    %c0_112 = arith.constant 0 : index
    %247 = vector.load %arg6[%c0_111, %c0_112] : memref<8x32xf32, #tpu.memory_space<vmem>>, vector<8x32xf32>
    tpu.vector_store %arg6[%c0_111, %c0_112], %244 {strides = array<i32>} : memref<8x32xf32, #tpu.memory_space<vmem>>, vector<8x32xf32>,
    %c0_113 = arith.constant 0 : index
    %c0_114 = arith.constant 0 : index
    %248 = vector.load %arg7[%c0_113, %c0_114] : memref<8x32xf32, #tpu.memory_space<vmem>>, vector<8x32xf32>
    tpu.vector_store %arg7[%c0_113, %c0_114], %242 {strides = array<i32>} : memref<8x32xf32, #tpu.memory_space<vmem>>, vector<8x32xf32>,
    %249 = arith.index_cast %c2_i32 : i32 to index
    %c0_115 = arith.constant 0 : index
    %c0_116 = arith.constant 0 : index
    %250 = vector.load %arg3[%249, %c0_115, %c0_116] : memref<8x8x64xf32, #tpu.memory_space<vmem>>, vector<1x8x32xf32>
    %251 = vector.shape_cast %250 : vector<1x8x32xf32> to vector<8x32xf32>
    %252 = vector.shape_cast %218 : vector<8x32xf32> to vector<1x8x32xf32>
    tpu.vector_store %arg3[%249, %c0_115, %c0_116], %252 {strides = array<i32>} : memref<8x8x64xf32, #tpu.memory_space<vmem>>, vector<1x8x32xf32>,
    %253 = arith.index_cast %174 : i32 to index
    %c0_117 = arith.constant 0 : index
    %c32_118 = arith.constant 32 : index
    %254 = vector.load %arg3[%253, %c0_117, %c32_118] : memref<8x8x64xf32, #tpu.memory_space<vmem>>, vector<1x8x32xf32>
    %255 = vector.shape_cast %254 : vector<1x8x32xf32> to vector<8x32xf32>
    %256 = vector.shape_cast %244 : vector<8x32xf32> to vector<1x8x32xf32>
    tpu.vector_store %arg3[%253, %c0_117, %c32_118], %256 {strides = array<i32>} : memref<8x8x64xf32, #tpu.memory_space<vmem>>, vector<1x8x32xf32>,
    %c3_i32 = arith.constant 3 : i32
    %c7_i32_119 = arith.constant 7 : i32
    %257 = arith.subi %c7_i32_119, %c3_i32 : i32
    %258 = arith.index_cast %c3_i32 : i32 to index
    %c0_120 = arith.constant 0 : index
    %c0_121 = arith.constant 0 : index
    %259 = vector.load %arg0[%258, %c0_120, %c0_121] : memref<8x8x256xf32, #tpu.memory_space<vmem>>, vector<1x8x256xf32>
    %260 = vector.shape_cast %259 : vector<1x8x256xf32> to vector<8x256xf32>
    %261 = arith.index_cast %257 : i32 to index
    %c0_122 = arith.constant 0 : index
    %c0_123 = arith.constant 0 : index
    %262 = vector.load %arg0[%261, %c0_122, %c0_123] : memref<8x8x256xf32, #tpu.memory_space<vmem>>, vector<1x8x256xf32>
    %263 = vector.shape_cast %262 : vector<1x8x256xf32> to vector<8x256xf32>
    %264 = vector.extract_strided_slice %260 {offsets = [0, 0], sizes = [8, 128], strides = [1, 1]} : vector<8x256xf32> to vector<8x128xf32>
    %c0_124 = arith.constant 0 : index
    %c0_125 = arith.constant 0 : index
    %265 = vector.load %arg4[%c0_124, %c0_125] : memref<8x32xf32, #tpu.memory_space<vmem>>, vector<8x32xf32>
    %266 = arith.truncf %265 : vector<8x32xf32> to vector<8x32xbf16>
    %c0_126 = arith.constant 0 : index
    %c0_127 = arith.constant 0 : index
    %267 = vector.load %arg1[%c0_126, %c0_127] : memref<32x128xbf16, #tpu.memory_space<vmem>>, vector<32x128xbf16>
    %cst_128 = arith.constant dense<0.000000e+00> : vector<8x128xf32>
    %268 = tpu.matmul %266, %267, %cst_128 {dimension_numbers = #tpu.dot_dimension_numbers<[1], [0], [0], [1], [0, 0, 1, 1], [], []>} : vector<8x32xbf16>, vector<32x128xbf16>, vector<8x128xf32> -> vector<8x128xf32>
    %269 = arith.addf %264, %268 : vector<8x128xf32>
    %270 = vector.extract_strided_slice %263 {offsets = [0, 128], sizes = [8, 128], strides = [1, 1]} : vector<8x256xf32> to vector<8x128xf32>
    %c0_129 = arith.constant 0 : index
    %c0_130 = arith.constant 0 : index
    %271 = vector.load %arg6[%c0_129, %c0_130] : memref<8x32xf32, #tpu.memory_space<vmem>>, vector<8x32xf32>
    %272 = arith.truncf %271 : vector<8x32xf32> to vector<8x32xbf16>
    %c0_131 = arith.constant 0 : index
    %c0_132 = arith.constant 0 : index
    %273 = vector.load %arg2[%c0_131, %c0_132] : memref<32x128xbf16, #tpu.memory_space<vmem>>, vector<32x128xbf16>
    %cst_133 = arith.constant dense<0.000000e+00> : vector<8x128xf32>
    %274 = tpu.matmul %272, %273, %cst_133 {dimension_numbers = #tpu.dot_dimension_numbers<[1], [0], [0], [1], [0, 0, 1, 1], [], []>} : vector<8x32xbf16>, vector<32x128xbf16>, vector<8x128xf32> -> vector<8x128xf32>
    %275 = arith.addf %270, %274 : vector<8x128xf32>
    %c0_134 = arith.constant 0 : index
    %c0_135 = arith.constant 0 : index
    %276 = vector.load %arg5[%c0_134, %c0_135] : memref<8x32xf32, #tpu.memory_space<vmem>>, vector<8x32xf32>
    %277 = vector.extract_strided_slice %269 {offsets = [0, 0], sizes = [8, 32], strides = [1, 1]} : vector<8x128xf32> to vector<8x32xf32>
    %278 = arith.negf %277 : vector<8x32xf32>
    %279 = math.exp %278 : vector<8x32xf32>
    %cst_136 = arith.constant 1.000000e+00 : f32
    %280 = vector.broadcast %cst_136 : f32 to vector<8x32xf32>
    %281 = arith.addf %280, %279 : vector<8x32xf32>
    %282 = arith.divf %280, %281 : vector<8x32xf32>
    %283 = vector.extract_strided_slice %269 {offsets = [0, 32], sizes = [8, 32], strides = [1, 1]} : vector<8x128xf32> to vector<8x32xf32>
    %284 = arith.negf %283 : vector<8x32xf32>
    %285 = math.exp %284 : vector<8x32xf32>
    %cst_137 = arith.constant 1.000000e+00 : f32
    %286 = vector.broadcast %cst_137 : f32 to vector<8x32xf32>
    %287 = arith.addf %286, %285 : vector<8x32xf32>
    %288 = arith.divf %286, %287 : vector<8x32xf32>
    %289 = vector.extract_strided_slice %269 {offsets = [0, 64], sizes = [8, 32], strides = [1, 1]} : vector<8x128xf32> to vector<8x32xf32>
    %290 = math.tanh %289 : vector<8x32xf32>
    %291 = vector.extract_strided_slice %269 {offsets = [0, 96], sizes = [8, 32], strides = [1, 1]} : vector<8x128xf32> to vector<8x32xf32>
    %292 = arith.negf %291 : vector<8x32xf32>
    %293 = math.exp %292 : vector<8x32xf32>
    %cst_138 = arith.constant 1.000000e+00 : f32
    %294 = vector.broadcast %cst_138 : f32 to vector<8x32xf32>
    %295 = arith.addf %294, %293 : vector<8x32xf32>
    %296 = arith.divf %294, %295 : vector<8x32xf32>
    %297 = arith.mulf %288, %276 : vector<8x32xf32>
    %298 = arith.mulf %282, %290 : vector<8x32xf32>
    %299 = arith.addf %297, %298 : vector<8x32xf32>
    %300 = math.tanh %299 : vector<8x32xf32>
    %301 = arith.mulf %296, %300 : vector<8x32xf32>
    %c0_139 = arith.constant 0 : index
    %c0_140 = arith.constant 0 : index
    %302 = vector.load %arg7[%c0_139, %c0_140] : memref<8x32xf32, #tpu.memory_space<vmem>>, vector<8x32xf32>
    %303 = vector.extract_strided_slice %275 {offsets = [0, 0], sizes = [8, 32], strides = [1, 1]} : vector<8x128xf32> to vector<8x32xf32>
    %304 = arith.negf %303 : vector<8x32xf32>
    %305 = math.exp %304 : vector<8x32xf32>
    %cst_141 = arith.constant 1.000000e+00 : f32
    %306 = vector.broadcast %cst_141 : f32 to vector<8x32xf32>
    %307 = arith.addf %306, %305 : vector<8x32xf32>
    %308 = arith.divf %306, %307 : vector<8x32xf32>
    %309 = vector.extract_strided_slice %275 {offsets = [0, 32], sizes = [8, 32], strides = [1, 1]} : vector<8x128xf32> to vector<8x32xf32>
    %310 = arith.negf %309 : vector<8x32xf32>
    %311 = math.exp %310 : vector<8x32xf32>
    %cst_142 = arith.constant 1.000000e+00 : f32
    %312 = vector.broadcast %cst_142 : f32 to vector<8x32xf32>
    %313 = arith.addf %312, %311 : vector<8x32xf32>
    %314 = arith.divf %312, %313 : vector<8x32xf32>
    %315 = vector.extract_strided_slice %275 {offsets = [0, 64], sizes = [8, 32], strides = [1, 1]} : vector<8x128xf32> to vector<8x32xf32>
    %316 = math.tanh %315 : vector<8x32xf32>
    %317 = vector.extract_strided_slice %275 {offsets = [0, 96], sizes = [8, 32], strides = [1, 1]} : vector<8x128xf32> to vector<8x32xf32>
    %318 = arith.negf %317 : vector<8x32xf32>
    %319 = math.exp %318 : vector<8x32xf32>
    %cst_143 = arith.constant 1.000000e+00 : f32
    %320 = vector.broadcast %cst_143 : f32 to vector<8x32xf32>
    %321 = arith.addf %320, %319 : vector<8x32xf32>
    %322 = arith.divf %320, %321 : vector<8x32xf32>
    %323 = arith.mulf %314, %302 : vector<8x32xf32>
    %324 = arith.mulf %308, %316 : vector<8x32xf32>
    %325 = arith.addf %323, %324 : vector<8x32xf32>
    %326 = math.tanh %325 : vector<8x32xf32>
    %327 = arith.mulf %322, %326 : vector<8x32xf32>
    %c0_144 = arith.constant 0 : index
    %c0_145 = arith.constant 0 : index
    %328 = vector.load %arg4[%c0_144, %c0_145] : memref<8x32xf32, #tpu.memory_space<vmem>>, vector<8x32xf32>
    tpu.vector_store %arg4[%c0_144, %c0_145], %301 {strides = array<i32>} : memref<8x32xf32, #tpu.memory_space<vmem>>, vector<8x32xf32>,
    %c0_146 = arith.constant 0 : index
    %c0_147 = arith.constant 0 : index
    %329 = vector.load %arg5[%c0_146, %c0_147] : memref<8x32xf32, #tpu.memory_space<vmem>>, vector<8x32xf32>
    tpu.vector_store %arg5[%c0_146, %c0_147], %299 {strides = array<i32>} : memref<8x32xf32, #tpu.memory_space<vmem>>, vector<8x32xf32>,
    %c0_148 = arith.constant 0 : index
    %c0_149 = arith.constant 0 : index
    %330 = vector.load %arg6[%c0_148, %c0_149] : memref<8x32xf32, #tpu.memory_space<vmem>>, vector<8x32xf32>
    tpu.vector_store %arg6[%c0_148, %c0_149], %327 {strides = array<i32>} : memref<8x32xf32, #tpu.memory_space<vmem>>, vector<8x32xf32>,
    %c0_150 = arith.constant 0 : index
    %c0_151 = arith.constant 0 : index
    %331 = vector.load %arg7[%c0_150, %c0_151] : memref<8x32xf32, #tpu.memory_space<vmem>>, vector<8x32xf32>
    tpu.vector_store %arg7[%c0_150, %c0_151], %325 {strides = array<i32>} : memref<8x32xf32, #tpu.memory_space<vmem>>, vector<8x32xf32>,
    %332 = arith.index_cast %c3_i32 : i32 to index
    %c0_152 = arith.constant 0 : index
    %c0_153 = arith.constant 0 : index
    %333 = vector.load %arg3[%332, %c0_152, %c0_153] : memref<8x8x64xf32, #tpu.memory_space<vmem>>, vector<1x8x32xf32>
    %334 = vector.shape_cast %333 : vector<1x8x32xf32> to vector<8x32xf32>
    %335 = vector.shape_cast %301 : vector<8x32xf32> to vector<1x8x32xf32>
    tpu.vector_store %arg3[%332, %c0_152, %c0_153], %335 {strides = array<i32>} : memref<8x8x64xf32, #tpu.memory_space<vmem>>, vector<1x8x32xf32>,
    %336 = arith.index_cast %257 : i32 to index
    %c0_154 = arith.constant 0 : index
    %c32_155 = arith.constant 32 : index
    %337 = vector.load %arg3[%336, %c0_154, %c32_155] : memref<8x8x64xf32, #tpu.memory_space<vmem>>, vector<1x8x32xf32>
    %338 = vector.shape_cast %337 : vector<1x8x32xf32> to vector<8x32xf32>
    %339 = vector.shape_cast %327 : vector<8x32xf32> to vector<1x8x32xf32>
    tpu.vector_store %arg3[%336, %c0_154, %c32_155], %339 {strides = array<i32>} : memref<8x8x64xf32, #tpu.memory_space<vmem>>, vector<1x8x32xf32>,
    %c4_i32 = arith.constant 4 : i32
    %c7_i32_156 = arith.constant 7 : i32
    %340 = arith.subi %c7_i32_156, %c4_i32 : i32
    %341 = arith.index_cast %c4_i32 : i32 to index
    %c0_157 = arith.constant 0 : index
    %c0_158 = arith.constant 0 : index
    %342 = vector.load %arg0[%341, %c0_157, %c0_158] : memref<8x8x256xf32, #tpu.memory_space<vmem>>, vector<1x8x256xf32>
    %343 = vector.shape_cast %342 : vector<1x8x256xf32> to vector<8x256xf32>
    %344 = arith.index_cast %340 : i32 to index
    %c0_159 = arith.constant 0 : index
    %c0_160 = arith.constant 0 : index
    %345 = vector.load %arg0[%344, %c0_159, %c0_160] : memref<8x8x256xf32, #tpu.memory_space<vmem>>, vector<1x8x256xf32>
    %346 = vector.shape_cast %345 : vector<1x8x256xf32> to vector<8x256xf32>
    %347 = vector.extract_strided_slice %343 {offsets = [0, 0], sizes = [8, 128], strides = [1, 1]} : vector<8x256xf32> to vector<8x128xf32>
    %c0_161 = arith.constant 0 : index
    %c0_162 = arith.constant 0 : index
    %348 = vector.load %arg4[%c0_161, %c0_162] : memref<8x32xf32, #tpu.memory_space<vmem>>, vector<8x32xf32>
    %349 = arith.truncf %348 : vector<8x32xf32> to vector<8x32xbf16>
    %c0_163 = arith.constant 0 : index
    %c0_164 = arith.constant 0 : index
    %350 = vector.load %arg1[%c0_163, %c0_164] : memref<32x128xbf16, #tpu.memory_space<vmem>>, vector<32x128xbf16>
    %cst_165 = arith.constant dense<0.000000e+00> : vector<8x128xf32>
    %351 = tpu.matmul %349, %350, %cst_165 {dimension_numbers = #tpu.dot_dimension_numbers<[1], [0], [0], [1], [0, 0, 1, 1], [], []>} : vector<8x32xbf16>, vector<32x128xbf16>, vector<8x128xf32> -> vector<8x128xf32>
    %352 = arith.addf %347, %351 : vector<8x128xf32>
    %353 = vector.extract_strided_slice %346 {offsets = [0, 128], sizes = [8, 128], strides = [1, 1]} : vector<8x256xf32> to vector<8x128xf32>
    %c0_166 = arith.constant 0 : index
    %c0_167 = arith.constant 0 : index
    %354 = vector.load %arg6[%c0_166, %c0_167] : memref<8x32xf32, #tpu.memory_space<vmem>>, vector<8x32xf32>
    %355 = arith.truncf %354 : vector<8x32xf32> to vector<8x32xbf16>
    %c0_168 = arith.constant 0 : index
    %c0_169 = arith.constant 0 : index
    %356 = vector.load %arg2[%c0_168, %c0_169] : memref<32x128xbf16, #tpu.memory_space<vmem>>, vector<32x128xbf16>
    %cst_170 = arith.constant dense<0.000000e+00> : vector<8x128xf32>
    %357 = tpu.matmul %355, %356, %cst_170 {dimension_numbers = #tpu.dot_dimension_numbers<[1], [0], [0], [1], [0, 0, 1, 1], [], []>} : vector<8x32xbf16>, vector<32x128xbf16>, vector<8x128xf32> -> vector<8x128xf32>
    %358 = arith.addf %353, %357 : vector<8x128xf32>
    %c0_171 = arith.constant 0 : index
    %c0_172 = arith.constant 0 : index
    %359 = vector.load %arg5[%c0_171, %c0_172] : memref<8x32xf32, #tpu.memory_space<vmem>>, vector<8x32xf32>
    %360 = vector.extract_strided_slice %352 {offsets = [0, 0], sizes = [8, 32], strides = [1, 1]} : vector<8x128xf32> to vector<8x32xf32>
    %361 = arith.negf %360 : vector<8x32xf32>
    %362 = math.exp %361 : vector<8x32xf32>
    %cst_173 = arith.constant 1.000000e+00 : f32
    %363 = vector.broadcast %cst_173 : f32 to vector<8x32xf32>
    %364 = arith.addf %363, %362 : vector<8x32xf32>
    %365 = arith.divf %363, %364 : vector<8x32xf32>
    %366 = vector.extract_strided_slice %352 {offsets = [0, 32], sizes = [8, 32], strides = [1, 1]} : vector<8x128xf32> to vector<8x32xf32>
    %367 = arith.negf %366 : vector<8x32xf32>
    %368 = math.exp %367 : vector<8x32xf32>
    %cst_174 = arith.constant 1.000000e+00 : f32
    %369 = vector.broadcast %cst_174 : f32 to vector<8x32xf32>
    %370 = arith.addf %369, %368 : vector<8x32xf32>
    %371 = arith.divf %369, %370 : vector<8x32xf32>
    %372 = vector.extract_strided_slice %352 {offsets = [0, 64], sizes = [8, 32], strides = [1, 1]} : vector<8x128xf32> to vector<8x32xf32>
    %373 = math.tanh %372 : vector<8x32xf32>
    %374 = vector.extract_strided_slice %352 {offsets = [0, 96], sizes = [8, 32], strides = [1, 1]} : vector<8x128xf32> to vector<8x32xf32>
    %375 = arith.negf %374 : vector<8x32xf32>
    %376 = math.exp %375 : vector<8x32xf32>
    %cst_175 = arith.constant 1.000000e+00 : f32
    %377 = vector.broadcast %cst_175 : f32 to vector<8x32xf32>
    %378 = arith.addf %377, %376 : vector<8x32xf32>
    %379 = arith.divf %377, %378 : vector<8x32xf32>
    %380 = arith.mulf %371, %359 : vector<8x32xf32>
    %381 = arith.mulf %365, %373 : vector<8x32xf32>
    %382 = arith.addf %380, %381 : vector<8x32xf32>
    %383 = math.tanh %382 : vector<8x32xf32>
    %384 = arith.mulf %379, %383 : vector<8x32xf32>
    %c0_176 = arith.constant 0 : index
    %c0_177 = arith.constant 0 : index
    %385 = vector.load %arg7[%c0_176, %c0_177] : memref<8x32xf32, #tpu.memory_space<vmem>>, vector<8x32xf32>
    %386 = vector.extract_strided_slice %358 {offsets = [0, 0], sizes = [8, 32], strides = [1, 1]} : vector<8x128xf32> to vector<8x32xf32>
    %387 = arith.negf %386 : vector<8x32xf32>
    %388 = math.exp %387 : vector<8x32xf32>
    %cst_178 = arith.constant 1.000000e+00 : f32
    %389 = vector.broadcast %cst_178 : f32 to vector<8x32xf32>
    %390 = arith.addf %389, %388 : vector<8x32xf32>
    %391 = arith.divf %389, %390 : vector<8x32xf32>
    %392 = vector.extract_strided_slice %358 {offsets = [0, 32], sizes = [8, 32], strides = [1, 1]} : vector<8x128xf32> to vector<8x32xf32>
    %393 = arith.negf %392 : vector<8x32xf32>
    %394 = math.exp %393 : vector<8x32xf32>
    %cst_179 = arith.constant 1.000000e+00 : f32
    %395 = vector.broadcast %cst_179 : f32 to vector<8x32xf32>
    %396 = arith.addf %395, %394 : vector<8x32xf32>
    %397 = arith.divf %395, %396 : vector<8x32xf32>
    %398 = vector.extract_strided_slice %358 {offsets = [0, 64], sizes = [8, 32], strides = [1, 1]} : vector<8x128xf32> to vector<8x32xf32>
    %399 = math.tanh %398 : vector<8x32xf32>
    %400 = vector.extract_strided_slice %358 {offsets = [0, 96], sizes = [8, 32], strides = [1, 1]} : vector<8x128xf32> to vector<8x32xf32>
    %401 = arith.negf %400 : vector<8x32xf32>
    %402 = math.exp %401 : vector<8x32xf32>
    %cst_180 = arith.constant 1.000000e+00 : f32
    %403 = vector.broadcast %cst_180 : f32 to vector<8x32xf32>
    %404 = arith.addf %403, %402 : vector<8x32xf32>
    %405 = arith.divf %403, %404 : vector<8x32xf32>
    %406 = arith.mulf %397, %385 : vector<8x32xf32>
    %407 = arith.mulf %391, %399 : vector<8x32xf32>
    %408 = arith.addf %406, %407 : vector<8x32xf32>
    %409 = math.tanh %408 : vector<8x32xf32>
    %410 = arith.mulf %405, %409 : vector<8x32xf32>
    %c0_181 = arith.constant 0 : index
    %c0_182 = arith.constant 0 : index
    %411 = vector.load %arg4[%c0_181, %c0_182] : memref<8x32xf32, #tpu.memory_space<vmem>>, vector<8x32xf32>
    tpu.vector_store %arg4[%c0_181, %c0_182], %384 {strides = array<i32>} : memref<8x32xf32, #tpu.memory_space<vmem>>, vector<8x32xf32>,
    %c0_183 = arith.constant 0 : index
    %c0_184 = arith.constant 0 : index
    %412 = vector.load %arg5[%c0_183, %c0_184] : memref<8x32xf32, #tpu.memory_space<vmem>>, vector<8x32xf32>
    tpu.vector_store %arg5[%c0_183, %c0_184], %382 {strides = array<i32>} : memref<8x32xf32, #tpu.memory_space<vmem>>, vector<8x32xf32>,
    %c0_185 = arith.constant 0 : index
    %c0_186 = arith.constant 0 : index
    %413 = vector.load %arg6[%c0_185, %c0_186] : memref<8x32xf32, #tpu.memory_space<vmem>>, vector<8x32xf32>
    tpu.vector_store %arg6[%c0_185, %c0_186], %410 {strides = array<i32>} : memref<8x32xf32, #tpu.memory_space<vmem>>, vector<8x32xf32>,
    %c0_187 = arith.constant 0 : index
    %c0_188 = arith.constant 0 : index
    %414 = vector.load %arg7[%c0_187, %c0_188] : memref<8x32xf32, #tpu.memory_space<vmem>>, vector<8x32xf32>
    tpu.vector_store %arg7[%c0_187, %c0_188], %408 {strides = array<i32>} : memref<8x32xf32, #tpu.memory_space<vmem>>, vector<8x32xf32>,
    %415 = arith.index_cast %c4_i32 : i32 to index
    %c0_189 = arith.constant 0 : index
    %c0_190 = arith.constant 0 : index
    %416 = vector.load %arg3[%415, %c0_189, %c0_190] : memref<8x8x64xf32, #tpu.memory_space<vmem>>, vector<1x8x32xf32>
    %417 = vector.shape_cast %416 : vector<1x8x32xf32> to vector<8x32xf32>
    %418 = vector.shape_cast %384 : vector<8x32xf32> to vector<1x8x32xf32>
    tpu.vector_store %arg3[%415, %c0_189, %c0_190], %418 {strides = array<i32>} : memref<8x8x64xf32, #tpu.memory_space<vmem>>, vector<1x8x32xf32>,
    %419 = arith.index_cast %340 : i32 to index
    %c0_191 = arith.constant 0 : index
    %c32_192 = arith.constant 32 : index
    %420 = vector.load %arg3[%419, %c0_191, %c32_192] : memref<8x8x64xf32, #tpu.memory_space<vmem>>, vector<1x8x32xf32>
    %421 = vector.shape_cast %420 : vector<1x8x32xf32> to vector<8x32xf32>
    %422 = vector.shape_cast %410 : vector<8x32xf32> to vector<1x8x32xf32>
    tpu.vector_store %arg3[%419, %c0_191, %c32_192], %422 {strides = array<i32>} : memref<8x8x64xf32, #tpu.memory_space<vmem>>, vector<1x8x32xf32>,
    %c5_i32 = arith.constant 5 : i32
    %c7_i32_193 = arith.constant 7 : i32
    %423 = arith.subi %c7_i32_193, %c5_i32 : i32
    %424 = arith.index_cast %c5_i32 : i32 to index
    %c0_194 = arith.constant 0 : index
    %c0_195 = arith.constant 0 : index
    %425 = vector.load %arg0[%424, %c0_194, %c0_195] : memref<8x8x256xf32, #tpu.memory_space<vmem>>, vector<1x8x256xf32>
    %426 = vector.shape_cast %425 : vector<1x8x256xf32> to vector<8x256xf32>
    %427 = arith.index_cast %423 : i32 to index
    %c0_196 = arith.constant 0 : index
    %c0_197 = arith.constant 0 : index
    %428 = vector.load %arg0[%427, %c0_196, %c0_197] : memref<8x8x256xf32, #tpu.memory_space<vmem>>, vector<1x8x256xf32>
    %429 = vector.shape_cast %428 : vector<1x8x256xf32> to vector<8x256xf32>
    %430 = vector.extract_strided_slice %426 {offsets = [0, 0], sizes = [8, 128], strides = [1, 1]} : vector<8x256xf32> to vector<8x128xf32>
    %c0_198 = arith.constant 0 : index
    %c0_199 = arith.constant 0 : index
    %431 = vector.load %arg4[%c0_198, %c0_199] : memref<8x32xf32, #tpu.memory_space<vmem>>, vector<8x32xf32>
    %432 = arith.truncf %431 : vector<8x32xf32> to vector<8x32xbf16>
    %c0_200 = arith.constant 0 : index
    %c0_201 = arith.constant 0 : index
    %433 = vector.load %arg1[%c0_200, %c0_201] : memref<32x128xbf16, #tpu.memory_space<vmem>>, vector<32x128xbf16>
    %cst_202 = arith.constant dense<0.000000e+00> : vector<8x128xf32>
    %434 = tpu.matmul %432, %433, %cst_202 {dimension_numbers = #tpu.dot_dimension_numbers<[1], [0], [0], [1], [0, 0, 1, 1], [], []>} : vector<8x32xbf16>, vector<32x128xbf16>, vector<8x128xf32> -> vector<8x128xf32>
    %435 = arith.addf %430, %434 : vector<8x128xf32>
    %436 = vector.extract_strided_slice %429 {offsets = [0, 128], sizes = [8, 128], strides = [1, 1]} : vector<8x256xf32> to vector<8x128xf32>
    %c0_203 = arith.constant 0 : index
    %c0_204 = arith.constant 0 : index
    %437 = vector.load %arg6[%c0_203, %c0_204] : memref<8x32xf32, #tpu.memory_space<vmem>>, vector<8x32xf32>
    %438 = arith.truncf %437 : vector<8x32xf32> to vector<8x32xbf16>
    %c0_205 = arith.constant 0 : index
    %c0_206 = arith.constant 0 : index
    %439 = vector.load %arg2[%c0_205, %c0_206] : memref<32x128xbf16, #tpu.memory_space<vmem>>, vector<32x128xbf16>
    %cst_207 = arith.constant dense<0.000000e+00> : vector<8x128xf32>
    %440 = tpu.matmul %438, %439, %cst_207 {dimension_numbers = #tpu.dot_dimension_numbers<[1], [0], [0], [1], [0, 0, 1, 1], [], []>} : vector<8x32xbf16>, vector<32x128xbf16>, vector<8x128xf32> -> vector<8x128xf32>
    %441 = arith.addf %436, %440 : vector<8x128xf32>
    %c0_208 = arith.constant 0 : index
    %c0_209 = arith.constant 0 : index
    %442 = vector.load %arg5[%c0_208, %c0_209] : memref<8x32xf32, #tpu.memory_space<vmem>>, vector<8x32xf32>
    %443 = vector.extract_strided_slice %435 {offsets = [0, 0], sizes = [8, 32], strides = [1, 1]} : vector<8x128xf32> to vector<8x32xf32>
    %444 = arith.negf %443 : vector<8x32xf32>
    %445 = math.exp %444 : vector<8x32xf32>
    %cst_210 = arith.constant 1.000000e+00 : f32
    %446 = vector.broadcast %cst_210 : f32 to vector<8x32xf32>
    %447 = arith.addf %446, %445 : vector<8x32xf32>
    %448 = arith.divf %446, %447 : vector<8x32xf32>
    %449 = vector.extract_strided_slice %435 {offsets = [0, 32], sizes = [8, 32], strides = [1, 1]} : vector<8x128xf32> to vector<8x32xf32>
    %450 = arith.negf %449 : vector<8x32xf32>
    %451 = math.exp %450 : vector<8x32xf32>
    %cst_211 = arith.constant 1.000000e+00 : f32
    %452 = vector.broadcast %cst_211 : f32 to vector<8x32xf32>
    %453 = arith.addf %452, %451 : vector<8x32xf32>
    %454 = arith.divf %452, %453 : vector<8x32xf32>
    %455 = vector.extract_strided_slice %435 {offsets = [0, 64], sizes = [8, 32], strides = [1, 1]} : vector<8x128xf32> to vector<8x32xf32>
    %456 = math.tanh %455 : vector<8x32xf32>
    %457 = vector.extract_strided_slice %435 {offsets = [0, 96], sizes = [8, 32], strides = [1, 1]} : vector<8x128xf32> to vector<8x32xf32>
    %458 = arith.negf %457 : vector<8x32xf32>
    %459 = math.exp %458 : vector<8x32xf32>
    %cst_212 = arith.constant 1.000000e+00 : f32
    %460 = vector.broadcast %cst_212 : f32 to vector<8x32xf32>
    %461 = arith.addf %460, %459 : vector<8x32xf32>
    %462 = arith.divf %460, %461 : vector<8x32xf32>
    %463 = arith.mulf %454, %442 : vector<8x32xf32>
    %464 = arith.mulf %448, %456 : vector<8x32xf32>
    %465 = arith.addf %463, %464 : vector<8x32xf32>
    %466 = math.tanh %465 : vector<8x32xf32>
    %467 = arith.mulf %462, %466 : vector<8x32xf32>
    %c0_213 = arith.constant 0 : index
    %c0_214 = arith.constant 0 : index
    %468 = vector.load %arg7[%c0_213, %c0_214] : memref<8x32xf32, #tpu.memory_space<vmem>>, vector<8x32xf32>
    %469 = vector.extract_strided_slice %441 {offsets = [0, 0], sizes = [8, 32], strides = [1, 1]} : vector<8x128xf32> to vector<8x32xf32>
    %470 = arith.negf %469 : vector<8x32xf32>
    %471 = math.exp %470 : vector<8x32xf32>
    %cst_215 = arith.constant 1.000000e+00 : f32
    %472 = vector.broadcast %cst_215 : f32 to vector<8x32xf32>
    %473 = arith.addf %472, %471 : vector<8x32xf32>
    %474 = arith.divf %472, %473 : vector<8x32xf32>
    %475 = vector.extract_strided_slice %441 {offsets = [0, 32], sizes = [8, 32], strides = [1, 1]} : vector<8x128xf32> to vector<8x32xf32>
    %476 = arith.negf %475 : vector<8x32xf32>
    %477 = math.exp %476 : vector<8x32xf32>
    %cst_216 = arith.constant 1.000000e+00 : f32
    %478 = vector.broadcast %cst_216 : f32 to vector<8x32xf32>
    %479 = arith.addf %478, %477 : vector<8x32xf32>
    %480 = arith.divf %478, %479 : vector<8x32xf32>
    %481 = vector.extract_strided_slice %441 {offsets = [0, 64], sizes = [8, 32], strides = [1, 1]} : vector<8x128xf32> to vector<8x32xf32>
    %482 = math.tanh %481 : vector<8x32xf32>
    %483 = vector.extract_strided_slice %441 {offsets = [0, 96], sizes = [8, 32], strides = [1, 1]} : vector<8x128xf32> to vector<8x32xf32>
    %484 = arith.negf %483 : vector<8x32xf32>
    %485 = math.exp %484 : vector<8x32xf32>
    %cst_217 = arith.constant 1.000000e+00 : f32
    %486 = vector.broadcast %cst_217 : f32 to vector<8x32xf32>
    %487 = arith.addf %486, %485 : vector<8x32xf32>
    %488 = arith.divf %486, %487 : vector<8x32xf32>
    %489 = arith.mulf %480, %468 : vector<8x32xf32>
    %490 = arith.mulf %474, %482 : vector<8x32xf32>
    %491 = arith.addf %489, %490 : vector<8x32xf32>
    %492 = math.tanh %491 : vector<8x32xf32>
    %493 = arith.mulf %488, %492 : vector<8x32xf32>
    %c0_218 = arith.constant 0 : index
    %c0_219 = arith.constant 0 : index
    %494 = vector.load %arg4[%c0_218, %c0_219] : memref<8x32xf32, #tpu.memory_space<vmem>>, vector<8x32xf32>
    tpu.vector_store %arg4[%c0_218, %c0_219], %467 {strides = array<i32>} : memref<8x32xf32, #tpu.memory_space<vmem>>, vector<8x32xf32>,
    %c0_220 = arith.constant 0 : index
    %c0_221 = arith.constant 0 : index
    %495 = vector.load %arg5[%c0_220, %c0_221] : memref<8x32xf32, #tpu.memory_space<vmem>>, vector<8x32xf32>
    tpu.vector_store %arg5[%c0_220, %c0_221], %465 {strides = array<i32>} : memref<8x32xf32, #tpu.memory_space<vmem>>, vector<8x32xf32>,
    %c0_222 = arith.constant 0 : index
    %c0_223 = arith.constant 0 : index
    %496 = vector.load %arg6[%c0_222, %c0_223] : memref<8x32xf32, #tpu.memory_space<vmem>>, vector<8x32xf32>
    tpu.vector_store %arg6[%c0_222, %c0_223], %493 {strides = array<i32>} : memref<8x32xf32, #tpu.memory_space<vmem>>, vector<8x32xf32>,
    %c0_224 = arith.constant 0 : index
    %c0_225 = arith.constant 0 : index
    %497 = vector.load %arg7[%c0_224, %c0_225] : memref<8x32xf32, #tpu.memory_space<vmem>>, vector<8x32xf32>
    tpu.vector_store %arg7[%c0_224, %c0_225], %491 {strides = array<i32>} : memref<8x32xf32, #tpu.memory_space<vmem>>, vector<8x32xf32>,
    %498 = arith.index_cast %c5_i32 : i32 to index
    %c0_226 = arith.constant 0 : index
    %c0_227 = arith.constant 0 : index
    %499 = vector.load %arg3[%498, %c0_226, %c0_227] : memref<8x8x64xf32, #tpu.memory_space<vmem>>, vector<1x8x32xf32>
    %500 = vector.shape_cast %499 : vector<1x8x32xf32> to vector<8x32xf32>
    %501 = vector.shape_cast %467 : vector<8x32xf32> to vector<1x8x32xf32>
    tpu.vector_store %arg3[%498, %c0_226, %c0_227], %501 {strides = array<i32>} : memref<8x8x64xf32, #tpu.memory_space<vmem>>, vector<1x8x32xf32>,
    %502 = arith.index_cast %423 : i32 to index
    %c0_228 = arith.constant 0 : index
    %c32_229 = arith.constant 32 : index
    %503 = vector.load %arg3[%502, %c0_228, %c32_229] : memref<8x8x64xf32, #tpu.memory_space<vmem>>, vector<1x8x32xf32>
    %504 = vector.shape_cast %503 : vector<1x8x32xf32> to vector<8x32xf32>
    %505 = vector.shape_cast %493 : vector<8x32xf32> to vector<1x8x32xf32>
    tpu.vector_store %arg3[%502, %c0_228, %c32_229], %505 {strides = array<i32>} : memref<8x8x64xf32, #tpu.memory_space<vmem>>, vector<1x8x32xf32>,
    %c6_i32 = arith.constant 6 : i32
    %c7_i32_230 = arith.constant 7 : i32
    %506 = arith.subi %c7_i32_230, %c6_i32 : i32
    %507 = arith.index_cast %c6_i32 : i32 to index
    %c0_231 = arith.constant 0 : index
    %c0_232 = arith.constant 0 : index
    %508 = vector.load %arg0[%507, %c0_231, %c0_232] : memref<8x8x256xf32, #tpu.memory_space<vmem>>, vector<1x8x256xf32>
    %509 = vector.shape_cast %508 : vector<1x8x256xf32> to vector<8x256xf32>
    %510 = arith.index_cast %506 : i32 to index
    %c0_233 = arith.constant 0 : index
    %c0_234 = arith.constant 0 : index
    %511 = vector.load %arg0[%510, %c0_233, %c0_234] : memref<8x8x256xf32, #tpu.memory_space<vmem>>, vector<1x8x256xf32>
    %512 = vector.shape_cast %511 : vector<1x8x256xf32> to vector<8x256xf32>
    %513 = vector.extract_strided_slice %509 {offsets = [0, 0], sizes = [8, 128], strides = [1, 1]} : vector<8x256xf32> to vector<8x128xf32>
    %c0_235 = arith.constant 0 : index
    %c0_236 = arith.constant 0 : index
    %514 = vector.load %arg4[%c0_235, %c0_236] : memref<8x32xf32, #tpu.memory_space<vmem>>, vector<8x32xf32>
    %515 = arith.truncf %514 : vector<8x32xf32> to vector<8x32xbf16>
    %c0_237 = arith.constant 0 : index
    %c0_238 = arith.constant 0 : index
    %516 = vector.load %arg1[%c0_237, %c0_238] : memref<32x128xbf16, #tpu.memory_space<vmem>>, vector<32x128xbf16>
    %cst_239 = arith.constant dense<0.000000e+00> : vector<8x128xf32>
    %517 = tpu.matmul %515, %516, %cst_239 {dimension_numbers = #tpu.dot_dimension_numbers<[1], [0], [0], [1], [0, 0, 1, 1], [], []>} : vector<8x32xbf16>, vector<32x128xbf16>, vector<8x128xf32> -> vector<8x128xf32>
    %518 = arith.addf %513, %517 : vector<8x128xf32>
    %519 = vector.extract_strided_slice %512 {offsets = [0, 128], sizes = [8, 128], strides = [1, 1]} : vector<8x256xf32> to vector<8x128xf32>
    %c0_240 = arith.constant 0 : index
    %c0_241 = arith.constant 0 : index
    %520 = vector.load %arg6[%c0_240, %c0_241] : memref<8x32xf32, #tpu.memory_space<vmem>>, vector<8x32xf32>
    %521 = arith.truncf %520 : vector<8x32xf32> to vector<8x32xbf16>
    %c0_242 = arith.constant 0 : index
    %c0_243 = arith.constant 0 : index
    %522 = vector.load %arg2[%c0_242, %c0_243] : memref<32x128xbf16, #tpu.memory_space<vmem>>, vector<32x128xbf16>
    %cst_244 = arith.constant dense<0.000000e+00> : vector<8x128xf32>
    %523 = tpu.matmul %521, %522, %cst_244 {dimension_numbers = #tpu.dot_dimension_numbers<[1], [0], [0], [1], [0, 0, 1, 1], [], []>} : vector<8x32xbf16>, vector<32x128xbf16>, vector<8x128xf32> -> vector<8x128xf32>
    %524 = arith.addf %519, %523 : vector<8x128xf32>
    %c0_245 = arith.constant 0 : index
    %c0_246 = arith.constant 0 : index
    %525 = vector.load %arg5[%c0_245, %c0_246] : memref<8x32xf32, #tpu.memory_space<vmem>>, vector<8x32xf32>
    %526 = vector.extract_strided_slice %518 {offsets = [0, 0], sizes = [8, 32], strides = [1, 1]} : vector<8x128xf32> to vector<8x32xf32>
    %527 = arith.negf %526 : vector<8x32xf32>
    %528 = math.exp %527 : vector<8x32xf32>
    %cst_247 = arith.constant 1.000000e+00 : f32
    %529 = vector.broadcast %cst_247 : f32 to vector<8x32xf32>
    %530 = arith.addf %529, %528 : vector<8x32xf32>
    %531 = arith.divf %529, %530 : vector<8x32xf32>
    %532 = vector.extract_strided_slice %518 {offsets = [0, 32], sizes = [8, 32], strides = [1, 1]} : vector<8x128xf32> to vector<8x32xf32>
    %533 = arith.negf %532 : vector<8x32xf32>
    %534 = math.exp %533 : vector<8x32xf32>
    %cst_248 = arith.constant 1.000000e+00 : f32
    %535 = vector.broadcast %cst_248 : f32 to vector<8x32xf32>
    %536 = arith.addf %535, %534 : vector<8x32xf32>
    %537 = arith.divf %535, %536 : vector<8x32xf32>
    %538 = vector.extract_strided_slice %518 {offsets = [0, 64], sizes = [8, 32], strides = [1, 1]} : vector<8x128xf32> to vector<8x32xf32>
    %539 = math.tanh %538 : vector<8x32xf32>
    %540 = vector.extract_strided_slice %518 {offsets = [0, 96], sizes = [8, 32], strides = [1, 1]} : vector<8x128xf32> to vector<8x32xf32>
    %541 = arith.negf %540 : vector<8x32xf32>
    %542 = math.exp %541 : vector<8x32xf32>
    %cst_249 = arith.constant 1.000000e+00 : f32
    %543 = vector.broadcast %cst_249 : f32 to vector<8x32xf32>
    %544 = arith.addf %543, %542 : vector<8x32xf32>
    %545 = arith.divf %543, %544 : vector<8x32xf32>
    %546 = arith.mulf %537, %525 : vector<8x32xf32>
    %547 = arith.mulf %531, %539 : vector<8x32xf32>
    %548 = arith.addf %546, %547 : vector<8x32xf32>
    %549 = math.tanh %548 : vector<8x32xf32>
    %550 = arith.mulf %545, %549 : vector<8x32xf32>
    %c0_250 = arith.constant 0 : index
    %c0_251 = arith.constant 0 : index
    %551 = vector.load %arg7[%c0_250, %c0_251] : memref<8x32xf32, #tpu.memory_space<vmem>>, vector<8x32xf32>
    %552 = vector.extract_strided_slice %524 {offsets = [0, 0], sizes = [8, 32], strides = [1, 1]} : vector<8x128xf32> to vector<8x32xf32>
    %553 = arith.negf %552 : vector<8x32xf32>
    %554 = math.exp %553 : vector<8x32xf32>
    %cst_252 = arith.constant 1.000000e+00 : f32
    %555 = vector.broadcast %cst_252 : f32 to vector<8x32xf32>
    %556 = arith.addf %555, %554 : vector<8x32xf32>
    %557 = arith.divf %555, %556 : vector<8x32xf32>
    %558 = vector.extract_strided_slice %524 {offsets = [0, 32], sizes = [8, 32], strides = [1, 1]} : vector<8x128xf32> to vector<8x32xf32>
    %559 = arith.negf %558 : vector<8x32xf32>
    %560 = math.exp %559 : vector<8x32xf32>
    %cst_253 = arith.constant 1.000000e+00 : f32
    %561 = vector.broadcast %cst_253 : f32 to vector<8x32xf32>
    %562 = arith.addf %561, %560 : vector<8x32xf32>
    %563 = arith.divf %561, %562 : vector<8x32xf32>
    %564 = vector.extract_strided_slice %524 {offsets = [0, 64], sizes = [8, 32], strides = [1, 1]} : vector<8x128xf32> to vector<8x32xf32>
    %565 = math.tanh %564 : vector<8x32xf32>
    %566 = vector.extract_strided_slice %524 {offsets = [0, 96], sizes = [8, 32], strides = [1, 1]} : vector<8x128xf32> to vector<8x32xf32>
    %567 = arith.negf %566 : vector<8x32xf32>
    %568 = math.exp %567 : vector<8x32xf32>
    %cst_254 = arith.constant 1.000000e+00 : f32
    %569 = vector.broadcast %cst_254 : f32 to vector<8x32xf32>
    %570 = arith.addf %569, %568 : vector<8x32xf32>
    %571 = arith.divf %569, %570 : vector<8x32xf32>
    %572 = arith.mulf %563, %551 : vector<8x32xf32>
    %573 = arith.mulf %557, %565 : vector<8x32xf32>
    %574 = arith.addf %572, %573 : vector<8x32xf32>
    %575 = math.tanh %574 : vector<8x32xf32>
    %576 = arith.mulf %571, %575 : vector<8x32xf32>
    %c0_255 = arith.constant 0 : index
    %c0_256 = arith.constant 0 : index
    %577 = vector.load %arg4[%c0_255, %c0_256] : memref<8x32xf32, #tpu.memory_space<vmem>>, vector<8x32xf32>
    tpu.vector_store %arg4[%c0_255, %c0_256], %550 {strides = array<i32>} : memref<8x32xf32, #tpu.memory_space<vmem>>, vector<8x32xf32>,
    %c0_257 = arith.constant 0 : index
    %c0_258 = arith.constant 0 : index
    %578 = vector.load %arg5[%c0_257, %c0_258] : memref<8x32xf32, #tpu.memory_space<vmem>>, vector<8x32xf32>
    tpu.vector_store %arg5[%c0_257, %c0_258], %548 {strides = array<i32>} : memref<8x32xf32, #tpu.memory_space<vmem>>, vector<8x32xf32>,
    %c0_259 = arith.constant 0 : index
    %c0_260 = arith.constant 0 : index
    %579 = vector.load %arg6[%c0_259, %c0_260] : memref<8x32xf32, #tpu.memory_space<vmem>>, vector<8x32xf32>
    tpu.vector_store %arg6[%c0_259, %c0_260], %576 {strides = array<i32>} : memref<8x32xf32, #tpu.memory_space<vmem>>, vector<8x32xf32>,
    %c0_261 = arith.constant 0 : index
    %c0_262 = arith.constant 0 : index
    %580 = vector.load %arg7[%c0_261, %c0_262] : memref<8x32xf32, #tpu.memory_space<vmem>>, vector<8x32xf32>
    tpu.vector_store %arg7[%c0_261, %c0_262], %574 {strides = array<i32>} : memref<8x32xf32, #tpu.memory_space<vmem>>, vector<8x32xf32>,
    %581 = arith.index_cast %c6_i32 : i32 to index
    %c0_263 = arith.constant 0 : index
    %c0_264 = arith.constant 0 : index
    %582 = vector.load %arg3[%581, %c0_263, %c0_264] : memref<8x8x64xf32, #tpu.memory_space<vmem>>, vector<1x8x32xf32>
    %583 = vector.shape_cast %582 : vector<1x8x32xf32> to vector<8x32xf32>
    %584 = vector.shape_cast %550 : vector<8x32xf32> to vector<1x8x32xf32>
    tpu.vector_store %arg3[%581, %c0_263, %c0_264], %584 {strides = array<i32>} : memref<8x8x64xf32, #tpu.memory_space<vmem>>, vector<1x8x32xf32>,
    %585 = arith.index_cast %506 : i32 to index
    %c0_265 = arith.constant 0 : index
    %c32_266 = arith.constant 32 : index
    %586 = vector.load %arg3[%585, %c0_265, %c32_266] : memref<8x8x64xf32, #tpu.memory_space<vmem>>, vector<1x8x32xf32>
    %587 = vector.shape_cast %586 : vector<1x8x32xf32> to vector<8x32xf32>
    %588 = vector.shape_cast %576 : vector<8x32xf32> to vector<1x8x32xf32>
    tpu.vector_store %arg3[%585, %c0_265, %c32_266], %588 {strides = array<i32>} : memref<8x8x64xf32, #tpu.memory_space<vmem>>, vector<1x8x32xf32>,
    %c7_i32_267 = arith.constant 7 : i32
    %c7_i32_268 = arith.constant 7 : i32
    %589 = arith.subi %c7_i32_268, %c7_i32_267 : i32
    %590 = arith.index_cast %c7_i32_267 : i32 to index
    %c0_269 = arith.constant 0 : index
    %c0_270 = arith.constant 0 : index
    %591 = vector.load %arg0[%590, %c0_269, %c0_270] : memref<8x8x256xf32, #tpu.memory_space<vmem>>, vector<1x8x256xf32>
    %592 = vector.shape_cast %591 : vector<1x8x256xf32> to vector<8x256xf32>
    %593 = arith.index_cast %589 : i32 to index
    %c0_271 = arith.constant 0 : index
    %c0_272 = arith.constant 0 : index
    %594 = vector.load %arg0[%593, %c0_271, %c0_272] : memref<8x8x256xf32, #tpu.memory_space<vmem>>, vector<1x8x256xf32>
    %595 = vector.shape_cast %594 : vector<1x8x256xf32> to vector<8x256xf32>
    %596 = vector.extract_strided_slice %592 {offsets = [0, 0], sizes = [8, 128], strides = [1, 1]} : vector<8x256xf32> to vector<8x128xf32>
    %c0_273 = arith.constant 0 : index
    %c0_274 = arith.constant 0 : index
    %597 = vector.load %arg4[%c0_273, %c0_274] : memref<8x32xf32, #tpu.memory_space<vmem>>, vector<8x32xf32>
    %598 = arith.truncf %597 : vector<8x32xf32> to vector<8x32xbf16>
    %c0_275 = arith.constant 0 : index
    %c0_276 = arith.constant 0 : index
    %599 = vector.load %arg1[%c0_275, %c0_276] : memref<32x128xbf16, #tpu.memory_space<vmem>>, vector<32x128xbf16>
    %cst_277 = arith.constant dense<0.000000e+00> : vector<8x128xf32>
    %600 = tpu.matmul %598, %599, %cst_277 {dimension_numbers = #tpu.dot_dimension_numbers<[1], [0], [0], [1], [0, 0, 1, 1], [], []>} : vector<8x32xbf16>, vector<32x128xbf16>, vector<8x128xf32> -> vector<8x128xf32>
    %601 = arith.addf %596, %600 : vector<8x128xf32>
    %602 = vector.extract_strided_slice %595 {offsets = [0, 128], sizes = [8, 128], strides = [1, 1]} : vector<8x256xf32> to vector<8x128xf32>
    %c0_278 = arith.constant 0 : index
    %c0_279 = arith.constant 0 : index
    %603 = vector.load %arg6[%c0_278, %c0_279] : memref<8x32xf32, #tpu.memory_space<vmem>>, vector<8x32xf32>
    %604 = arith.truncf %603 : vector<8x32xf32> to vector<8x32xbf16>
    %c0_280 = arith.constant 0 : index
    %c0_281 = arith.constant 0 : index
    %605 = vector.load %arg2[%c0_280, %c0_281] : memref<32x128xbf16, #tpu.memory_space<vmem>>, vector<32x128xbf16>
    %cst_282 = arith.constant dense<0.000000e+00> : vector<8x128xf32>
    %606 = tpu.matmul %604, %605, %cst_282 {dimension_numbers = #tpu.dot_dimension_numbers<[1], [0], [0], [1], [0, 0, 1, 1], [], []>} : vector<8x32xbf16>, vector<32x128xbf16>, vector<8x128xf32> -> vector<8x128xf32>
    %607 = arith.addf %602, %606 : vector<8x128xf32>
    %c0_283 = arith.constant 0 : index
    %c0_284 = arith.constant 0 : index
    %608 = vector.load %arg5[%c0_283, %c0_284] : memref<8x32xf32, #tpu.memory_space<vmem>>, vector<8x32xf32>
    %609 = vector.extract_strided_slice %601 {offsets = [0, 0], sizes = [8, 32], strides = [1, 1]} : vector<8x128xf32> to vector<8x32xf32>
    %610 = arith.negf %609 : vector<8x32xf32>
    %611 = math.exp %610 : vector<8x32xf32>
    %cst_285 = arith.constant 1.000000e+00 : f32
    %612 = vector.broadcast %cst_285 : f32 to vector<8x32xf32>
    %613 = arith.addf %612, %611 : vector<8x32xf32>
    %614 = arith.divf %612, %613 : vector<8x32xf32>
    %615 = vector.extract_strided_slice %601 {offsets = [0, 32], sizes = [8, 32], strides = [1, 1]} : vector<8x128xf32> to vector<8x32xf32>
    %616 = arith.negf %615 : vector<8x32xf32>
    %617 = math.exp %616 : vector<8x32xf32>
    %cst_286 = arith.constant 1.000000e+00 : f32
    %618 = vector.broadcast %cst_286 : f32 to vector<8x32xf32>
    %619 = arith.addf %618, %617 : vector<8x32xf32>
    %620 = arith.divf %618, %619 : vector<8x32xf32>
    %621 = vector.extract_strided_slice %601 {offsets = [0, 64], sizes = [8, 32], strides = [1, 1]} : vector<8x128xf32> to vector<8x32xf32>
    %622 = math.tanh %621 : vector<8x32xf32>
    %623 = vector.extract_strided_slice %601 {offsets = [0, 96], sizes = [8, 32], strides = [1, 1]} : vector<8x128xf32> to vector<8x32xf32>
    %624 = arith.negf %623 : vector<8x32xf32>
    %625 = math.exp %624 : vector<8x32xf32>
    %cst_287 = arith.constant 1.000000e+00 : f32
    %626 = vector.broadcast %cst_287 : f32 to vector<8x32xf32>
    %627 = arith.addf %626, %625 : vector<8x32xf32>
    %628 = arith.divf %626, %627 : vector<8x32xf32>
    %629 = arith.mulf %620, %608 : vector<8x32xf32>
    %630 = arith.mulf %614, %622 : vector<8x32xf32>
    %631 = arith.addf %629, %630 : vector<8x32xf32>
    %632 = math.tanh %631 : vector<8x32xf32>
    %633 = arith.mulf %628, %632 : vector<8x32xf32>
    %c0_288 = arith.constant 0 : index
    %c0_289 = arith.constant 0 : index
    %634 = vector.load %arg7[%c0_288, %c0_289] : memref<8x32xf32, #tpu.memory_space<vmem>>, vector<8x32xf32>
    %635 = vector.extract_strided_slice %607 {offsets = [0, 0], sizes = [8, 32], strides = [1, 1]} : vector<8x128xf32> to vector<8x32xf32>
    %636 = arith.negf %635 : vector<8x32xf32>
    %637 = math.exp %636 : vector<8x32xf32>
    %cst_290 = arith.constant 1.000000e+00 : f32
    %638 = vector.broadcast %cst_290 : f32 to vector<8x32xf32>
    %639 = arith.addf %638, %637 : vector<8x32xf32>
    %640 = arith.divf %638, %639 : vector<8x32xf32>
    %641 = vector.extract_strided_slice %607 {offsets = [0, 32], sizes = [8, 32], strides = [1, 1]} : vector<8x128xf32> to vector<8x32xf32>
    %642 = arith.negf %641 : vector<8x32xf32>
    %643 = math.exp %642 : vector<8x32xf32>
    %cst_291 = arith.constant 1.000000e+00 : f32
    %644 = vector.broadcast %cst_291 : f32 to vector<8x32xf32>
    %645 = arith.addf %644, %643 : vector<8x32xf32>
    %646 = arith.divf %644, %645 : vector<8x32xf32>
    %647 = vector.extract_strided_slice %607 {offsets = [0, 64], sizes = [8, 32], strides = [1, 1]} : vector<8x128xf32> to vector<8x32xf32>
    %648 = math.tanh %647 : vector<8x32xf32>
    %649 = vector.extract_strided_slice %607 {offsets = [0, 96], sizes = [8, 32], strides = [1, 1]} : vector<8x128xf32> to vector<8x32xf32>
    %650 = arith.negf %649 : vector<8x32xf32>
    %651 = math.exp %650 : vector<8x32xf32>
    %cst_292 = arith.constant 1.000000e+00 : f32
    %652 = vector.broadcast %cst_292 : f32 to vector<8x32xf32>
    %653 = arith.addf %652, %651 : vector<8x32xf32>
    %654 = arith.divf %652, %653 : vector<8x32xf32>
    %655 = arith.mulf %646, %634 : vector<8x32xf32>
    %656 = arith.mulf %640, %648 : vector<8x32xf32>
    %657 = arith.addf %655, %656 : vector<8x32xf32>
    %658 = math.tanh %657 : vector<8x32xf32>
    %659 = arith.mulf %654, %658 : vector<8x32xf32>
    %c0_293 = arith.constant 0 : index
    %c0_294 = arith.constant 0 : index
    %660 = vector.load %arg4[%c0_293, %c0_294] : memref<8x32xf32, #tpu.memory_space<vmem>>, vector<8x32xf32>
    tpu.vector_store %arg4[%c0_293, %c0_294], %633 {strides = array<i32>} : memref<8x32xf32, #tpu.memory_space<vmem>>, vector<8x32xf32>,
    %c0_295 = arith.constant 0 : index
    %c0_296 = arith.constant 0 : index
    %661 = vector.load %arg5[%c0_295, %c0_296] : memref<8x32xf32, #tpu.memory_space<vmem>>, vector<8x32xf32>
    tpu.vector_store %arg5[%c0_295, %c0_296], %631 {strides = array<i32>} : memref<8x32xf32, #tpu.memory_space<vmem>>, vector<8x32xf32>,
    %c0_297 = arith.constant 0 : index
    %c0_298 = arith.constant 0 : index
    %662 = vector.load %arg6[%c0_297, %c0_298] : memref<8x32xf32, #tpu.memory_space<vmem>>, vector<8x32xf32>
    tpu.vector_store %arg6[%c0_297, %c0_298], %659 {strides = array<i32>} : memref<8x32xf32, #tpu.memory_space<vmem>>, vector<8x32xf32>,
    %c0_299 = arith.constant 0 : index
    %c0_300 = arith.constant 0 : index
    %663 = vector.load %arg7[%c0_299, %c0_300] : memref<8x32xf32, #tpu.memory_space<vmem>>, vector<8x32xf32>
    tpu.vector_store %arg7[%c0_299, %c0_300], %657 {strides = array<i32>} : memref<8x32xf32, #tpu.memory_space<vmem>>, vector<8x32xf32>,
    %664 = arith.index_cast %c7_i32_267 : i32 to index
    %c0_301 = arith.constant 0 : index
    %c0_302 = arith.constant 0 : index
    %665 = vector.load %arg3[%664, %c0_301, %c0_302] : memref<8x8x64xf32, #tpu.memory_space<vmem>>, vector<1x8x32xf32>
    %666 = vector.shape_cast %665 : vector<1x8x32xf32> to vector<8x32xf32>
    %667 = vector.shape_cast %633 : vector<8x32xf32> to vector<1x8x32xf32>
    tpu.vector_store %arg3[%664, %c0_301, %c0_302], %667 {strides = array<i32>} : memref<8x8x64xf32, #tpu.memory_space<vmem>>, vector<1x8x32xf32>,
    %668 = arith.index_cast %589 : i32 to index
    %c0_303 = arith.constant 0 : index
    %c32_304 = arith.constant 32 : index
    %669 = vector.load %arg3[%668, %c0_303, %c32_304] : memref<8x8x64xf32, #tpu.memory_space<vmem>>, vector<1x8x32xf32>
    %670 = vector.shape_cast %669 : vector<1x8x32xf32> to vector<8x32xf32>
    %671 = vector.shape_cast %659 : vector<8x32xf32> to vector<1x8x32xf32>
    tpu.vector_store %arg3[%668, %c0_303, %c32_304], %671 {strides = array<i32>} : memref<8x8x64xf32, #tpu.memory_space<vmem>>, vector<1x8x32xf32>,
    %c8_i32 = arith.constant 8 : i32
    return
  }
}

module attributes {stable_mosaic.version = 11 : i64} {
  func.func @_linear_kernel(%arg0: i32, %arg1: memref<16x64xf32, #tpu.memory_space<vmem>>, %arg2: memref<64x72xbf16, #tpu.memory_space<vmem>>, %arg3: memref<1x72xf32, #tpu.memory_space<vmem>>, %arg4: memref<16x72xf32, #tpu.memory_space<vmem>>) attributes {dimension_semantics = [#tpu.dimension_semantics<parallel>], iteration_bounds = array<i64: 1>, scalar_prefetch = 0 : i64, scratch_operands = 0 : i64, tpu.core_type = #tpu.core_type<tc>, window_params = [{transform_indices = @transform_0, window_bounds = array<i64: 16, 64>}, {pipeline_mode = #tpu.pipeline_mode<synchronous>, transform_indices = @transform_1, window_bounds = array<i64: 64, 72>}, {pipeline_mode = #tpu.pipeline_mode<synchronous>, transform_indices = @transform_2, window_bounds = array<i64: 1, 72>}, {transform_indices = @transform_3, window_bounds = array<i64: 16, 72>}]} {
    %c0 = arith.constant 0 : index
    %c0_0 = arith.constant 0 : index
    %0 = vector.load %arg1[%c0, %c0_0] : memref<16x64xf32, #tpu.memory_space<vmem>>, vector<16x64xf32>
    %1 = arith.truncf %0 : vector<16x64xf32> to vector<16x64xbf16>
    %c0_1 = arith.constant 0 : index
    %c0_2 = arith.constant 0 : index
    %2 = vector.load %arg2[%c0_1, %c0_2] : memref<64x72xbf16, #tpu.memory_space<vmem>>, vector<64x72xbf16>
    %cst = arith.constant dense<0.000000e+00> : vector<16x72xf32>
    %3 = tpu.matmul %1, %2, %cst {dimension_numbers = #tpu.dot_dimension_numbers<[1], [0], [0], [1], [0, 0, 1, 1], [], []>} : vector<16x64xbf16>, vector<64x72xbf16>, vector<16x72xf32> -> vector<16x72xf32>
    %c0_3 = arith.constant 0 : index
    %c0_4 = arith.constant 0 : index
    %4 = vector.load %arg3[%c0_3, %c0_4] : memref<1x72xf32, #tpu.memory_space<vmem>>, vector<1x72xf32>
    %5 = vector.broadcast %4 : vector<1x72xf32> to vector<16x72xf32>
    %6 = arith.addf %3, %5 : vector<16x72xf32>
    %c0_5 = arith.constant 0 : index
    %c0_6 = arith.constant 0 : index
    %7 = vector.load %arg4[%c0_5, %c0_6] : memref<16x72xf32, #tpu.memory_space<vmem>>, vector<16x72xf32>
    tpu.vector_store %arg4[%c0_5, %c0_6], %6 {strides = array<i32>} : memref<16x72xf32, #tpu.memory_space<vmem>>, vector<16x72xf32>,
    return
  }
  func.func @transform_0(%arg0: i32) -> (i32, i32) {
    %c0_i32 = arith.constant 0 : i32
    %c0_i32_0 = arith.constant 0 : i32
    return %arg0, %c0_i32 : i32, i32
  }
  func.func @transform_1(%arg0: i32) -> (i32, i32) {
    %c0_i32 = arith.constant 0 : i32
    %c0_i32_0 = arith.constant 0 : i32
    %c0_i32_1 = arith.constant 0 : i32
    return %c0_i32, %c0_i32_0 : i32, i32
  }
  func.func @transform_2(%arg0: i32) -> (i32, i32) {
    %c0_i32 = arith.constant 0 : i32
    %c0_i32_0 = arith.constant 0 : i32
    %c0_i32_1 = arith.constant 0 : i32
    return %c0_i32, %c0_i32_0 : i32, i32
  }
  func.func @transform_3(%arg0: i32) -> (i32, i32) {
    %c0_i32 = arith.constant 0 : i32
    %c0_i32_0 = arith.constant 0 : i32
    return %arg0, %c0_i32 : i32, i32
  }
}

module attributes {stable_mosaic.version = 11 : i64} {
  func.func @_linear_kernel(%arg0: i32, %arg1: memref<16x198xf32, #tpu.memory_space<vmem>>, %arg2: memref<198x32xbf16, #tpu.memory_space<vmem>>, %arg3: memref<1x32xf32, #tpu.memory_space<vmem>>, %arg4: memref<16x32xf32, #tpu.memory_space<vmem>>) attributes {dimension_semantics = [#tpu.dimension_semantics<parallel>], iteration_bounds = array<i64: 1>, scalar_prefetch = 0 : i64, scratch_operands = 0 : i64, tpu.core_type = #tpu.core_type<tc>, window_params = [{transform_indices = @transform_0, window_bounds = array<i64: 16, 198>}, {pipeline_mode = #tpu.pipeline_mode<synchronous>, transform_indices = @transform_1, window_bounds = array<i64: 198, 32>}, {pipeline_mode = #tpu.pipeline_mode<synchronous>, transform_indices = @transform_2, window_bounds = array<i64: 1, 32>}, {transform_indices = @transform_3, window_bounds = array<i64: 16, 32>}]} {
    %c0 = arith.constant 0 : index
    %c0_0 = arith.constant 0 : index
    %0 = vector.load %arg1[%c0, %c0_0] : memref<16x198xf32, #tpu.memory_space<vmem>>, vector<16x198xf32>
    %1 = arith.truncf %0 : vector<16x198xf32> to vector<16x198xbf16>
    %c0_1 = arith.constant 0 : index
    %c0_2 = arith.constant 0 : index
    %2 = vector.load %arg2[%c0_1, %c0_2] : memref<198x32xbf16, #tpu.memory_space<vmem>>, vector<198x32xbf16>
    %cst = arith.constant dense<0.000000e+00> : vector<16x32xf32>
    %3 = tpu.matmul %1, %2, %cst {dimension_numbers = #tpu.dot_dimension_numbers<[1], [0], [0], [1], [0, 0, 1, 1], [], []>} : vector<16x198xbf16>, vector<198x32xbf16>, vector<16x32xf32> -> vector<16x32xf32>
    %c0_3 = arith.constant 0 : index
    %c0_4 = arith.constant 0 : index
    %4 = vector.load %arg3[%c0_3, %c0_4] : memref<1x32xf32, #tpu.memory_space<vmem>>, vector<1x32xf32>
    %5 = vector.broadcast %4 : vector<1x32xf32> to vector<16x32xf32>
    %6 = arith.addf %3, %5 : vector<16x32xf32>
    %cst_5 = arith.constant 0.000000e+00 : f32
    %7 = vector.broadcast %cst_5 : f32 to vector<16x32xf32>
    %8 = arith.maximumf %6, %7 : vector<16x32xf32>
    %c0_6 = arith.constant 0 : index
    %c0_7 = arith.constant 0 : index
    %9 = vector.load %arg4[%c0_6, %c0_7] : memref<16x32xf32, #tpu.memory_space<vmem>>, vector<16x32xf32>
    tpu.vector_store %arg4[%c0_6, %c0_7], %8 {strides = array<i32>} : memref<16x32xf32, #tpu.memory_space<vmem>>, vector<16x32xf32>,
    return
  }
  func.func @transform_0(%arg0: i32) -> (i32, i32) {
    %c0_i32 = arith.constant 0 : i32
    %c0_i32_0 = arith.constant 0 : i32
    return %arg0, %c0_i32 : i32, i32
  }
  func.func @transform_1(%arg0: i32) -> (i32, i32) {
    %c0_i32 = arith.constant 0 : i32
    %c0_i32_0 = arith.constant 0 : i32
    %c0_i32_1 = arith.constant 0 : i32
    return %c0_i32, %c0_i32_0 : i32, i32
  }
  func.func @transform_2(%arg0: i32) -> (i32, i32) {
    %c0_i32 = arith.constant 0 : i32
    %c0_i32_0 = arith.constant 0 : i32
    %c0_i32_1 = arith.constant 0 : i32
    return %c0_i32, %c0_i32_0 : i32, i32
  }
  func.func @transform_3(%arg0: i32) -> (i32, i32) {
    %c0_i32 = arith.constant 0 : i32
    %c0_i32_0 = arith.constant 0 : i32
    return %arg0, %c0_i32 : i32, i32
  }
}

module attributes {stable_mosaic.version = 11 : i64} {
  func.func @_linear_kernel(%arg0: i32, %arg1: memref<16x64xf32, #tpu.memory_space<vmem>>, %arg2: memref<64x144xbf16, #tpu.memory_space<vmem>>, %arg3: memref<1x144xf32, #tpu.memory_space<vmem>>, %arg4: memref<16x144xf32, #tpu.memory_space<vmem>>) attributes {dimension_semantics = [#tpu.dimension_semantics<parallel>], iteration_bounds = array<i64: 1>, scalar_prefetch = 0 : i64, scratch_operands = 0 : i64, tpu.core_type = #tpu.core_type<tc>, window_params = [{transform_indices = @transform_0, window_bounds = array<i64: 16, 64>}, {pipeline_mode = #tpu.pipeline_mode<synchronous>, transform_indices = @transform_1, window_bounds = array<i64: 64, 144>}, {pipeline_mode = #tpu.pipeline_mode<synchronous>, transform_indices = @transform_2, window_bounds = array<i64: 1, 144>}, {transform_indices = @transform_3, window_bounds = array<i64: 16, 144>}]} {
    %c0 = arith.constant 0 : index
    %c0_0 = arith.constant 0 : index
    %0 = vector.load %arg1[%c0, %c0_0] : memref<16x64xf32, #tpu.memory_space<vmem>>, vector<16x64xf32>
    %1 = arith.truncf %0 : vector<16x64xf32> to vector<16x64xbf16>
    %c0_1 = arith.constant 0 : index
    %c0_2 = arith.constant 0 : index
    %2 = vector.load %arg2[%c0_1, %c0_2] : memref<64x144xbf16, #tpu.memory_space<vmem>>, vector<64x144xbf16>
    %cst = arith.constant dense<0.000000e+00> : vector<16x144xf32>
    %3 = tpu.matmul %1, %2, %cst {dimension_numbers = #tpu.dot_dimension_numbers<[1], [0], [0], [1], [0, 0, 1, 1], [], []>} : vector<16x64xbf16>, vector<64x144xbf16>, vector<16x144xf32> -> vector<16x144xf32>
    %c0_3 = arith.constant 0 : index
    %c0_4 = arith.constant 0 : index
    %4 = vector.load %arg3[%c0_3, %c0_4] : memref<1x144xf32, #tpu.memory_space<vmem>>, vector<1x144xf32>
    %5 = vector.broadcast %4 : vector<1x144xf32> to vector<16x144xf32>
    %6 = arith.addf %3, %5 : vector<16x144xf32>
    %c0_5 = arith.constant 0 : index
    %c0_6 = arith.constant 0 : index
    %7 = vector.load %arg4[%c0_5, %c0_6] : memref<16x144xf32, #tpu.memory_space<vmem>>, vector<16x144xf32>
    tpu.vector_store %arg4[%c0_5, %c0_6], %6 {strides = array<i32>} : memref<16x144xf32, #tpu.memory_space<vmem>>, vector<16x144xf32>,
    return
  }
  func.func @transform_0(%arg0: i32) -> (i32, i32) {
    %c0_i32 = arith.constant 0 : i32
    %c0_i32_0 = arith.constant 0 : i32
    return %arg0, %c0_i32 : i32, i32
  }
  func.func @transform_1(%arg0: i32) -> (i32, i32) {
    %c0_i32 = arith.constant 0 : i32
    %c0_i32_0 = arith.constant 0 : i32
    %c0_i32_1 = arith.constant 0 : i32
    return %c0_i32, %c0_i32_0 : i32, i32
  }
  func.func @transform_2(%arg0: i32) -> (i32, i32) {
    %c0_i32 = arith.constant 0 : i32
    %c0_i32_0 = arith.constant 0 : i32
    %c0_i32_1 = arith.constant 0 : i32
    return %c0_i32, %c0_i32_0 : i32, i32
  }
  func.func @transform_3(%arg0: i32) -> (i32, i32) {
    %c0_i32 = arith.constant 0 : i32
    %c0_i32_0 = arith.constant 0 : i32
    return %arg0, %c0_i32 : i32, i32
  }
}

</mosaic_0001>

<llo_original>
// kernel: lipnet_multi_imu_forward.13
$region0: #{lipnet_multi_imu_forward.13}
  #allocation0 [shape = 'u32[]', space=smem, size = 0x4, offset = 0x4, fixed_abs, tag = 'smem constant byte address 0x4 - core index']
  #allocation1 [shape = 'u32[144,128]{1,0:T(1,128)}', space=vmem, size = 0x12000, scoped, tag = 'internal scratch']
  %s0 = inlined_call_operand.vmem [shape: f32[16,32], index: 0, kind: input, shape index: {}]
  %s1 = inlined_call_operand.vmem [shape: bf16[32,256], index: 1, kind: input, shape index: {}]
  %s2 = inlined_call_operand.vmem [shape: f32[1,256], index: 2, kind: input, shape index: {}]
  %s3 = inlined_call_operand.vmem [shape: f32[16,256], index: 3, kind: output, shape index: {}]
  %s4 = sld [smem:[#allocation0]]
  $region22: #{lipnet_multi_imu_forward.13} parent=0
    _
  %s6 = ssub.s32 1, %s4
  %s7 = scalar_select 0, %s6, %s4
  // Predicated region
  $region2: #{lipnet_multi_imu_forward.13} parent=0 // pred_check
    _
  $region3: #{lipnet_multi_imu_forward.13} parent=0 // pred_check_branch
    %9 = sbr.rel (0) target = $region5
  $region4: #{lipnet_multi_imu_forward.13} parent=0 // pred_region
    _
  $region5: #{lipnet_multi_imu_forward.13} parent=0 // pred_fallthru
    _
  // Predicated region
  $region6: #{lipnet_multi_imu_forward.13} parent=0 // pred_check
    _
  $region7: #{lipnet_multi_imu_forward.13} parent=0 // pred_check_branch
    %11 = sbr.rel (0) target = $region9
  $region8: #{lipnet_multi_imu_forward.13} parent=0 // pred_region
    _
  $region9: #{lipnet_multi_imu_forward.13} parent=0 // pred_fallthru
    _
  // Predicated region
  $region10: #{lipnet_multi_imu_forward.13} parent=0 // pred_check
    _
  $region11: #{lipnet_multi_imu_forward.13} parent=0 // pred_check_branch
    %13 = sbr.rel (0) target = $region13
  $region12: #{lipnet_multi_imu_forward.13} parent=0 // pred_region
    _
  $region13: #{lipnet_multi_imu_forward.13} parent=0 // pred_fallthru
    _
  %v15 = vld [vmem:[%s0] sm:$0xff]
  %v16 = vld [vmem:[%s0 + $0x8] sm:$0xff]
  %v17 = vpack.c.bf16 %v16, %v15
  %v18 = vld [vmem:[%s1] sm:$0xff]
  %v19 = vld [vmem:[%s1 + $0x8] sm:$0xff]
  %v20 = vld [vmem:[%s1 + $0x10] sm:$0xff]
  %v21 = vld [vmem:[%s1 + $0x18] sm:$0xff]
  %v22 = vld [vmem:[%s2] sm:$0x3]
  %v24 = vlaneseq
  %v25 = vshrl.u32 %v24, 7
  %v26 = vsub.s32 0, %v25
  %v27 = vrot.slane %v22, %v26
  %v28 = vlaneseq
  %v29 = vshrl.u32 %v28, 7
  %v30 = vsub.s32 1, %v29
  %v31 = vrot.slane %v22, %v30
  %v38 = vunpack.c.l.b16 %v18
  %v39 = vunpack.c.h.b16 %v18
  %v40 = vunpack.c.l.b16 %v19
  %v41 = vunpack.c.h.b16 %v19
  %v42 = vunpack.c.l.b16 %v20
  %v43 = vunpack.c.h.b16 %v20
  %v44 = vunpack.c.l.b16 %v21
  %v45 = vunpack.c.h.b16 %v21
  %v46 = vpack.c.b16 %v40, %v38
  %v47 = vpack.c.b16 %v41, %v39
  %v48 = vpack.c.b16 %v44, %v42
  %v49 = vpack.c.b16 %v45, %v43
  %vm54 = vcmask 261120
  %v56 = vsel %vm54, %v17, 0
  %58 = vmatprep.subr.bf16.mxu0 %v47
  %59 = vmatpush1.bf16.msra.mxu0 %v46
  %60 = vmatprep.subr.bf16.mxu0 %v49
  %61 = vmatpush1.bf16.msra.mxu0 %v48
  %62 = vmatprep.subr.bf16.mxu0 0
  %63 = vmatpush1.bf16.msra.mxu0 0
  %64 = vmatprep.subr.bf16.mxu0 0
  %65 = vmatpush1.bf16.msra.mxu0 0
  %66 = vmatprep.subr.bf16.mxu0 0
  %67 = vmatpush1.bf16.msra.mxu0 0
  %68 = vmatprep.subr.bf16.mxu0 0
  %69 = vmatpush1.bf16.msra.mxu0 0
  %70 = vmatprep.subr.bf16.mxu0 0
  %71 = vmatpush1.bf16.msra.mxu0 0
  %72 = vmatprep.subr.bf16.mxu0 0
  %73 = vmatpush1.bf16.msra.mxu0 0
  %74 = vmatprep.subr.bf16.mxu0 0
  %75 = vmatpush1.bf16.msra.mxu0 0
  %76 = vmatprep.subr.bf16.mxu0 0
  %77 = vmatpush1.bf16.msra.mxu0 0
  %78 = vmatprep.subr.bf16.mxu0 0
  %79 = vmatpush1.bf16.msra.mxu0 0
  %80 = vmatprep.subr.bf16.mxu0 0
  %81 = vmatpush1.bf16.msra.mxu0 0
  %82 = vmatprep.subr.bf16.mxu0 0
  %83 = vmatpush1.bf16.msra.mxu0 0
  %84 = vmatprep.subr.bf16.mxu0 0
  %85 = vmatpush1.bf16.msra.mxu0 0
  %86 = vmatprep.subr.bf16.mxu0 0
  %87 = vmatpush1.bf16.msra.mxu0 0
  %88 = vmatprep.subr.bf16.mxu0 0
  %89 = vmatpush1.bf16.msra.mxu0 0
  %90 = vmatprep.mubr.bf16.mxu0 0
  %91 = vmatmul.mubr.bf16.gmra.mrb[0].mxu0 %v56
  %v92 = vpop.f32.mrb[0].mxu0
  %v93 = vadd.f32 %v27, %v92
  %v94 = vpop.f32.mrb[0].mxu0
  %v95 = vadd.f32 %v31, %v94
  %v96 = vpop.f32.mrb[0].mxu0
  %v97 = vadd.f32 %v27, %v96
  %v98 = vpop.f32.mrb[0].mxu0
  %v99 = vadd.f32 %v31, %v98
  %100 = vdwg.mxu0
  %101 = vst [vmem:[%s3] sm:$0xff] %v93
  %102 = vst [vmem:[%s3 + $0x8] sm:$0xff] %v95
  %103 = vst [vmem:[%s3 + $0x10] sm:$0xff] %v97
  %104 = vst [vmem:[%s3 + $0x18] sm:$0xff] %v99
  // Predicated region
  $region14: #{lipnet_multi_imu_forward.13} parent=0 // pred_check
    _
  $region15: #{lipnet_multi_imu_forward.13} parent=0 // pred_check_branch
    %106 = sbr.rel (0) target = $region17
  $region16: #{lipnet_multi_imu_forward.13} parent=0 // pred_region
    _
  $region17: #{lipnet_multi_imu_forward.13} parent=0 // pred_fallthru
    _
  // Predicated region
  $region18: #{lipnet_multi_imu_forward.13} parent=0 // pred_check
    _
  $region19: #{lipnet_multi_imu_forward.13} parent=0 // pred_check_branch
    %108 = sbr.rel (0) target = $region21
  $region20: #{lipnet_multi_imu_forward.13} parent=0 // pred_region
    _
  $region21: #{lipnet_multi_imu_forward.13} parent=0 // pred_fallthru
    _

// kernel: lipnet_multi_imu_forward.12
$region0: #{lipnet_multi_imu_forward.12}
  #allocation0 [shape = 'u32[]', space=smem, size = 0x4, offset = 0x4, fixed_abs, tag = 'smem constant byte address 0x4 - core index']
  #allocation1 [shape = 'u32[144,128]{1,0:T(1,128)}', space=vmem, size = 0x12000, scoped, tag = 'internal scratch']
  %s0 = inlined_call_operand.vmem [shape: f32[16,126], index: 0, kind: input, shape index: {}]
  %s1 = inlined_call_operand.vmem [shape: bf16[126,32], index: 1, kind: input, shape index: {}]
  %s2 = inlined_call_operand.vmem [shape: f32[1,32], index: 2, kind: input, shape index: {}]
  %s3 = inlined_call_operand.vmem [shape: f32[16,32], index: 3, kind: output, shape index: {}]
  %s4 = sld [smem:[#allocation0]]
  $region22: #{lipnet_multi_imu_forward.12} parent=0
    _
  %s6 = ssub.s32 1, %s4
  %s7 = scalar_select 0, %s6, %s4
  // Predicated region
  $region2: #{lipnet_multi_imu_forward.12} parent=0 // pred_check
    _
  $region3: #{lipnet_multi_imu_forward.12} parent=0 // pred_check_branch
    %9 = sbr.rel (0) target = $region5
  $region4: #{lipnet_multi_imu_forward.12} parent=0 // pred_region
    _
  $region5: #{lipnet_multi_imu_forward.12} parent=0 // pred_fallthru
    _
  // Predicated region
  $region6: #{lipnet_multi_imu_forward.12} parent=0 // pred_check
    _
  $region7: #{lipnet_multi_imu_forward.12} parent=0 // pred_check_branch
    %11 = sbr.rel (0) target = $region9
  $region8: #{lipnet_multi_imu_forward.12} parent=0 // pred_region
    _
  $region9: #{lipnet_multi_imu_forward.12} parent=0 // pred_fallthru
    _
  // Predicated region
  $region10: #{lipnet_multi_imu_forward.12} parent=0 // pred_check
    _
  $region11: #{lipnet_multi_imu_forward.12} parent=0 // pred_check_branch
    %13 = sbr.rel (0) target = $region13
  $region12: #{lipnet_multi_imu_forward.12} parent=0 // pred_region
    _
  $region13: #{lipnet_multi_imu_forward.12} parent=0 // pred_fallthru
    _
  %v15 = vld [vmem:[%s0] sm:$0xff]
  %v16 = vld [vmem:[%s0 + $0x8] sm:$0xff]
  %v17 = vpack.c.bf16 %v16, %v15
  %v18 = vld [vmem:[%s1] sm:$0xf]
  %v19 = vld [vmem:[%s1 + $0x4] sm:$0xf]
  %v20 = vld [vmem:[%s1 + $0x8] sm:$0xf]
  %v21 = vld [vmem:[%s1 + $0xc] sm:$0xf]
  %v22 = vld [vmem:[%s1 + $0x10] sm:$0xf]
  %v23 = vld [vmem:[%s1 + $0x14] sm:$0xf]
  %v24 = vld [vmem:[%s1 + $0x18] sm:$0xf]
  %v25 = vld [vmem:[%s1 + $0x1c] sm:$0xf]
  %v26 = vld [vmem:[%s1 + $0x20] sm:$0xf]
  %v27 = vld [vmem:[%s1 + $0x24] sm:$0xf]
  %v28 = vld [vmem:[%s1 + $0x28] sm:$0xf]
  %v29 = vld [vmem:[%s1 + $0x2c] sm:$0xf]
  %v30 = vld [vmem:[%s1 + $0x30] sm:$0xf]
  %v31 = vld [vmem:[%s1 + $0x34] sm:$0xf]
  %v32 = vld [vmem:[%s1 + $0x38] sm:$0xf]
  %v33 = vld [vmem:[%s1 + $0x3c] sm:$0x7]
  %v34 = vld [vmem:[%s2] sm:$0x1]
  %v36 = vlaneseq
  %v37 = vshrl.u32 %v36, 7
  %v38 = vsub.s32 0, %v37
  %v39 = vrot.slane %v34, %v38
  %v57 = vunpack.c.l.b16 %v18
  %v58 = vunpack.c.l.b16 %v19
  %v59 = vunpack.c.l.b16 %v20
  %v60 = vunpack.c.l.b16 %v21
  %v61 = vunpack.c.l.b16 %v22
  %v62 = vunpack.c.l.b16 %v23
  %v63 = vunpack.c.l.b16 %v24
  %v64 = vunpack.c.l.b16 %v25
  %v65 = vunpack.c.l.b16 %v26
  %v66 = vunpack.c.l.b16 %v27
  %v67 = vunpack.c.l.b16 %v28
  %v68 = vunpack.c.l.b16 %v29
  %v69 = vunpack.c.l.b16 %v30
  %v70 = vunpack.c.l.b16 %v31
  %v71 = vunpack.c.l.b16 %v32
  %v72 = vunpack.c.l.b16 %v33
  %v73 = vpack.c.b16 %v58, %v57
  %v74 = vpack.c.b16 %v60, %v59
  %v75 = vpack.c.b16 %v62, %v61
  %v76 = vpack.c.b16 %v64, %v63
  %v77 = vpack.c.b16 %v66, %v65
  %v78 = vpack.c.b16 %v68, %v67
  %v79 = vpack.c.b16 %v70, %v69
  %v80 = vpack.c.b16 %v72, %v71
  %vm88 = vcmask 1031168
  %v90 = vsel %vm88, %v17, 0
  %vm92 = vcmask 1046528
  %v94 = vsel %vm92, %v80, 0
  %96 = vmatprep.subr.bf16.mxu0 0
  %97 = vmatpush1.bf16.msra.mxu0 %v73
  %98 = vmatprep.subr.bf16.mxu0 0
  %99 = vmatpush1.bf16.msra.mxu0 %v74
  %100 = vmatprep.subr.bf16.mxu0 0
  %101 = vmatpush1.bf16.msra.mxu0 %v75
  %102 = vmatprep.subr.bf16.mxu0 0
  %103 = vmatpush1.bf16.msra.mxu0 %v76
  %104 = vmatprep.subr.bf16.mxu0 0
  %105 = vmatpush1.bf16.msra.mxu0 %v77
  %106 = vmatprep.subr.bf16.mxu0 0
  %107 = vmatpush1.bf16.msra.mxu0 %v78
  %108 = vmatprep.subr.bf16.mxu0 0
  %109 = vmatpush1.bf16.msra.mxu0 %v79
  %110 = vmatprep.subr.bf16.mxu0 0
  %111 = vmatpush1.bf16.msra.mxu0 %v94
  %112 = vmatprep.subr.bf16.mxu0 0
  %113 = vmatpush1.bf16.msra.mxu0 0
  %114 = vmatprep.subr.bf16.mxu0 0
  %115 = vmatpush1.bf16.msra.mxu0 0
  %116 = vmatprep.subr.bf16.mxu0 0
  %117 = vmatpush1.bf16.msra.mxu0 0
  %118 = vmatprep.subr.bf16.mxu0 0
  %119 = vmatpush1.bf16.msra.mxu0 0
  %120 = vmatprep.subr.bf16.mxu0 0
  %121 = vmatpush1.bf16.msra.mxu0 0
  %122 = vmatprep.subr.bf16.mxu0 0
  %123 = vmatpush1.bf16.msra.mxu0 0
  %124 = vmatprep.subr.bf16.mxu0 0
  %125 = vmatpush1.bf16.msra.mxu0 0
  %126 = vmatprep.subr.bf16.mxu0 0
  %127 = vmatpush1.bf16.msra.mxu0 0
  %128 = vmatprep.mubr.bf16.mxu0 0
  %129 = vmatmul.mubr.bf16.gmra.mrb[0].mxu0 %v90
  %v130 = vpop.f32.mrb[0].mxu0
  %v131 = vadd.f32 %v39, %v130
  %v132 = vpop.f32.mrb[0].mxu0
  %v133 = vpop.f32.mrb[0].mxu0
  %v134 = vadd.f32 %v39, %v133
  %v135 = vpop.f32.mrb[0].mxu0
  %136 = vdwg.mxu0
  %v137 = vmax.f32 %v131, 0.0
  %v138 = vmax.f32 %v134, 0.0
  %vm139 = vcmask 261120
  %140 = vst.msk [vmem:[%s3] sm:$0xff] %vm139, %v137
  %141 = vst.msk [vmem:[%s3 + $0x8] sm:$0xff] %vm139, %v138
  // Predicated region
  $region14: #{lipnet_multi_imu_forward.12} parent=0 // pred_check
    _
  $region15: #{lipnet_multi_imu_forward.12} parent=0 // pred_check_branch
    %143 = sbr.rel (0) target = $region17
  $region16: #{lipnet_multi_imu_forward.12} parent=0 // pred_region
    _
  $region17: #{lipnet_multi_imu_forward.12} parent=0 // pred_fallthru
    _
  // Predicated region
  $region18: #{lipnet_multi_imu_forward.12} parent=0 // pred_check
    _
  $region19: #{lipnet_multi_imu_forward.12} parent=0 // pred_check_branch
    %145 = sbr.rel (0) target = $region21
  $region20: #{lipnet_multi_imu_forward.12} parent=0 // pred_region
    _
  $region21: #{lipnet_multi_imu_forward.12} parent=0 // pred_fallthru
    _

// kernel: lipnet_multi_imu_forward.15
$region0: #{lipnet_multi_imu_forward.15}
  #allocation0 [shape = 'u32[]', space=smem, size = 0x4, offset = 0x4, fixed_abs, tag = 'smem constant byte address 0x4 - core index']
  #allocation1 [shape = 'u32[144,128]{1,0:T(1,128)}', space=vmem, size = 0x12000, scoped, tag = 'internal scratch']
  %s0 = inlined_call_operand.vmem [shape: f32[16,64], index: 0, kind: input, shape index: {}]
  %s1 = inlined_call_operand.vmem [shape: bf16[64,256], index: 1, kind: input, shape index: {}]
  %s2 = inlined_call_operand.vmem [shape: f32[1,256], index: 2, kind: input, shape index: {}]
  %s3 = inlined_call_operand.vmem [shape: f32[16,256], index: 3, kind: output, shape index: {}]
  %s4 = sld [smem:[#allocation0]]
  $region22: #{lipnet_multi_imu_forward.15} parent=0
    _
  %s6 = ssub.s32 1, %s4
  %s7 = scalar_select 0, %s6, %s4
  // Predicated region
  $region2: #{lipnet_multi_imu_forward.15} parent=0 // pred_check
    _
  $region3: #{lipnet_multi_imu_forward.15} parent=0 // pred_check_branch
    %9 = sbr.rel (0) target = $region5
  $region4: #{lipnet_multi_imu_forward.15} parent=0 // pred_region
    _
  $region5: #{lipnet_multi_imu_forward.15} parent=0 // pred_fallthru
    _
  // Predicated region
  $region6: #{lipnet_multi_imu_forward.15} parent=0 // pred_check
    _
  $region7: #{lipnet_multi_imu_forward.15} parent=0 // pred_check_branch
    %11 = sbr.rel (0) target = $region9
  $region8: #{lipnet_multi_imu_forward.15} parent=0 // pred_region
    _
  $region9: #{lipnet_multi_imu_forward.15} parent=0 // pred_fallthru
    _
  // Predicated region
  $region10: #{lipnet_multi_imu_forward.15} parent=0 // pred_check
    _
  $region11: #{lipnet_multi_imu_forward.15} parent=0 // pred_check_branch
    %13 = sbr.rel (0) target = $region13
  $region12: #{lipnet_multi_imu_forward.15} parent=0 // pred_region
    _
  $region13: #{lipnet_multi_imu_forward.15} parent=0 // pred_fallthru
    _
  %v15 = vld [vmem:[%s0] sm:$0xff]
  %v16 = vld [vmem:[%s0 + $0x8] sm:$0xff]
  %v17 = vpack.c.bf16 %v16, %v15
  %v18 = vld [vmem:[%s1] sm:$0xff]
  %v19 = vld [vmem:[%s1 + $0x8] sm:$0xff]
  %v20 = vld [vmem:[%s1 + $0x10] sm:$0xff]
  %v21 = vld [vmem:[%s1 + $0x18] sm:$0xff]
  %v22 = vld [vmem:[%s1 + $0x20] sm:$0xff]
  %v23 = vld [vmem:[%s1 + $0x28] sm:$0xff]
  %v24 = vld [vmem:[%s1 + $0x30] sm:$0xff]
  %v25 = vld [vmem:[%s1 + $0x38] sm:$0xff]
  %v26 = vld [vmem:[%s2] sm:$0x3]
  %v28 = vlaneseq
  %v29 = vshrl.u32 %v28, 7
  %v30 = vsub.s32 0, %v29
  %v31 = vrot.slane %v26, %v30
  %v32 = vlaneseq
  %v33 = vshrl.u32 %v32, 7
  %v34 = vsub.s32 1, %v33
  %v35 = vrot.slane %v26, %v34
  %v46 = vunpack.c.l.b16 %v18
  %v47 = vunpack.c.h.b16 %v18
  %v48 = vunpack.c.l.b16 %v19
  %v49 = vunpack.c.h.b16 %v19
  %v50 = vunpack.c.l.b16 %v20
  %v51 = vunpack.c.h.b16 %v20
  %v52 = vunpack.c.l.b16 %v21
  %v53 = vunpack.c.h.b16 %v21
  %v54 = vunpack.c.l.b16 %v22
  %v55 = vunpack.c.h.b16 %v22
  %v56 = vunpack.c.l.b16 %v23
  %v57 = vunpack.c.h.b16 %v23
  %v58 = vunpack.c.l.b16 %v24
  %v59 = vunpack.c.h.b16 %v24
  %v60 = vunpack.c.l.b16 %v25
  %v61 = vunpack.c.h.b16 %v25
  %v62 = vpack.c.b16 %v48, %v46
  %v63 = vpack.c.b16 %v49, %v47
  %v64 = vpack.c.b16 %v52, %v50
  %v65 = vpack.c.b16 %v53, %v51
  %v66 = vpack.c.b16 %v56, %v54
  %v67 = vpack.c.b16 %v57, %v55
  %v68 = vpack.c.b16 %v60, %v58
  %v69 = vpack.c.b16 %v61, %v59
  %vm78 = vcmask 523264
  %v80 = vsel %vm78, %v17, 0
  %82 = vmatprep.subr.bf16.mxu0 %v63
  %83 = vmatpush1.bf16.msra.mxu0 %v62
  %84 = vmatprep.subr.bf16.mxu0 %v65
  %85 = vmatpush1.bf16.msra.mxu0 %v64
  %86 = vmatprep.subr.bf16.mxu0 %v67
  %87 = vmatpush1.bf16.msra.mxu0 %v66
  %88 = vmatprep.subr.bf16.mxu0 %v69
  %89 = vmatpush1.bf16.msra.mxu0 %v68
  %90 = vmatprep.subr.bf16.mxu0 0
  %91 = vmatpush1.bf16.msra.mxu0 0
  %92 = vmatprep.subr.bf16.mxu0 0
  %93 = vmatpush1.bf16.msra.mxu0 0
  %94 = vmatprep.subr.bf16.mxu0 0
  %95 = vmatpush1.bf16.msra.mxu0 0
  %96 = vmatprep.subr.bf16.mxu0 0
  %97 = vmatpush1.bf16.msra.mxu0 0
  %98 = vmatprep.subr.bf16.mxu0 0
  %99 = vmatpush1.bf16.msra.mxu0 0
  %100 = vmatprep.subr.bf16.mxu0 0
  %101 = vmatpush1.bf16.msra.mxu0 0
  %102 = vmatprep.subr.bf16.mxu0 0
  %103 = vmatpush1.bf16.msra.mxu0 0
  %104 = vmatprep.subr.bf16.mxu0 0
  %105 = vmatpush1.bf16.msra.mxu0 0
  %106 = vmatprep.subr.bf16.mxu0 0
  %107 = vmatpush1.bf16.msra.mxu0 0
  %108 = vmatprep.subr.bf16.mxu0 0
  %109 = vmatpush1.bf16.msra.mxu0 0
  %110 = vmatprep.subr.bf16.mxu0 0
  %111 = vmatpush1.bf16.msra.mxu0 0
  %112 = vmatprep.subr.bf16.mxu0 0
  %113 = vmatpush1.bf16.msra.mxu0 0
  %114 = vmatprep.mubr.bf16.mxu0 0
  %115 = vmatmul.mubr.bf16.gmra.mrb[0].mxu0 %v80
  %v116 = vpop.f32.mrb[0].mxu0
  %v117 = vadd.f32 %v31, %v116
  %v118 = vpop.f32.mrb[0].mxu0
  %v119 = vadd.f32 %v35, %v118
  %v120 = vpop.f32.mrb[0].mxu0
  %v121 = vadd.f32 %v31, %v120
  %v122 = vpop.f32.mrb[0].mxu0
  %v123 = vadd.f32 %v35, %v122
  %124 = vdwg.mxu0
  %125 = vst [vmem:[%s3] sm:$0xff] %v117
  %126 = vst [vmem:[%s3 + $0x8] sm:$0xff] %v119
  %127 = vst [vmem:[%s3 + $0x10] sm:$0xff] %v121
  %128 = vst [vmem:[%s3 + $0x18] sm:$0xff] %v123
  // Predicated region
  $region14: #{lipnet_multi_imu_forward.15} parent=0 // pred_check
    _
  $region15: #{lipnet_multi_imu_forward.15} parent=0 // pred_check_branch
    %130 = sbr.rel (0) target = $region17
  $region16: #{lipnet_multi_imu_forward.15} parent=0 // pred_region
    _
  $region17: #{lipnet_multi_imu_forward.15} parent=0 // pred_fallthru
    _
  // Predicated region
  $region18: #{lipnet_multi_imu_forward.15} parent=0 // pred_check
    _
  $region19: #{lipnet_multi_imu_forward.15} parent=0 // pred_check_branch
    %132 = sbr.rel (0) target = $region21
  $region20: #{lipnet_multi_imu_forward.15} parent=0 // pred_region
    _
  $region21: #{lipnet_multi_imu_forward.15} parent=0 // pred_fallthru
    _

// kernel: lipnet_multi_imu_forward.17
$region0: #{lipnet_multi_imu_forward.17}
  #allocation0 [shape = 'u32[]', space=smem, size = 0x4, offset = 0x4, fixed_abs, tag = 'smem constant byte address 0x4 - core index']
  #allocation1 [shape = 'u32[144,128]{1,0:T(1,128)}', space=vmem, size = 0x12000, scoped, tag = 'internal scratch']
  %s0 = inlined_call_operand.vmem [shape: f32[16,64], index: 0, kind: input, shape index: {}]
  %s1 = inlined_call_operand.vmem [shape: bf16[64,72], index: 1, kind: input, shape index: {}]
  %s2 = inlined_call_operand.vmem [shape: f32[1,72], index: 2, kind: input, shape index: {}]
  %s3 = inlined_call_operand.vmem [shape: f32[16,72], index: 3, kind: output, shape index: {}]
  %s4 = sld [smem:[#allocation0]]
  $region22: #{lipnet_multi_imu_forward.17} parent=0
    _
  %s6 = ssub.s32 1, %s4
  %s7 = scalar_select 0, %s6, %s4
  // Predicated region
  $region2: #{lipnet_multi_imu_forward.17} parent=0 // pred_check
    _
  $region3: #{lipnet_multi_imu_forward.17} parent=0 // pred_check_branch
    %9 = sbr.rel (0) target = $region5
  $region4: #{lipnet_multi_imu_forward.17} parent=0 // pred_region
    _
  $region5: #{lipnet_multi_imu_forward.17} parent=0 // pred_fallthru
    _
  // Predicated region
  $region6: #{lipnet_multi_imu_forward.17} parent=0 // pred_check
    _
  $region7: #{lipnet_multi_imu_forward.17} parent=0 // pred_check_branch
    %11 = sbr.rel (0) target = $region9
  $region8: #{lipnet_multi_imu_forward.17} parent=0 // pred_region
    _
  $region9: #{lipnet_multi_imu_forward.17} parent=0 // pred_fallthru
    _
  // Predicated region
  $region10: #{lipnet_multi_imu_forward.17} parent=0 // pred_check
    _
  $region11: #{lipnet_multi_imu_forward.17} parent=0 // pred_check_branch
    %13 = sbr.rel (0) target = $region13
  $region12: #{lipnet_multi_imu_forward.17} parent=0 // pred_region
    _
  $region13: #{lipnet_multi_imu_forward.17} parent=0 // pred_fallthru
    _
  %v15 = vld [vmem:[%s0] sm:$0xff]
  %v16 = vld [vmem:[%s0 + $0x8] sm:$0xff]
  %v17 = vpack.c.bf16 %v16, %v15
  %v18 = vld [vmem:[%s1] sm:$0xf]
  %v19 = vld [vmem:[%s1 + $0x4] sm:$0xf]
  %v20 = vld [vmem:[%s1 + $0x8] sm:$0xf]
  %v21 = vld [vmem:[%s1 + $0xc] sm:$0xf]
  %v22 = vld [vmem:[%s1 + $0x10] sm:$0xf]
  %v23 = vld [vmem:[%s1 + $0x14] sm:$0xf]
  %v24 = vld [vmem:[%s1 + $0x18] sm:$0xf]
  %v25 = vld [vmem:[%s1 + $0x1c] sm:$0xf]
  %v26 = vld [vmem:[%s2] sm:$0x1]
  %v28 = vlaneseq
  %v29 = vshrl.u32 %v28, 7
  %v30 = vsub.s32 0, %v29
  %v31 = vrot.slane %v26, %v30
  %v41 = vunpack.c.l.b16 %v18
  %v42 = vunpack.c.l.b16 %v19
  %v43 = vunpack.c.l.b16 %v20
  %v44 = vunpack.c.l.b16 %v21
  %v45 = vunpack.c.l.b16 %v22
  %v46 = vunpack.c.l.b16 %v23
  %v47 = vunpack.c.l.b16 %v24
  %v48 = vunpack.c.l.b16 %v25
  %v49 = vpack.c.b16 %v42, %v41
  %v50 = vpack.c.b16 %v44, %v43
  %v51 = vpack.c.b16 %v46, %v45
  %v52 = vpack.c.b16 %v48, %v47
  %vm57 = vcmask 523264
  %v59 = vsel %vm57, %v17, 0
  %61 = vmatprep.subr.bf16.mxu0 0
  %62 = vmatpush1.bf16.msra.mxu0 %v49
  %63 = vmatprep.subr.bf16.mxu0 0
  %64 = vmatpush1.bf16.msra.mxu0 %v50
  %65 = vmatprep.subr.bf16.mxu0 0
  %66 = vmatpush1.bf16.msra.mxu0 %v51
  %67 = vmatprep.subr.bf16.mxu0 0
  %68 = vmatpush1.bf16.msra.mxu0 %v52
  %69 = vmatprep.subr.bf16.mxu0 0
  %70 = vmatpush1.bf16.msra.mxu0 0
  %71 = vmatprep.subr.bf16.mxu0 0
  %72 = vmatpush1.bf16.msra.mxu0 0
  %73 = vmatprep.subr.bf16.mxu0 0
  %74 = vmatpush1.bf16.msra.mxu0 0
  %75 = vmatprep.subr.bf16.mxu0 0
  %76 = vmatpush1.bf16.msra.mxu0 0
  %77 = vmatprep.subr.bf16.mxu0 0
  %78 = vmatpush1.bf16.msra.mxu0 0
  %79 = vmatprep.subr.bf16.mxu0 0
  %80 = vmatpush1.bf16.msra.mxu0 0
  %81 = vmatprep.subr.bf16.mxu0 0
  %82 = vmatpush1.bf16.msra.mxu0 0
  %83 = vmatprep.subr.bf16.mxu0 0
  %84 = vmatpush1.bf16.msra.mxu0 0
  %85 = vmatprep.subr.bf16.mxu0 0
  %86 = vmatpush1.bf16.msra.mxu0 0
  %87 = vmatprep.subr.bf16.mxu0 0
  %88 = vmatpush1.bf16.msra.mxu0 0
  %89 = vmatprep.subr.bf16.mxu0 0
  %90 = vmatpush1.bf16.msra.mxu0 0
  %91 = vmatprep.subr.bf16.mxu0 0
  %92 = vmatpush1.bf16.msra.mxu0 0
  %93 = vmatprep.mubr.bf16.mxu0 0
  %94 = vmatmul.mubr.bf16.gmra.mrb[0].mxu0 %v59
  %v95 = vpop.f32.mrb[0].mxu0
  %v96 = vadd.f32 %v31, %v95
  %v97 = vpop.f32.mrb[0].mxu0
  %v98 = vpop.f32.mrb[0].mxu0
  %v99 = vadd.f32 %v31, %v98
  %v100 = vpop.f32.mrb[0].mxu0
  %101 = vdwg.mxu0
  %vm102 = vcmask 588800
  %103 = vst.msk [vmem:[%s3] sm:$0xff] %vm102, %v96
  %104 = vst.msk [vmem:[%s3 + $0x8] sm:$0xff] %vm102, %v99
  // Predicated region
  $region14: #{lipnet_multi_imu_forward.17} parent=0 // pred_check
    _
  $region15: #{lipnet_multi_imu_forward.17} parent=0 // pred_check_branch
    %106 = sbr.rel (0) target = $region17
  $region16: #{lipnet_multi_imu_forward.17} parent=0 // pred_region
    _
  $region17: #{lipnet_multi_imu_forward.17} parent=0 // pred_fallthru
    _
  // Predicated region
  $region18: #{lipnet_multi_imu_forward.17} parent=0 // pred_check
    _
  $region19: #{lipnet_multi_imu_forward.17} parent=0 // pred_check_branch
    %108 = sbr.rel (0) target = $region21
  $region20: #{lipnet_multi_imu_forward.17} parent=0 // pred_region
    _
  $region21: #{lipnet_multi_imu_forward.17} parent=0 // pred_fallthru
    _

// kernel: lipnet_multi_imu_forward.23
$region0: #{lipnet_multi_imu_forward.23}
  #allocation0 [shape = 'u32[]', space=smem, size = 0x4, offset = 0x4, fixed_abs, tag = 'smem constant byte address 0x4 - core index']
  #allocation1 [shape = 'u32[144,128]{1,0:T(1,128)}', space=vmem, size = 0x12000, scoped, tag = 'internal scratch']
  %s0 = inlined_call_operand.vmem [shape: f32[16,64], index: 0, kind: input, shape index: {}]
  %s1 = inlined_call_operand.vmem [shape: bf16[64,144], index: 1, kind: input, shape index: {}]
  %s2 = inlined_call_operand.vmem [shape: f32[1,144], index: 2, kind: input, shape index: {}]
  %s3 = inlined_call_operand.hbm [shape: f32[16,144], index: 3, kind: output, shape index: {}]
  %s4 = sld [smem:[#allocation0]]
  $region22: #{lipnet_multi_imu_forward.23} parent=0
    _
  %s6 = ssub.s32 1, %s4
  %s7 = scalar_select 0, %s6, %s4
  $region1: #{lipnet_multi_imu_forward.23} parent=0
    #allocation2 [shape = 'u8[16384]{0}', space=vmem, size = 0x4000, scoped, tag = 'output window, operand 0, single buffered']
    #allocation3 [shape = 's32[1]{0}', space=sflag, size = 0x4, scoped, tag = 'scoped memory for lipnet_multi_imu_forward.23']
    %8 = vsyncpa [#allocation3], 0
    // Predicated region
    $region2: #{lipnet_multi_imu_forward.23} parent=1 // pred_check
      _
    $region3: #{lipnet_multi_imu_forward.23} parent=1 // pred_check_branch
      %10 = sbr.rel (0) target = $region5
    $region4: #{lipnet_multi_imu_forward.23} parent=1 // pred_region
      _
    $region5: #{lipnet_multi_imu_forward.23} parent=1 // pred_fallthru
      _
    // Predicated region
    $region6: #{lipnet_multi_imu_forward.23} parent=1 // pred_check
      _
    $region7: #{lipnet_multi_imu_forward.23} parent=1 // pred_check_branch
      %12 = sbr.rel (0) target = $region9
    $region8: #{lipnet_multi_imu_forward.23} parent=1 // pred_region
      _
    $region9: #{lipnet_multi_imu_forward.23} parent=1 // pred_fallthru
      _
    // Predicated region
    $region10: #{lipnet_multi_imu_forward.23} parent=1 // pred_check
      _
    $region11: #{lipnet_multi_imu_forward.23} parent=1 // pred_check_branch
      %14 = sbr.rel (0) target = $region13
    $region12: #{lipnet_multi_imu_forward.23} parent=1 // pred_region
      _
    $region13: #{lipnet_multi_imu_forward.23} parent=1 // pred_fallthru
      _
    %v16 = vld [vmem:[%s0] sm:$0xff]
    %v17 = vld [vmem:[%s0 + $0x8] sm:$0xff]
    %v18 = vpack.c.bf16 %v17, %v16
    %v19 = vld [vmem:[%s1] sm:$0xff]
    %v20 = vld [vmem:[%s1 + $0x8] sm:$0xff]
    %v21 = vld [vmem:[%s1 + $0x10] sm:$0xff]
    %v22 = vld [vmem:[%s1 + $0x18] sm:$0xff]
    %v23 = vld [vmem:[%s1 + $0x20] sm:$0xff]
    %v24 = vld [vmem:[%s1 + $0x28] sm:$0xff]
    %v25 = vld [vmem:[%s1 + $0x30] sm:$0xff]
    %v26 = vld [vmem:[%s1 + $0x38] sm:$0xff]
    %v27 = vld [vmem:[%s2] sm:$0x3]
    %v29 = vlaneseq
    %v30 = vshrl.u32 %v29, 7
    %v31 = vsub.s32 0, %v30
    %v32 = vrot.slane %v27, %v31
    %v33 = vlaneseq
    %v34 = vshrl.u32 %v33, 7
    %v35 = vsub.s32 1, %v34
    %v36 = vrot.slane %v27, %v35
    %v47 = vunpack.c.l.b16 %v19
    %v48 = vunpack.c.h.b16 %v19
    %v49 = vunpack.c.l.b16 %v20
    %v50 = vunpack.c.h.b16 %v20
    %v51 = vunpack.c.l.b16 %v21
    %v52 = vunpack.c.h.b16 %v21
    %v53 = vunpack.c.l.b16 %v22
    %v54 = vunpack.c.h.b16 %v22
    %v55 = vunpack.c.l.b16 %v23
    %v56 = vunpack.c.h.b16 %v23
    %v57 = vunpack.c.l.b16 %v24
    %v58 = vunpack.c.h.b16 %v24
    %v59 = vunpack.c.l.b16 %v25
    %v60 = vunpack.c.h.b16 %v25
    %v61 = vunpack.c.l.b16 %v26
    %v62 = vunpack.c.h.b16 %v26
    %v63 = vpack.c.b16 %v49, %v47
    %v64 = vpack.c.b16 %v50, %v48
    %v65 = vpack.c.b16 %v53, %v51
    %v66 = vpack.c.b16 %v54, %v52
    %v67 = vpack.c.b16 %v57, %v55
    %v68 = vpack.c.b16 %v58, %v56
    %v69 = vpack.c.b16 %v61, %v59
    %v70 = vpack.c.b16 %v62, %v60
    %vm79 = vcmask 523264
    %v81 = vsel %vm79, %v18, 0
    %83 = vmatprep.subr.bf16.mxu0 %v64
    %84 = vmatpush1.bf16.msra.mxu0 %v63
    %85 = vmatprep.subr.bf16.mxu0 %v66
    %86 = vmatpush1.bf16.msra.mxu0 %v65
    %87 = vmatprep.subr.bf16.mxu0 %v68
    %88 = vmatpush1.bf16.msra.mxu0 %v67
    %89 = vmatprep.subr.bf16.mxu0 %v70
    %90 = vmatpush1.bf16.msra.mxu0 %v69
    %91 = vmatprep.subr.bf16.mxu0 0
    %92 = vmatpush1.bf16.msra.mxu0 0
    %93 = vmatprep.subr.bf16.mxu0 0
    %94 = vmatpush1.bf16.msra.mxu0 0
    %95 = vmatprep.subr.bf16.mxu0 0
    %96 = vmatpush1.bf16.msra.mxu0 0
    %97 = vmatprep.subr.bf16.mxu0 0
    %98 = vmatpush1.bf16.msra.mxu0 0
    %99 = vmatprep.subr.bf16.mxu0 0
    %100 = vmatpush1.bf16.msra.mxu0 0
    %101 = vmatprep.subr.bf16.mxu0 0
    %102 = vmatpush1.bf16.msra.mxu0 0
    %103 = vmatprep.subr.bf16.mxu0 0
    %104 = vmatpush1.bf16.msra.mxu0 0
    %105 = vmatprep.subr.bf16.mxu0 0
    %106 = vmatpush1.bf16.msra.mxu0 0
    %107 = vmatprep.subr.bf16.mxu0 0
    %108 = vmatpush1.bf16.msra.mxu0 0
    %109 = vmatprep.subr.bf16.mxu0 0
    %110 = vmatpush1.bf16.msra.mxu0 0
    %111 = vmatprep.subr.bf16.mxu0 0
    %112 = vmatpush1.bf16.msra.mxu0 0
    %113 = vmatprep.subr.bf16.mxu0 0
    %114 = vmatpush1.bf16.msra.mxu0 0
    %115 = vmatprep.mubr.bf16.mxu0 0
    %116 = vmatmul.mubr.bf16.gmra.mrb[0].mxu0 %v81
    %v117 = vpop.f32.mrb[0].mxu0
    %v118 = vadd.f32 %v32, %v117
    %v119 = vpop.f32.mrb[0].mxu0
    %v120 = vadd.f32 %v36, %v119
    %v121 = vpop.f32.mrb[0].mxu0
    %v122 = vadd.f32 %v32, %v121
    %v123 = vpop.f32.mrb[0].mxu0
    %v124 = vadd.f32 %v36, %v123
    %125 = vdwg.mxu0
    %126 = vst [vmem:[#allocation2] sm:$0xff] %v118
    %vm127 = vcmask 130048
    %128 = vst.msk [vmem:[#allocation2 + $0x8] sm:$0xff] %vm127, %v120
    %129 = vst [vmem:[#allocation2 + $0x10] sm:$0xff] %v122
    %130 = vst.msk [vmem:[#allocation2 + $0x18] sm:$0xff] %vm127, %v124
    // Predicated region
    $region14: #{lipnet_multi_imu_forward.23} parent=1 // pred_check
      _
    $region15: #{lipnet_multi_imu_forward.23} parent=1 // pred_check_branch
      %132 = sbr.rel (0) target = $region17
    $region16: #{lipnet_multi_imu_forward.23} parent=1 // pred_region
      %s134 = ssub.s32 512, 512
      %135 = vsyncadd [#allocation3], %s134
      %s136 = sshll.u32 [#allocation2], 4
      %s137 = int_to_ptr.vmem [resolvable:$true] %s136
      %142 = dma.vmem_to_hbm [thread:$0]  %s137, 512, %s3, [#allocation3], 256, 256, 16
    $region17: #{lipnet_multi_imu_forward.23} parent=1 // pred_fallthru
      _
    // Predicated region
    $region18: #{lipnet_multi_imu_forward.23} parent=1 // pred_check
      _
    $region19: #{lipnet_multi_imu_forward.23} parent=1 // pred_check_branch
      %144 = sbr.rel (0) target = $region21
    $region20: #{lipnet_multi_imu_forward.23} parent=1 // pred_region
      %145 = dma.done [#allocation3], 512
    $region21: #{lipnet_multi_imu_forward.23} parent=1 // pred_fallthru
      _
    %146 = vsyncpa [#allocation3], 1

// kernel: lipnet_multi_imu_forward.18
$region0: #{lipnet_multi_imu_forward.18}
  #allocation0 [shape = 'u32[]', space=smem, size = 0x4, offset = 0x4, fixed_abs, tag = 'smem constant byte address 0x4 - core index']
  #allocation1 [shape = 'u32[144,128]{1,0:T(1,128)}', space=vmem, size = 0x12000, scoped, tag = 'internal scratch']
  %s0 = inlined_call_operand.vmem [shape: f32[16,198], index: 0, kind: input, shape index: {}]
  %s1 = inlined_call_operand.vmem [shape: bf16[198,32], index: 1, kind: input, shape index: {}]
  %s2 = inlined_call_operand.vmem [shape: f32[1,32], index: 2, kind: input, shape index: {}]
  %s3 = inlined_call_operand.vmem [shape: f32[16,32], index: 3, kind: output, shape index: {}]
  %s4 = sld [smem:[#allocation0]]
  $region22: #{lipnet_multi_imu_forward.18} parent=0
    _
  %s6 = ssub.s32 1, %s4
  %s7 = scalar_select 0, %s6, %s4
  // Predicated region
  $region2: #{lipnet_multi_imu_forward.18} parent=0 // pred_check
    _
  $region3: #{lipnet_multi_imu_forward.18} parent=0 // pred_check_branch
    %9 = sbr.rel (0) target = $region5
  $region4: #{lipnet_multi_imu_forward.18} parent=0 // pred_region
    _
  $region5: #{lipnet_multi_imu_forward.18} parent=0 // pred_fallthru
    _
  // Predicated region
  $region6: #{lipnet_multi_imu_forward.18} parent=0 // pred_check
    _
  $region7: #{lipnet_multi_imu_forward.18} parent=0 // pred_check_branch
    %11 = sbr.rel (0) target = $region9
  $region8: #{lipnet_multi_imu_forward.18} parent=0 // pred_region
    _
  $region9: #{lipnet_multi_imu_forward.18} parent=0 // pred_fallthru
    _
  // Predicated region
  $region10: #{lipnet_multi_imu_forward.18} parent=0 // pred_check
    _
  $region11: #{lipnet_multi_imu_forward.18} parent=0 // pred_check_branch
    %13 = sbr.rel (0) target = $region13
  $region12: #{lipnet_multi_imu_forward.18} parent=0 // pred_region
    _
  $region13: #{lipnet_multi_imu_forward.18} parent=0 // pred_fallthru
    _
  %v15 = vld [vmem:[%s0] sm:$0xff]
  %v16 = vld [vmem:[%s0 + $0x8] sm:$0xff]
  %v17 = vld [vmem:[%s0 + $0x10] sm:$0xff]
  %v18 = vld [vmem:[%s0 + $0x18] sm:$0xff]
  %v19 = vpack.c.bf16 %v17, %v15
  %v20 = vpack.c.bf16 %v18, %v16
  %v21 = vld [vmem:[%s1] sm:$0xf]
  %v22 = vld [vmem:[%s1 + $0x4] sm:$0xf]
  %v23 = vld [vmem:[%s1 + $0x8] sm:$0xf]
  %v24 = vld [vmem:[%s1 + $0xc] sm:$0xf]
  %v25 = vld [vmem:[%s1 + $0x10] sm:$0xf]
  %v26 = vld [vmem:[%s1 + $0x14] sm:$0xf]
  %v27 = vld [vmem:[%s1 + $0x18] sm:$0xf]
  %v28 = vld [vmem:[%s1 + $0x1c] sm:$0xf]
  %v29 = vld [vmem:[%s1 + $0x20] sm:$0xf]
  %v30 = vld [vmem:[%s1 + $0x24] sm:$0xf]
  %v31 = vld [vmem:[%s1 + $0x28] sm:$0xf]
  %v32 = vld [vmem:[%s1 + $0x2c] sm:$0xf]
  %v33 = vld [vmem:[%s1 + $0x30] sm:$0xf]
  %v34 = vld [vmem:[%s1 + $0x34] sm:$0xf]
  %v35 = vld [vmem:[%s1 + $0x38] sm:$0xf]
  %v36 = vld [vmem:[%s1 + $0x3c] sm:$0xf]
  %v37 = vld [vmem:[%s1 + $0x40] sm:$0xf]
  %v38 = vld [vmem:[%s1 + $0x44] sm:$0xf]
  %v39 = vld [vmem:[%s1 + $0x48] sm:$0xf]
  %v40 = vld [vmem:[%s1 + $0x4c] sm:$0xf]
  %v41 = vld [vmem:[%s1 + $0x50] sm:$0xf]
  %v42 = vld [vmem:[%s1 + $0x54] sm:$0xf]
  %v43 = vld [vmem:[%s1 + $0x58] sm:$0xf]
  %v44 = vld [vmem:[%s1 + $0x5c] sm:$0xf]
  %v45 = vld [vmem:[%s1 + $0x60] sm:$0x7]
  %v46 = vld [vmem:[%s2] sm:$0x1]
  %v48 = vlaneseq
  %v49 = vshrl.u32 %v48, 7
  %v50 = vsub.s32 0, %v49
  %v51 = vrot.slane %v46, %v50
  %v78 = vunpack.c.l.b16 %v21
  %v79 = vunpack.c.l.b16 %v22
  %v80 = vunpack.c.l.b16 %v23
  %v81 = vunpack.c.l.b16 %v24
  %v82 = vunpack.c.l.b16 %v25
  %v83 = vunpack.c.l.b16 %v26
  %v84 = vunpack.c.l.b16 %v27
  %v85 = vunpack.c.l.b16 %v28
  %v86 = vunpack.c.l.b16 %v29
  %v87 = vunpack.c.l.b16 %v30
  %v88 = vunpack.c.l.b16 %v31
  %v89 = vunpack.c.l.b16 %v32
  %v90 = vunpack.c.l.b16 %v33
  %v91 = vunpack.c.l.b16 %v34
  %v92 = vunpack.c.l.b16 %v35
  %v93 = vunpack.c.l.b16 %v36
  %v94 = vunpack.c.l.b16 %v37
  %v95 = vunpack.c.l.b16 %v38
  %v96 = vunpack.c.l.b16 %v39
  %v97 = vunpack.c.l.b16 %v40
  %v98 = vunpack.c.l.b16 %v41
  %v99 = vunpack.c.l.b16 %v42
  %v100 = vunpack.c.l.b16 %v43
  %v101 = vunpack.c.l.b16 %v44
  %v102 = vunpack.c.l.b16 %v45
  %v103 = vpack.c.b16 %v79, %v78
  %v104 = vpack.c.b16 %v81, %v80
  %v105 = vpack.c.b16 %v83, %v82
  %v106 = vpack.c.b16 %v85, %v84
  %v107 = vpack.c.b16 %v87, %v86
  %v108 = vpack.c.b16 %v89, %v88
  %v109 = vpack.c.b16 %v91, %v90
  %v110 = vpack.c.b16 %v93, %v92
  %v111 = vpack.c.b16 %v95, %v94
  %v112 = vpack.c.b16 %v97, %v96
  %v113 = vpack.c.b16 %v99, %v98
  %v114 = vpack.c.b16 %v101, %v100
  %v115 = vpack.c.b16 %v102, %v102
  %vm128 = vcmask 572416
  %v130 = vsel %vm128, %v20, 0
  %vm132 = vcmask 1042432
  %v134 = vsel %vm132, %v115, 0
  %136 = vmatprep.subr.bf16.mxu0 0
  %137 = vmatpush1.bf16.msra.mxu0 %v103
  %138 = vmatprep.subr.bf16.mxu0 0
  %139 = vmatpush1.bf16.msra.mxu0 %v104
  %140 = vmatprep.subr.bf16.mxu0 0
  %141 = vmatpush1.bf16.msra.mxu0 %v105
  %142 = vmatprep.subr.bf16.mxu0 0
  %143 = vmatpush1.bf16.msra.mxu0 %v106
  %144 = vmatprep.subr.bf16.mxu0 0
  %145 = vmatpush1.bf16.msra.mxu0 %v107
  %146 = vmatprep.subr.bf16.mxu0 0
  %147 = vmatpush1.bf16.msra.mxu0 %v108
  %148 = vmatprep.subr.bf16.mxu0 0
  %149 = vmatpush1.bf16.msra.mxu0 %v109
  %150 = vmatprep.subr.bf16.mxu0 0
  %151 = vmatpush1.bf16.msra.mxu0 %v110
  %152 = vmatprep.subr.bf16.mxu0 0
  %153 = vmatpush1.bf16.msra.mxu0 %v111
  %154 = vmatprep.subr.bf16.mxu0 0
  %155 = vmatpush1.bf16.msra.mxu0 %v112
  %156 = vmatprep.subr.bf16.mxu0 0
  %157 = vmatpush1.bf16.msra.mxu0 %v113
  %158 = vmatprep.subr.bf16.mxu0 0
  %159 = vmatpush1.bf16.msra.mxu0 %v114
  %160 = vmatprep.subr.bf16.mxu0 0
  %161 = vmatpush1.bf16.msra.mxu0 %v134
  %162 = vmatprep.subr.bf16.mxu0 0
  %163 = vmatpush1.bf16.msra.mxu0 0
  %164 = vmatprep.subr.bf16.mxu0 0
  %165 = vmatpush1.bf16.msra.mxu0 0
  %166 = vmatprep.subr.bf16.mxu0 0
  %167 = vmatpush1.bf16.msra.mxu0 0
  %168 = vmatprep.mubr.bf16.mxu0 %v130
  %169 = vmatmul.mubr.bf16.gmra.mrb[0].mxu0 %v19
  %v170 = vpop.f32.mrb[0].mxu0
  %v171 = vadd.f32 %v51, %v170
  %v172 = vpop.f32.mrb[0].mxu0
  %v173 = vpop.f32.mrb[0].mxu0
  %v174 = vadd.f32 %v51, %v173
  %v175 = vpop.f32.mrb[0].mxu0
  %176 = vdwg.mxu0
  %v177 = vmax.f32 %v171, 0.0
  %v178 = vmax.f32 %v174, 0.0
  %vm179 = vcmask 261120
  %180 = vst.msk [vmem:[%s3] sm:$0xff] %vm179, %v177
  %181 = vst.msk [vmem:[%s3 + $0x8] sm:$0xff] %vm179, %v178
  // Predicated region
  $region14: #{lipnet_multi_imu_forward.18} parent=0 // pred_check
    _
  $region15: #{lipnet_multi_imu_forward.18} parent=0 // pred_check_branch
    %183 = sbr.rel (0) target = $region17
  $region16: #{lipnet_multi_imu_forward.18} parent=0 // pred_region
    _
  $region17: #{lipnet_multi_imu_forward.18} parent=0 // pred_fallthru
    _
  // Predicated region
  $region18: #{lipnet_multi_imu_forward.18} parent=0 // pred_check
    _
  $region19: #{lipnet_multi_imu_forward.18} parent=0 // pred_check_branch
    %185 = sbr.rel (0) target = $region21
  $region20: #{lipnet_multi_imu_forward.18} parent=0 // pred_region
    _
  $region21: #{lipnet_multi_imu_forward.18} parent=0 // pred_fallthru
    _

// kernel: lipnet_multi_imu_forward.14
$region0: #{lipnet_multi_imu_forward.14}
  #allocation0 [shape = 'u32[]', space=smem, size = 0x4, offset = 0x4, fixed_abs, tag = 'smem constant byte address 0x4 - core index']
  #allocation1 [shape = 'u32[144,128]{1,0:T(1,128)}', space=vmem, size = 0x12000, scoped, tag = 'internal scratch']
  #allocation2 [shape = 'f32[8,32]{1,0:T(8,128)}', space=vmem, size = 0x1000, scoped, tag = 'scratch operand']
  #allocation3 [shape = 'f32[8,32]{1,0:T(8,128)}', space=vmem, size = 0x1000, scoped, tag = 'scratch operand']
  #allocation4 [shape = 'f32[8,32]{1,0:T(8,128)}', space=vmem, size = 0x1000, scoped, tag = 'scratch operand']
  #allocation5 [shape = 'f32[8,32]{1,0:T(8,128)}', space=vmem, size = 0x1000, scoped, tag = 'scratch operand']
  %s0 = inlined_call_operand.vmem [shape: f32[8,8,256], index: 0, kind: input, shape index: {}]
  %s1 = inlined_call_operand.vmem [shape: bf16[32,128], index: 1, kind: input, shape index: {}]
  %s2 = inlined_call_operand.vmem [shape: bf16[32,128], index: 2, kind: input, shape index: {}]
  %s3 = inlined_call_operand.vmem [shape: f32[8,8,64], index: 3, kind: output, shape index: {}]
  %s4 = sld [smem:[#allocation0]]
  $region22: #{lipnet_multi_imu_forward.14} parent=0
    _
  %s6 = ssub.s32 1, %s4
  %s7 = scalar_select 0, %s6, %s4
  // Predicated region
  $region2: #{lipnet_multi_imu_forward.14} parent=0 // pred_check
    _
  $region3: #{lipnet_multi_imu_forward.14} parent=0 // pred_check_branch
    %9 = sbr.rel (0) target = $region5
  $region4: #{lipnet_multi_imu_forward.14} parent=0 // pred_region
    _
  $region5: #{lipnet_multi_imu_forward.14} parent=0 // pred_fallthru
    _
  // Predicated region
  $region6: #{lipnet_multi_imu_forward.14} parent=0 // pred_check
    _
  $region7: #{lipnet_multi_imu_forward.14} parent=0 // pred_check_branch
    %11 = sbr.rel (0) target = $region9
  $region8: #{lipnet_multi_imu_forward.14} parent=0 // pred_region
    _
  $region9: #{lipnet_multi_imu_forward.14} parent=0 // pred_fallthru
    _
  // Predicated region
  $region10: #{lipnet_multi_imu_forward.14} parent=0 // pred_check
    _
  $region11: #{lipnet_multi_imu_forward.14} parent=0 // pred_check_branch
    %13 = sbr.rel (0) target = $region13
  $region12: #{lipnet_multi_imu_forward.14} parent=0 // pred_region
    _
  $region13: #{lipnet_multi_imu_forward.14} parent=0 // pred_fallthru
    _
  %vm15 = vcmask 261120
  %16 = vst.msk [vmem:[#allocation2] sm:$0xff] %vm15, 0.0
  %17 = vst.msk [vmem:[#allocation3] sm:$0xff] %vm15, 0.0
  %18 = vst.msk [vmem:[#allocation4] sm:$0xff] %vm15, 0.0
  %19 = vst.msk [vmem:[#allocation5] sm:$0xff] %vm15, 0.0
  %v20 = vld [vmem:[%s0] sm:$0xff]
  %s21 = scalar_lea.vmem %s0, 112
  %v22 = vld [vmem:[%s21 + $0x8] sm:$0xff]
  %v23 = vld [vmem:[#allocation2] sm:$0xff]
  %v24 = vpack.c.bf16 %v23, %v23
  %v25 = vld [vmem:[%s1] sm:$0xf]
  %v26 = vld [vmem:[%s1 + $0x4] sm:$0xf]
  %v27 = vld [vmem:[%s1 + $0x8] sm:$0xf]
  %v28 = vld [vmem:[%s1 + $0xc] sm:$0xf]
  %v33 = vunpack.c.l.b16 %v25
  %v34 = vunpack.c.l.b16 %v26
  %v35 = vunpack.c.l.b16 %v27
  %v36 = vunpack.c.l.b16 %v28
  %v37 = vpack.c.b16 %v34, %v33
  %v38 = vpack.c.b16 %v36, %v35
  %v42 = vsel %vm15, %v24, 0
  %44 = vmatprep.subr.bf16.mxu0 0
  %45 = vmatpush1.bf16.msra.mxu0 %v37
  %46 = vmatprep.subr.bf16.mxu0 0
  %47 = vmatpush1.bf16.msra.mxu0 %v38
  %48 = vmatprep.subr.bf16.mxu0 0
  %49 = vmatpush1.bf16.msra.mxu0 0
  %50 = vmatprep.subr.bf16.mxu0 0
  %51 = vmatpush1.bf16.msra.mxu0 0
  %52 = vmatprep.subr.bf16.mxu0 0
  %53 = vmatpush1.bf16.msra.mxu0 0
  %54 = vmatprep.subr.bf16.mxu0 0
  %55 = vmatpush1.bf16.msra.mxu0 0
  %56 = vmatprep.subr.bf16.mxu0 0
  %57 = vmatpush1.bf16.msra.mxu0 0
  %58 = vmatprep.subr.bf16.mxu0 0
  %59 = vmatpush1.bf16.msra.mxu0 0
  %60 = vmatprep.subr.bf16.mxu0 0
  %61 = vmatpush1.bf16.msra.mxu0 0
  %62 = vmatprep.subr.bf16.mxu0 0
  %63 = vmatpush1.bf16.msra.mxu0 0
  %64 = vmatprep.subr.bf16.mxu0 0
  %65 = vmatpush1.bf16.msra.mxu0 0
  %66 = vmatprep.subr.bf16.mxu0 0
  %67 = vmatpush1.bf16.msra.mxu0 0
  %68 = vmatprep.subr.bf16.mxu0 0
  %69 = vmatpush1.bf16.msra.mxu0 0
  %70 = vmatprep.subr.bf16.mxu0 0
  %71 = vmatpush1.bf16.msra.mxu0 0
  %72 = vmatprep.subr.bf16.mxu0 0
  %73 = vmatpush1.bf16.msra.mxu0 0
  %74 = vmatprep.subr.bf16.mxu0 0
  %75 = vmatpush1.bf16.msra.mxu0 0
  %76 = vmatprep.mubr.bf16.mxu0 0
  %77 = vmatmul.mubr.bf16.gmra.mrb[0].mxu0 %v42
  %v78 = vpop.f32.mrb[0].mxu0
  %v79 = vadd.f32 0.0, %v78
  %v80 = vpop.f32.mrb[0].mxu0
  %v81 = vpop.f32.mrb[0].mxu0
  %v82 = vpop.f32.mrb[0].mxu0
  %83 = vdwg.mxu0
  %v84 = vadd.f32 %v20, %v79
  %v85 = vld [vmem:[#allocation4] sm:$0xff]
  %v86 = vpack.c.bf16 %v85, %v85
  %v87 = vld [vmem:[%s2] sm:$0xf]
  %v88 = vld [vmem:[%s2 + $0x4] sm:$0xf]
  %v89 = vld [vmem:[%s2 + $0x8] sm:$0xf]
  %v90 = vld [vmem:[%s2 + $0xc] sm:$0xf]
  %v95 = vunpack.c.l.b16 %v87
  %v96 = vunpack.c.l.b16 %v88
  %v97 = vunpack.c.l.b16 %v89
  %v98 = vunpack.c.l.b16 %v90
  %v99 = vpack.c.b16 %v96, %v95
  %v100 = vpack.c.b16 %v98, %v97
  %v104 = vsel %vm15, %v86, 0
  %106 = vmatprep.subr.bf16.mxu0 0
  %107 = vmatpush1.bf16.msra.mxu0 %v99
  %108 = vmatprep.subr.bf16.mxu0 0
  %109 = vmatpush1.bf16.msra.mxu0 %v100
  %110 = vmatprep.subr.bf16.mxu0 0
  %111 = vmatpush1.bf16.msra.mxu0 0
  %112 = vmatprep.subr.bf16.mxu0 0
  %113 = vmatpush1.bf16.msra.mxu0 0
  %114 = vmatprep.subr.bf16.mxu0 0
  %115 = vmatpush1.bf16.msra.mxu0 0
  %116 = vmatprep.subr.bf16.mxu0 0
  %117 = vmatpush1.bf16.msra.mxu0 0
  %118 = vmatprep.subr.bf16.mxu0 0
  %119 = vmatpush1.bf16.msra.mxu0 0
  %120 = vmatprep.subr.bf16.mxu0 0
  %121 = vmatpush1.bf16.msra.mxu0 0
  %122 = vmatprep.subr.bf16.mxu0 0
  %123 = vmatpush1.bf16.msra.mxu0 0
  %124 = vmatprep.subr.bf16.mxu0 0
  %125 = vmatpush1.bf16.msra.mxu0 0
  %126 = vmatprep.subr.bf16.mxu0 0
  %127 = vmatpush1.bf16.msra.mxu0 0
  %128 = vmatprep.subr.bf16.mxu0 0
  %129 = vmatpush1.bf16.msra.mxu0 0
  %130 = vmatprep.subr.bf16.mxu0 0
  %131 = vmatpush1.bf16.msra.mxu0 0
  %132 = vmatprep.subr.bf16.mxu0 0
  %133 = vmatpush1.bf16.msra.mxu0 0
  %134 = vmatprep.subr.bf16.mxu0 0
  %135 = vmatpush1.bf16.msra.mxu0 0
  %136 = vmatprep.subr.bf16.mxu0 0
  %137 = vmatpush1.bf16.msra.mxu0 0
  %138 = vmatprep.mubr.bf16.mxu0 0
  %139 = vmatmul.mubr.bf16.gmra.mrb[0].mxu0 %v104
  %v140 = vpop.f32.mrb[0].mxu0
  %v141 = vadd.f32 0.0, %v140
  %v142 = vpop.f32.mrb[0].mxu0
  %v143 = vpop.f32.mrb[0].mxu0
  %v144 = vpop.f32.mrb[0].mxu0
  %145 = vdwg.mxu0
  %v146 = vadd.f32 %v22, %v141
  %v147 = vld [vmem:[#allocation3] sm:$0xff]
  %v148 = vxor.u32 %v84, 2147483648
  %v149 = vmul.f32 %v148, 1.442695
  %v150 = vpow.pop %v149
  %v151 = vadd.f32 %v150, 1.0
  %v152 = vrcp.pop %v151
  %v153 = vmul.f32 1.0, %v152
  %v154 = vtanh.pop %v84
  %156 = vrot.lane.b32.xlu0 %v147, 32
  %v157 = vpop.permute.xlu0 %156
  %v159 = vmul.f32 %v153, %v157
  %161 = vrot.lane.b32.xlu0 %v154, 64
  %v162 = vpop.permute.xlu0 %161
  %v164 = vmul.f32 %v153, %v162
  %166 = vrot.lane.b32.xlu0 %v164, 32
  %v167 = vpop.permute.xlu0 %166
  %v169 = vadd.f32 %v159, %v167
  %v170 = vtanh.pop %v169
  %172 = vrot.lane.b32.xlu0 %v170, 64
  %v173 = vpop.permute.xlu0 %172
  %v175 = vmul.f32 %v153, %v173
  %v176 = vld [vmem:[#allocation5] sm:$0xff]
  %v177 = vxor.u32 %v146, 2147483648
  %v178 = vmul.f32 %v177, 1.442695
  %v179 = vpow.pop %v178
  %v180 = vadd.f32 %v179, 1.0
  %v181 = vrcp.pop %v180
  %v182 = vmul.f32 1.0, %v181
  %v183 = vtanh.pop %v146
  %185 = vrot.lane.b32.xlu0 %v176, 32
  %v186 = vpop.permute.xlu0 %185
  %v188 = vmul.f32 %v182, %v186
  %190 = vrot.lane.b32.xlu0 %v183, 64
  %v191 = vpop.permute.xlu0 %190
  %v193 = vmul.f32 %v182, %v191
  %195 = vrot.lane.b32.xlu0 %v193, 32
  %v196 = vpop.permute.xlu0 %195
  %v198 = vadd.f32 %v188, %v196
  %v199 = vtanh.pop %v198
  %201 = vrot.lane.b32.xlu0 %v199, 64
  %v202 = vpop.permute.xlu0 %201
  %v204 = vmul.f32 %v182, %v202
  %206 = vrot.lane.b32.xlu0 %v175, 32
  %v207 = vpop.permute.xlu0 %206
  %209 = vst.msk [vmem:[#allocation2] sm:$0xff] %vm15, %v207
  %211 = vrot.lane.b32.xlu0 %v169, 96
  %v212 = vpop.permute.xlu0 %211
  %214 = vst.msk [vmem:[#allocation3] sm:$0xff] %vm15, %v212
  %216 = vrot.lane.b32.xlu0 %v204, 32
  %v217 = vpop.permute.xlu0 %216
  %219 = vst.msk [vmem:[#allocation4] sm:$0xff] %vm15, %v217
  %221 = vrot.lane.b32.xlu0 %v198, 96
  %v222 = vpop.permute.xlu0 %221
  %224 = vst.msk [vmem:[#allocation5] sm:$0xff] %vm15, %v222
  %225 = vst.msk [vmem:[%s3] sm:$0xff] %vm15, %v207
  %226 = vrot.lane.b32.xlu0 %v204, 64
  %v227 = vpop.permute.xlu0 %226
  %s229 = scalar_lea.vmem %s3, 56
  %vm230 = vcmask 523520
  %231 = vst.msk [vmem:[%s229] sm:$0xff] %vm230, %v227
  %s232 = scalar_lea.vmem %s0, 16
  %v233 = vld [vmem:[%s232] sm:$0xff]
  %s234 = scalar_lea.vmem %s0, 96
  %v235 = vld [vmem:[%s234 + $0x8] sm:$0xff]
  %v236 = vld [vmem:[#allocation2] sm:$0xff]
  %v237 = vpack.c.bf16 %v236, %v236
  %v238 = vld [vmem:[%s1] sm:$0xf]
  %v239 = vld [vmem:[%s1 + $0x4] sm:$0xf]
  %v240 = vld [vmem:[%s1 + $0x8] sm:$0xf]
  %v241 = vld [vmem:[%s1 + $0xc] sm:$0xf]
  %v246 = vunpack.c.l.b16 %v238
  %v247 = vunpack.c.l.b16 %v239
  %v248 = vunpack.c.l.b16 %v240
  %v249 = vunpack.c.l.b16 %v241
  %v250 = vpack.c.b16 %v247, %v246
  %v251 = vpack.c.b16 %v249, %v248
  %v255 = vsel %vm15, %v237, 0
  %257 = vmatprep.subr.bf16.mxu0 0
  %258 = vmatpush1.bf16.msra.mxu0 %v250
  %259 = vmatprep.subr.bf16.mxu0 0
  %260 = vmatpush1.bf16.msra.mxu0 %v251
  %261 = vmatprep.subr.bf16.mxu0 0
  %262 = vmatpush1.bf16.msra.mxu0 0
  %263 = vmatprep.subr.bf16.mxu0 0
  %264 = vmatpush1.bf16.msra.mxu0 0
  %265 = vmatprep.subr.bf16.mxu0 0
  %266 = vmatpush1.bf16.msra.mxu0 0
  %267 = vmatprep.subr.bf16.mxu0 0
  %268 = vmatpush1.bf16.msra.mxu0 0
  %269 = vmatprep.subr.bf16.mxu0 0
  %270 = vmatpush1.bf16.msra.mxu0 0
  %271 = vmatprep.subr.bf16.mxu0 0
  %272 = vmatpush1.bf16.msra.mxu0 0
  %273 = vmatprep.subr.bf16.mxu0 0
  %274 = vmatpush1.bf16.msra.mxu0 0
  %275 = vmatprep.subr.bf16.mxu0 0
  %276 = vmatpush1.bf16.msra.mxu0 0
  %277 = vmatprep.subr.bf16.mxu0 0
  %278 = vmatpush1.bf16.msra.mxu0 0
  %279 = vmatprep.subr.bf16.mxu0 0
  %280 = vmatpush1.bf16.msra.mxu0 0
  %281 = vmatprep.subr.bf16.mxu0 0
  %282 = vmatpush1.bf16.msra.mxu0 0
  %283 = vmatprep.subr.bf16.mxu0 0
  %284 = vmatpush1.bf16.msra.mxu0 0
  %285 = vmatprep.subr.bf16.mxu0 0
  %286 = vmatpush1.bf16.msra.mxu0 0
  %287 = vmatprep.subr.bf16.mxu0 0
  %288 = vmatpush1.bf16.msra.mxu0 0
  %289 = vmatprep.mubr.bf16.mxu0 0
  %290 = vmatmul.mubr.bf16.gmra.mrb[0].mxu0 %v255
  %v291 = vpop.f32.mrb[0].mxu0
  %v292 = vadd.f32 0.0, %v291
  %v293 = vpop.f32.mrb[0].mxu0
  %v294 = vpop.f32.mrb[0].mxu0
  %v295 = vpop.f32.mrb[0].mxu0
  %296 = vdwg.mxu0
  %v297 = vadd.f32 %v233, %v292
  %v298 = vld [vmem:[#allocation4] sm:$0xff]
  %v299 = vpack.c.bf16 %v298, %v298
  %v300 = vld [vmem:[%s2] sm:$0xf]
  %v301 = vld [vmem:[%s2 + $0x4] sm:$0xf]
  %v302 = vld [vmem:[%s2 + $0x8] sm:$0xf]
  %v303 = vld [vmem:[%s2 + $0xc] sm:$0xf]
  %v308 = vunpack.c.l.b16 %v300
  %v309 = vunpack.c.l.b16 %v301
  %v310 = vunpack.c.l.b16 %v302
  %v311 = vunpack.c.l.b16 %v303
  %v312 = vpack.c.b16 %v309, %v308
  %v313 = vpack.c.b16 %v311, %v310
  %v317 = vsel %vm15, %v299, 0
  %319 = vmatprep.subr.bf16.mxu0 0
  %320 = vmatpush1.bf16.msra.mxu0 %v312
  %321 = vmatprep.subr.bf16.mxu0 0
  %322 = vmatpush1.bf16.msra.mxu0 %v313
  %323 = vmatprep.subr.bf16.mxu0 0
  %324 = vmatpush1.bf16.msra.mxu0 0
  %325 = vmatprep.subr.bf16.mxu0 0
  %326 = vmatpush1.bf16.msra.mxu0 0
  %327 = vmatprep.subr.bf16.mxu0 0
  %328 = vmatpush1.bf16.msra.mxu0 0
  %329 = vmatprep.subr.bf16.mxu0 0
  %330 = vmatpush1.bf16.msra.mxu0 0
  %331 = vmatprep.subr.bf16.mxu0 0
  %332 = vmatpush1.bf16.msra.mxu0 0
  %333 = vmatprep.subr.bf16.mxu0 0
  %334 = vmatpush1.bf16.msra.mxu0 0
  %335 = vmatprep.subr.bf16.mxu0 0
  %336 = vmatpush1.bf16.msra.mxu0 0
  %337 = vmatprep.subr.bf16.mxu0 0
  %338 = vmatpush1.bf16.msra.mxu0 0
  %339 = vmatprep.subr.bf16.mxu0 0
  %340 = vmatpush1.bf16.msra.mxu0 0
  %341 = vmatprep.subr.bf16.mxu0 0
  %342 = vmatpush1.bf16.msra.mxu0 0
  %343 = vmatprep.subr.bf16.mxu0 0
  %344 = vmatpush1.bf16.msra.mxu0 0
  %345 = vmatprep.subr.bf16.mxu0 0
  %346 = vmatpush1.bf16.msra.mxu0 0
  %347 = vmatprep.subr.bf16.mxu0 0
  %348 = vmatpush1.bf16.msra.mxu0 0
  %349 = vmatprep.subr.bf16.mxu0 0
  %350 = vmatpush1.bf16.msra.mxu0 0
  %351 = vmatprep.mubr.bf16.mxu0 0
  %352 = vmatmul.mubr.bf16.gmra.mrb[0].mxu0 %v317
  %v353 = vpop.f32.mrb[0].mxu0
  %v354 = vadd.f32 0.0, %v353
  %v355 = vpop.f32.mrb[0].mxu0
  %v356 = vpop.f32.mrb[0].mxu0
  %v357 = vpop.f32.mrb[0].mxu0
  %358 = vdwg.mxu0
  %v359 = vadd.f32 %v235, %v354
  %v360 = vld [vmem:[#allocation3] sm:$0xff]
  %v361 = vxor.u32 %v297, 2147483648
  %v362 = vmul.f32 %v361, 1.442695
  %v363 = vpow.pop %v362
  %v364 = vadd.f32 %v363, 1.0
  %v365 = vrcp.pop %v364
  %v366 = vmul.f32 1.0, %v365
  %v367 = vtanh.pop %v297
  %369 = vrot.lane.b32.xlu0 %v360, 32
  %v370 = vpop.permute.xlu0 %369
  %v372 = vmul.f32 %v366, %v370
  %374 = vrot.lane.b32.xlu0 %v367, 64
  %v375 = vpop.permute.xlu0 %374
  %v377 = vmul.f32 %v366, %v375
  %379 = vrot.lane.b32.xlu0 %v377, 32
  %v380 = vpop.permute.xlu0 %379
  %v382 = vadd.f32 %v372, %v380
  %v383 = vtanh.pop %v382
  %385 = vrot.lane.b32.xlu0 %v383, 64
  %v386 = vpop.permute.xlu0 %385
  %v388 = vmul.f32 %v366, %v386
  %v389 = vld [vmem:[#allocation5] sm:$0xff]
  %v390 = vxor.u32 %v359, 2147483648
  %v391 = vmul.f32 %v390, 1.442695
  %v392 = vpow.pop %v391
  %v393 = vadd.f32 %v392, 1.0
  %v394 = vrcp.pop %v393
  %v395 = vmul.f32 1.0, %v394
  %v396 = vtanh.pop %v359
  %398 = vrot.lane.b32.xlu0 %v389, 32
  %v399 = vpop.permute.xlu0 %398
  %v401 = vmul.f32 %v395, %v399
  %403 = vrot.lane.b32.xlu0 %v396, 64
  %v404 = vpop.permute.xlu0 %403
  %v406 = vmul.f32 %v395, %v404
  %408 = vrot.lane.b32.xlu0 %v406, 32
  %v409 = vpop.permute.xlu0 %408
  %v411 = vadd.f32 %v401, %v409
  %v412 = vtanh.pop %v411
  %414 = vrot.lane.b32.xlu0 %v412, 64
  %v415 = vpop.permute.xlu0 %414
  %v417 = vmul.f32 %v395, %v415
  %419 = vrot.lane.b32.xlu0 %v388, 32
  %v420 = vpop.permute.xlu0 %419
  %422 = vst.msk [vmem:[#allocation2] sm:$0xff] %vm15, %v420
  %424 = vrot.lane.b32.xlu0 %v382, 96
  %v425 = vpop.permute.xlu0 %424
  %427 = vst.msk [vmem:[#allocation3] sm:$0xff] %vm15, %v425
  %429 = vrot.lane.b32.xlu0 %v417, 32
  %v430 = vpop.permute.xlu0 %429
  %432 = vst.msk [vmem:[#allocation4] sm:$0xff] %vm15, %v430
  %434 = vrot.lane.b32.xlu0 %v411, 96
  %v435 = vpop.permute.xlu0 %434
  %437 = vst.msk [vmem:[#allocation5] sm:$0xff] %vm15, %v435
  %s438 = scalar_lea.vmem %s3, 8
  %439 = vst.msk [vmem:[%s438] sm:$0xff] %vm15, %v420
  %440 = vrot.lane.b32.xlu0 %v417, 64
  %v441 = vpop.permute.xlu0 %440
  %s443 = scalar_lea.vmem %s3, 48
  %444 = vst.msk [vmem:[%s443] sm:$0xff] %vm230, %v441
  %s445 = scalar_lea.vmem %s0, 32
  %v446 = vld [vmem:[%s445] sm:$0xff]
  %s447 = scalar_lea.vmem %s0, 80
  %v448 = vld [vmem:[%s447 + $0x8] sm:$0xff]
  %v449 = vld [vmem:[#allocation2] sm:$0xff]
  %v450 = vpack.c.bf16 %v449, %v449
  %v451 = vld [vmem:[%s1] sm:$0xf]
  %v452 = vld [vmem:[%s1 + $0x4] sm:$0xf]
  %v453 = vld [vmem:[%s1 + $0x8] sm:$0xf]
  %v454 = vld [vmem:[%s1 + $0xc] sm:$0xf]
  %v459 = vunpack.c.l.b16 %v451
  %v460 = vunpack.c.l.b16 %v452
  %v461 = vunpack.c.l.b16 %v453
  %v462 = vunpack.c.l.b16 %v454
  %v463 = vpack.c.b16 %v460, %v459
  %v464 = vpack.c.b16 %v462, %v461
  %v468 = vsel %vm15, %v450, 0
  %470 = vmatprep.subr.bf16.mxu0 0
  %471 = vmatpush1.bf16.msra.mxu0 %v463
  %472 = vmatprep.subr.bf16.mxu0 0
  %473 = vmatpush1.bf16.msra.mxu0 %v464
  %474 = vmatprep.subr.bf16.mxu0 0
  %475 = vmatpush1.bf16.msra.mxu0 0
  %476 = vmatprep.subr.bf16.mxu0 0
  %477 = vmatpush1.bf16.msra.mxu0 0
  %478 = vmatprep.subr.bf16.mxu0 0
  %479 = vmatpush1.bf16.msra.mxu0 0
  %480 = vmatprep.subr.bf16.mxu0 0
  %481 = vmatpush1.bf16.msra.mxu0 0
  %482 = vmatprep.subr.bf16.mxu0 0
  %483 = vmatpush1.bf16.msra.mxu0 0
  %484 = vmatprep.subr.bf16.mxu0 0
  %485 = vmatpush1.bf16.msra.mxu0 0
  %486 = vmatprep.subr.bf16.mxu0 0
  %487 = vmatpush1.bf16.msra.mxu0 0
  %488 = vmatprep.subr.bf16.mxu0 0
  %489 = vmatpush1.bf16.msra.mxu0 0
  %490 = vmatprep.subr.bf16.mxu0 0
  %491 = vmatpush1.bf16.msra.mxu0 0
  %492 = vmatprep.subr.bf16.mxu0 0
  %493 = vmatpush1.bf16.msra.mxu0 0
  %494 = vmatprep.subr.bf16.mxu0 0
  %495 = vmatpush1.bf16.msra.mxu0 0
  %496 = vmatprep.subr.bf16.mxu0 0
  %497 = vmatpush1.bf16.msra.mxu0 0
  %498 = vmatprep.subr.bf16.mxu0 0
  %499 = vmatpush1.bf16.msra.mxu0 0
  %500 = vmatprep.subr.bf16.mxu0 0
  %501 = vmatpush1.bf16.msra.mxu0 0
  %502 = vmatprep.mubr.bf16.mxu0 0
  %503 = vmatmul.mubr.bf16.gmra.mrb[0].mxu0 %v468
  %v504 = vpop.f32.mrb[0].mxu0
  %v505 = vadd.f32 0.0, %v504
  %v506 = vpop.f32.mrb[0].mxu0
  %v507 = vpop.f32.mrb[0].mxu0
  %v508 = vpop.f32.mrb[0].mxu0
  %509 = vdwg.mxu0
  %v510 = vadd.f32 %v446, %v505
  %v511 = vld [vmem:[#allocation4] sm:$0xff]
  %v512 = vpack.c.bf16 %v511, %v511
  %v513 = vld [vmem:[%s2] sm:$0xf]
  %v514 = vld [vmem:[%s2 + $0x4] sm:$0xf]
  %v515 = vld [vmem:[%s2 + $0x8] sm:$0xf]
  %v516 = vld [vmem:[%s2 + $0xc] sm:$0xf]
  %v521 = vunpack.c.l.b16 %v513
  %v522 = vunpack.c.l.b16 %v514
  %v523 = vunpack.c.l.b16 %v515
  %v524 = vunpack.c.l.b16 %v516
  %v525 = vpack.c.b16 %v522, %v521
  %v526 = vpack.c.b16 %v524, %v523
  %v530 = vsel %vm15, %v512, 0
  %532 = vmatprep.subr.bf16.mxu0 0
  %533 = vmatpush1.bf16.msra.mxu0 %v525
  %534 = vmatprep.subr.bf16.mxu0 0
  %535 = vmatpush1.bf16.msra.mxu0 %v526
  %536 = vmatprep.subr.bf16.mxu0 0
  %537 = vmatpush1.bf16.msra.mxu0 0
  %538 = vmatprep.subr.bf16.mxu0 0
  %539 = vmatpush1.bf16.msra.mxu0 0
  %540 = vmatprep.subr.bf16.mxu0 0
  %541 = vmatpush1.bf16.msra.mxu0 0
  %542 = vmatprep.subr.bf16.mxu0 0
  %543 = vmatpush1.bf16.msra.mxu0 0
  %544 = vmatprep.subr.bf16.mxu0 0
  %545 = vmatpush1.bf16.msra.mxu0 0
  %546 = vmatprep.subr.bf16.mxu0 0
  %547 = vmatpush1.bf16.msra.mxu0 0
  %548 = vmatprep.subr.bf16.mxu0 0
  %549 = vmatpush1.bf16.msra.mxu0 0
  %550 = vmatprep.subr.bf16.mxu0 0
  %551 = vmatpush1.bf16.msra.mxu0 0
  %552 = vmatprep.subr.bf16.mxu0 0
  %553 = vmatpush1.bf16.msra.mxu0 0
  %554 = vmatprep.subr.bf16.mxu0 0
  %555 = vmatpush1.bf16.msra.mxu0 0
  %556 = vmatprep.subr.bf16.mxu0 0
  %557 = vmatpush1.bf16.msra.mxu0 0
  %558 = vmatprep.subr.bf16.mxu0 0
  %559 = vmatpush1.bf16.msra.mxu0 0
  %560 = vmatprep.subr.bf16.mxu0 0
  %561 = vmatpush1.bf16.msra.mxu0 0
  %562 = vmatprep.subr.bf16.mxu0 0
  %563 = vmatpush1.bf16.msra.mxu0 0
  %564 = vmatprep.mubr.bf16.mxu0 0
  %565 = vmatmul.mubr.bf16.gmra.mrb[0].mxu0 %v530
  %v566 = vpop.f32.mrb[0].mxu0
  %v567 = vadd.f32 0.0, %v566
  %v568 = vpop.f32.mrb[0].mxu0
  %v569 = vpop.f32.mrb[0].mxu0
  %v570 = vpop.f32.mrb[0].mxu0
  %571 = vdwg.mxu0
  %v572 = vadd.f32 %v448, %v567
  %v573 = vld [vmem:[#allocation3] sm:$0xff]
  %v574 = vxor.u32 %v510, 2147483648
  %v575 = vmul.f32 %v574, 1.442695
  %v576 = vpow.pop %v575
  %v577 = vadd.f32 %v576, 1.0
  %v578 = vrcp.pop %v577
  %v579 = vmul.f32 1.0, %v578
  %v580 = vtanh.pop %v510
  %582 = vrot.lane.b32.xlu0 %v573, 32
  %v583 = vpop.permute.xlu0 %582
  %v585 = vmul.f32 %v579, %v583
  %587 = vrot.lane.b32.xlu0 %v580, 64
  %v588 = vpop.permute.xlu0 %587
  %v590 = vmul.f32 %v579, %v588
  %592 = vrot.lane.b32.xlu0 %v590, 32
  %v593 = vpop.permute.xlu0 %592
  %v595 = vadd.f32 %v585, %v593
  %v596 = vtanh.pop %v595
  %598 = vrot.lane.b32.xlu0 %v596, 64
  %v599 = vpop.permute.xlu0 %598
  %v601 = vmul.f32 %v579, %v599
  %v602 = vld [vmem:[#allocation5] sm:$0xff]
  %v603 = vxor.u32 %v572, 2147483648
  %v604 = vmul.f32 %v603, 1.442695
  %v605 = vpow.pop %v604
  %v606 = vadd.f32 %v605, 1.0
  %v607 = vrcp.pop %v606
  %v608 = vmul.f32 1.0, %v607
  %v609 = vtanh.pop %v572
  %611 = vrot.lane.b32.xlu0 %v602, 32
  %v612 = vpop.permute.xlu0 %611
  %v614 = vmul.f32 %v608, %v612
  %616 = vrot.lane.b32.xlu0 %v609, 64
  %v617 = vpop.permute.xlu0 %616
  %v619 = vmul.f32 %v608, %v617
  %621 = vrot.lane.b32.xlu0 %v619, 32
  %v622 = vpop.permute.xlu0 %621
  %v624 = vadd.f32 %v614, %v622
  %v625 = vtanh.pop %v624
  %627 = vrot.lane.b32.xlu0 %v625, 64
  %v628 = vpop.permute.xlu0 %627
  %v630 = vmul.f32 %v608, %v628
  %632 = vrot.lane.b32.xlu0 %v601, 32
  %v633 = vpop.permute.xlu0 %632
  %635 = vst.msk [vmem:[#allocation2] sm:$0xff] %vm15, %v633
  %637 = vrot.lane.b32.xlu0 %v595, 96
  %v638 = vpop.permute.xlu0 %637
  %640 = vst.msk [vmem:[#allocation3] sm:$0xff] %vm15, %v638
  %642 = vrot.lane.b32.xlu0 %v630, 32
  %v643 = vpop.permute.xlu0 %642
  %645 = vst.msk [vmem:[#allocation4] sm:$0xff] %vm15, %v643
  %647 = vrot.lane.b32.xlu0 %v624, 96
  %v648 = vpop.permute.xlu0 %647
  %650 = vst.msk [vmem:[#allocation5] sm:$0xff] %vm15, %v648
  %s651 = scalar_lea.vmem %s3, 16
  %652 = vst.msk [vmem:[%s651] sm:$0xff] %vm15, %v633
  %653 = vrot.lane.b32.xlu0 %v630, 64
  %v654 = vpop.permute.xlu0 %653
  %s656 = scalar_lea.vmem %s3, 40
  %657 = vst.msk [vmem:[%s656] sm:$0xff] %vm230, %v654
  %s658 = scalar_lea.vmem %s0, 48
  %v659 = vld [vmem:[%s658] sm:$0xff]
  %s660 = scalar_lea.vmem %s0, 64
  %v661 = vld [vmem:[%s660 + $0x8] sm:$0xff]
  %v662 = vld [vmem:[#allocation2] sm:$0xff]
  %v663 = vpack.c.bf16 %v662, %v662
  %v664 = vld [vmem:[%s1] sm:$0xf]
  %v665 = vld [vmem:[%s1 + $0x4] sm:$0xf]
  %v666 = vld [vmem:[%s1 + $0x8] sm:$0xf]
  %v667 = vld [vmem:[%s1 + $0xc] sm:$0xf]
  %v672 = vunpack.c.l.b16 %v664
  %v673 = vunpack.c.l.b16 %v665
  %v674 = vunpack.c.l.b16 %v666
  %v675 = vunpack.c.l.b16 %v667
  %v676 = vpack.c.b16 %v673, %v672
  %v677 = vpack.c.b16 %v675, %v674
  %v681 = vsel %vm15, %v663, 0
  %683 = vmatprep.subr.bf16.mxu0 0
  %684 = vmatpush1.bf16.msra.mxu0 %v676
  %685 = vmatprep.subr.bf16.mxu0 0
  %686 = vmatpush1.bf16.msra.mxu0 %v677
  %687 = vmatprep.subr.bf16.mxu0 0
  %688 = vmatpush1.bf16.msra.mxu0 0
  %689 = vmatprep.subr.bf16.mxu0 0
  %690 = vmatpush1.bf16.msra.mxu0 0
  %691 = vmatprep.subr.bf16.mxu0 0
  %692 = vmatpush1.bf16.msra.mxu0 0
  %693 = vmatprep.subr.bf16.mxu0 0
  %694 = vmatpush1.bf16.msra.mxu0 0
  %695 = vmatprep.subr.bf16.mxu0 0
  %696 = vmatpush1.bf16.msra.mxu0 0
  %697 = vmatprep.subr.bf16.mxu0 0
  %698 = vmatpush1.bf16.msra.mxu0 0
  %699 = vmatprep.subr.bf16.mxu0 0
  %700 = vmatpush1.bf16.msra.mxu0 0
  %701 = vmatprep.subr.bf16.mxu0 0
  %702 = vmatpush1.bf16.msra.mxu0 0
  %703 = vmatprep.subr.bf16.mxu0 0
  %704 = vmatpush1.bf16.msra.mxu0 0
  %705 = vmatprep.subr.bf16.mxu0 0
  %706 = vmatpush1.bf16.msra.mxu0 0
  %707 = vmatprep.subr.bf16.mxu0 0
  %708 = vmatpush1.bf16.msra.mxu0 0
  %709 = vmatprep.subr.bf16.mxu0 0
  %710 = vmatpush1.bf16.msra.mxu0 0
  %711 = vmatprep.subr.bf16.mxu0 0
  %712 = vmatpush1.bf16.msra.mxu0 0
  %713 = vmatprep.subr.bf16.mxu0 0
  %714 = vmatpush1.bf16.msra.mxu0 0
  %715 = vmatprep.mubr.bf16.mxu0 0
  %716 = vmatmul.mubr.bf16.gmra.mrb[0].mxu0 %v681
  %v717 = vpop.f32.mrb[0].mxu0
  %v718 = vadd.f32 0.0, %v717
  %v719 = vpop.f32.mrb[0].mxu0
  %v720 = vpop.f32.mrb[0].mxu0
  %v721 = vpop.f32.mrb[0].mxu0
  %722 = vdwg.mxu0
  %v723 = vadd.f32 %v659, %v718
  %v724 = vld [vmem:[#allocation4] sm:$0xff]
  %v725 = vpack.c.bf16 %v724, %v724
  %v726 = vld [vmem:[%s2] sm:$0xf]
  %v727 = vld [vmem:[%s2 + $0x4] sm:$0xf]
  %v728 = vld [vmem:[%s2 + $0x8] sm:$0xf]
  %v729 = vld [vmem:[%s2 + $0xc] sm:$0xf]
  %v734 = vunpack.c.l.b16 %v726
  %v735 = vunpack.c.l.b16 %v727
  %v736 = vunpack.c.l.b16 %v728
  %v737 = vunpack.c.l.b16 %v729
  %v738 = vpack.c.b16 %v735, %v734
  %v739 = vpack.c.b16 %v737, %v736
  %v743 = vsel %vm15, %v725, 0
  %745 = vmatprep.subr.bf16.mxu0 0
  %746 = vmatpush1.bf16.msra.mxu0 %v738
  %747 = vmatprep.subr.bf16.mxu0 0
  %748 = vmatpush1.bf16.msra.mxu0 %v739
  %749 = vmatprep.subr.bf16.mxu0 0
  %750 = vmatpush1.bf16.msra.mxu0 0
  %751 = vmatprep.subr.bf16.mxu0 0
  %752 = vmatpush1.bf16.msra.mxu0 0
  %753 = vmatprep.subr.bf16.mxu0 0
  %754 = vmatpush1.bf16.msra.mxu0 0
  %755 = vmatprep.subr.bf16.mxu0 0
  %756 = vmatpush1.bf16.msra.mxu0 0
  %757 = vmatprep.subr.bf16.mxu0 0
  %758 = vmatpush1.bf16.msra.mxu0 0
  %759 = vmatprep.subr.bf16.mxu0 0
  %760 = vmatpush1.bf16.msra.mxu0 0
  %761 = vmatprep.subr.bf16.mxu0 0
  %762 = vmatpush1.bf16.msra.mxu0 0
  %763 = vmatprep.subr.bf16.mxu0 0
  %764 = vmatpush1.bf16.msra.mxu0 0
  %765 = vmatprep.subr.bf16.mxu0 0
  %766 = vmatpush1.bf16.msra.mxu0 0
  %767 = vmatprep.subr.bf16.mxu0 0
  %768 = vmatpush1.bf16.msra.mxu0 0
  %769 = vmatprep.subr.bf16.mxu0 0
  %770 = vmatpush1.bf16.msra.mxu0 0
  %771 = vmatprep.subr.bf16.mxu0 0
  %772 = vmatpush1.bf16.msra.mxu0 0
  %773 = vmatprep.subr.bf16.mxu0 0
  %774 = vmatpush1.bf16.msra.mxu0 0
  %775 = vmatprep.subr.bf16.mxu0 0
  %776 = vmatpush1.bf16.msra.mxu0 0
  %777 = vmatprep.mubr.bf16.mxu0 0
  %778 = vmatmul.mubr.bf16.gmra.mrb[0].mxu0 %v743
  %v779 = vpop.f32.mrb[0].mxu0
  %v780 = vadd.f32 0.0, %v779
  %v781 = vpop.f32.mrb[0].mxu0
  %v782 = vpop.f32.mrb[0].mxu0
  %v783 = vpop.f32.mrb[0].mxu0
  %784 = vdwg.mxu0
  %v785 = vadd.f32 %v661, %v780
  %v786 = vld [vmem:[#allocation3] sm:$0xff]
  %v787 = vxor.u32 %v723, 2147483648
  %v788 = vmul.f32 %v787, 1.442695
  %v789 = vpow.pop %v788
  %v790 = vadd.f32 %v789, 1.0
  %v791 = vrcp.pop %v790
  %v792 = vmul.f32 1.0, %v791
  %v793 = vtanh.pop %v723
  %795 = vrot.lane.b32.xlu0 %v786, 32
  %v796 = vpop.permute.xlu0 %795
  %v798 = vmul.f32 %v792, %v796
  %800 = vrot.lane.b32.xlu0 %v793, 64
  %v801 = vpop.permute.xlu0 %800
  %v803 = vmul.f32 %v792, %v801
  %805 = vrot.lane.b32.xlu0 %v803, 32
  %v806 = vpop.permute.xlu0 %805
  %v808 = vadd.f32 %v798, %v806
  %v809 = vtanh.pop %v808
  %811 = vrot.lane.b32.xlu0 %v809, 64
  %v812 = vpop.permute.xlu0 %811
  %v814 = vmul.f32 %v792, %v812
  %v815 = vld [vmem:[#allocation5] sm:$0xff]
  %v816 = vxor.u32 %v785, 2147483648
  %v817 = vmul.f32 %v816, 1.442695
  %v818 = vpow.pop %v817
  %v819 = vadd.f32 %v818, 1.0
  %v820 = vrcp.pop %v819
  %v821 = vmul.f32 1.0, %v820
  %v822 = vtanh.pop %v785
  %824 = vrot.lane.b32.xlu0 %v815, 32
  %v825 = vpop.permute.xlu0 %824
  %v827 = vmul.f32 %v821, %v825
  %829 = vrot.lane.b32.xlu0 %v822, 64
  %v830 = vpop.permute.xlu0 %829
  %v832 = vmul.f32 %v821, %v830
  %834 = vrot.lane.b32.xlu0 %v832, 32
  %v835 = vpop.permute.xlu0 %834
  %v837 = vadd.f32 %v827, %v835
  %v838 = vtanh.pop %v837
  %840 = vrot.lane.b32.xlu0 %v838, 64
  %v841 = vpop.permute.xlu0 %840
  %v843 = vmul.f32 %v821, %v841
  %845 = vrot.lane.b32.xlu0 %v814, 32
  %v846 = vpop.permute.xlu0 %845
  %848 = vst.msk [vmem:[#allocation2] sm:$0xff] %vm15, %v846
  %850 = vrot.lane.b32.xlu0 %v808, 96
  %v851 = vpop.permute.xlu0 %850
  %853 = vst.msk [vmem:[#allocation3] sm:$0xff] %vm15, %v851
  %855 = vrot.lane.b32.xlu0 %v843, 32
  %v856 = vpop.permute.xlu0 %855
  %858 = vst.msk [vmem:[#allocation4] sm:$0xff] %vm15, %v856
  %860 = vrot.lane.b32.xlu0 %v837, 96
  %v861 = vpop.permute.xlu0 %860
  %863 = vst.msk [vmem:[#allocation5] sm:$0xff] %vm15, %v861
  %s864 = scalar_lea.vmem %s3, 24
  %865 = vst.msk [vmem:[%s864] sm:$0xff] %vm15, %v846
  %866 = vrot.lane.b32.xlu0 %v843, 64
  %v867 = vpop.permute.xlu0 %866
  %s869 = scalar_lea.vmem %s3, 32
  %870 = vst.msk [vmem:[%s869] sm:$0xff] %vm230, %v867
  %v871 = vld [vmem:[%s660] sm:$0xff]
  %v872 = vld [vmem:[%s658 + $0x8] sm:$0xff]
  %v873 = vld [vmem:[#allocation2] sm:$0xff]
  %v874 = vpack.c.bf16 %v873, %v873
  %v875 = vld [vmem:[%s1] sm:$0xf]
  %v876 = vld [vmem:[%s1 + $0x4] sm:$0xf]
  %v877 = vld [vmem:[%s1 + $0x8] sm:$0xf]
  %v878 = vld [vmem:[%s1 + $0xc] sm:$0xf]
  %v883 = vunpack.c.l.b16 %v875
  %v884 = vunpack.c.l.b16 %v876
  %v885 = vunpack.c.l.b16 %v877
  %v886 = vunpack.c.l.b16 %v878
  %v887 = vpack.c.b16 %v884, %v883
  %v888 = vpack.c.b16 %v886, %v885
  %v892 = vsel %vm15, %v874, 0
  %894 = vmatprep.subr.bf16.mxu0 0
  %895 = vmatpush1.bf16.msra.mxu0 %v887
  %896 = vmatprep.subr.bf16.mxu0 0
  %897 = vmatpush1.bf16.msra.mxu0 %v888
  %898 = vmatprep.subr.bf16.mxu0 0
  %899 = vmatpush1.bf16.msra.mxu0 0
  %900 = vmatprep.subr.bf16.mxu0 0
  %901 = vmatpush1.bf16.msra.mxu0 0
  %902 = vmatprep.subr.bf16.mxu0 0
  %903 = vmatpush1.bf16.msra.mxu0 0
  %904 = vmatprep.subr.bf16.mxu0 0
  %905 = vmatpush1.bf16.msra.mxu0 0
  %906 = vmatprep.subr.bf16.mxu0 0
  %907 = vmatpush1.bf16.msra.mxu0 0
  %908 = vmatprep.subr.bf16.mxu0 0
  %909 = vmatpush1.bf16.msra.mxu0 0
  %910 = vmatprep.subr.bf16.mxu0 0
  %911 = vmatpush1.bf16.msra.mxu0 0
  %912 = vmatprep.subr.bf16.mxu0 0
  %913 = vmatpush1.bf16.msra.mxu0 0
  %914 = vmatprep.subr.bf16.mxu0 0
  %915 = vmatpush1.bf16.msra.mxu0 0
  %916 = vmatprep.subr.bf16.mxu0 0
  %917 = vmatpush1.bf16.msra.mxu0 0
  %918 = vmatprep.subr.bf16.mxu0 0
  %919 = vmatpush1.bf16.msra.mxu0 0
  %920 = vmatprep.subr.bf16.mxu0 0
  %921 = vmatpush1.bf16.msra.mxu0 0
  %922 = vmatprep.subr.bf16.mxu0 0
  %923 = vmatpush1.bf16.msra.mxu0 0
  %924 = vmatprep.subr.bf16.mxu0 0
  %925 = vmatpush1.bf16.msra.mxu0 0
  %926 = vmatprep.mubr.bf16.mxu0 0
  %927 = vmatmul.mubr.bf16.gmra.mrb[0].mxu0 %v892
  %v928 = vpop.f32.mrb[0].mxu0
  %v929 = vadd.f32 0.0, %v928
  %v930 = vpop.f32.mrb[0].mxu0
  %v931 = vpop.f32.mrb[0].mxu0
  %v932 = vpop.f32.mrb[0].mxu0
  %933 = vdwg.mxu0
  %v934 = vadd.f32 %v871, %v929
  %v935 = vld [vmem:[#allocation4] sm:$0xff]
  %v936 = vpack.c.bf16 %v935, %v935
  %v937 = vld [vmem:[%s2] sm:$0xf]
  %v938 = vld [vmem:[%s2 + $0x4] sm:$0xf]
  %v939 = vld [vmem:[%s2 + $0x8] sm:$0xf]
  %v940 = vld [vmem:[%s2 + $0xc] sm:$0xf]
  %v945 = vunpack.c.l.b16 %v937
  %v946 = vunpack.c.l.b16 %v938
  %v947 = vunpack.c.l.b16 %v939
  %v948 = vunpack.c.l.b16 %v940
  %v949 = vpack.c.b16 %v946, %v945
  %v950 = vpack.c.b16 %v948, %v947
  %v954 = vsel %vm15, %v936, 0
  %956 = vmatprep.subr.bf16.mxu0 0
  %957 = vmatpush1.bf16.msra.mxu0 %v949
  %958 = vmatprep.subr.bf16.mxu0 0
  %959 = vmatpush1.bf16.msra.mxu0 %v950
  %960 = vmatprep.subr.bf16.mxu0 0
  %961 = vmatpush1.bf16.msra.mxu0 0
  %962 = vmatprep.subr.bf16.mxu0 0
  %963 = vmatpush1.bf16.msra.mxu0 0
  %964 = vmatprep.subr.bf16.mxu0 0
  %965 = vmatpush1.bf16.msra.mxu0 0
  %966 = vmatprep.subr.bf16.mxu0 0
  %967 = vmatpush1.bf16.msra.mxu0 0
  %968 = vmatprep.subr.bf16.mxu0 0
  %969 = vmatpush1.bf16.msra.mxu0 0
  %970 = vmatprep.subr.bf16.mxu0 0
  %971 = vmatpush1.bf16.msra.mxu0 0
  %972 = vmatprep.subr.bf16.mxu0 0
  %973 = vmatpush1.bf16.msra.mxu0 0
  %974 = vmatprep.subr.bf16.mxu0 0
  %975 = vmatpush1.bf16.msra.mxu0 0
  %976 = vmatprep.subr.bf16.mxu0 0
  %977 = vmatpush1.bf16.msra.mxu0 0
  %978 = vmatprep.subr.bf16.mxu0 0
  %979 = vmatpush1.bf16.msra.mxu0 0
  %980 = vmatprep.subr.bf16.mxu0 0
  %981 = vmatpush1.bf16.msra.mxu0 0
  %982 = vmatprep.subr.bf16.mxu0 0
  %983 = vmatpush1.bf16.msra.mxu0 0
  %984 = vmatprep.subr.bf16.mxu0 0
  %985 = vmatpush1.bf16.msra.mxu0 0
  %986 = vmatprep.subr.bf16.mxu0 0
  %987 = vmatpush1.bf16.msra.mxu0 0
  %988 = vmatprep.mubr.bf16.mxu0 0
  %989 = vmatmul.mubr.bf16.gmra.mrb[0].mxu0 %v954
  %v990 = vpop.f32.mrb[0].mxu0
  %v991 = vadd.f32 0.0, %v990
  %v992 = vpop.f32.mrb[0].mxu0
  %v993 = vpop.f32.mrb[0].mxu0
  %v994 = vpop.f32.mrb[0].mxu0
  %995 = vdwg.mxu0
  %v996 = vadd.f32 %v872, %v991
  %v997 = vld [vmem:[#allocation3] sm:$0xff]
  %v998 = vxor.u32 %v934, 2147483648
  %v999 = vmul.f32 %v998, 1.442695
  %v1000 = vpow.pop %v999
  %v1001 = vadd.f32 %v1000, 1.0
  %v1002 = vrcp.pop %v1001
  %v1003 = vmul.f32 1.0, %v1002
  %v1004 = vtanh.pop %v934
  %1006 = vrot.lane.b32.xlu0 %v997, 32
  %v1007 = vpop.permute.xlu0 %1006
  %v1009 = vmul.f32 %v1003, %v1007
  %1011 = vrot.lane.b32.xlu0 %v1004, 64
  %v1012 = vpop.permute.xlu0 %1011
  %v1014 = vmul.f32 %v1003, %v1012
  %1016 = vrot.lane.b32.xlu0 %v1014, 32
  %v1017 = vpop.permute.xlu0 %1016
  %v1019 = vadd.f32 %v1009, %v1017
  %v1020 = vtanh.pop %v1019
  %1022 = vrot.lane.b32.xlu0 %v1020, 64
  %v1023 = vpop.permute.xlu0 %1022
  %v1025 = vmul.f32 %v1003, %v1023
  %v1026 = vld [vmem:[#allocation5] sm:$0xff]
  %v1027 = vxor.u32 %v996, 2147483648
  %v1028 = vmul.f32 %v1027, 1.442695
  %v1029 = vpow.pop %v1028
  %v1030 = vadd.f32 %v1029, 1.0
  %v1031 = vrcp.pop %v1030
  %v1032 = vmul.f32 1.0, %v1031
  %v1033 = vtanh.pop %v996
  %1035 = vrot.lane.b32.xlu0 %v1026, 32
  %v1036 = vpop.permute.xlu0 %1035
  %v1038 = vmul.f32 %v1032, %v1036
  %1040 = vrot.lane.b32.xlu0 %v1033, 64
  %v1041 = vpop.permute.xlu0 %1040
  %v1043 = vmul.f32 %v1032, %v1041
  %1045 = vrot.lane.b32.xlu0 %v1043, 32
  %v1046 = vpop.permute.xlu0 %1045
  %v1048 = vadd.f32 %v1038, %v1046
  %v1049 = vtanh.pop %v1048
  %1051 = vrot.lane.b32.xlu0 %v1049, 64
  %v1052 = vpop.permute.xlu0 %1051
  %v1054 = vmul.f32 %v1032, %v1052
  %1056 = vrot.lane.b32.xlu0 %v1025, 32
  %v1057 = vpop.permute.xlu0 %1056
  %1059 = vst.msk [vmem:[#allocation2] sm:$0xff] %vm15, %v1057
  %1061 = vrot.lane.b32.xlu0 %v1019, 96
  %v1062 = vpop.permute.xlu0 %1061
  %1064 = vst.msk [vmem:[#allocation3] sm:$0xff] %vm15, %v1062
  %1066 = vrot.lane.b32.xlu0 %v1054, 32
  %v1067 = vpop.permute.xlu0 %1066
  %1069 = vst.msk [vmem:[#allocation4] sm:$0xff] %vm15, %v1067
  %1071 = vrot.lane.b32.xlu0 %v1048, 96
  %v1072 = vpop.permute.xlu0 %1071
  %1074 = vst.msk [vmem:[#allocation5] sm:$0xff] %vm15, %v1072
  %1075 = vst.msk [vmem:[%s869] sm:$0xff] %vm15, %v1057
  %1076 = vrot.lane.b32.xlu0 %v1054, 64
  %v1077 = vpop.permute.xlu0 %1076
  %1079 = vst.msk [vmem:[%s864] sm:$0xff] %vm230, %v1077
  %v1080 = vld [vmem:[%s447] sm:$0xff]
  %v1081 = vld [vmem:[%s445 + $0x8] sm:$0xff]
  %v1082 = vld [vmem:[#allocation2] sm:$0xff]
  %v1083 = vpack.c.bf16 %v1082, %v1082
  %v1084 = vld [vmem:[%s1] sm:$0xf]
  %v1085 = vld [vmem:[%s1 + $0x4] sm:$0xf]
  %v1086 = vld [vmem:[%s1 + $0x8] sm:$0xf]
  %v1087 = vld [vmem:[%s1 + $0xc] sm:$0xf]
  %v1092 = vunpack.c.l.b16 %v1084
  %v1093 = vunpack.c.l.b16 %v1085
  %v1094 = vunpack.c.l.b16 %v1086
  %v1095 = vunpack.c.l.b16 %v1087
  %v1096 = vpack.c.b16 %v1093, %v1092
  %v1097 = vpack.c.b16 %v1095, %v1094
  %v1101 = vsel %vm15, %v1083, 0
  %1103 = vmatprep.subr.bf16.mxu0 0
  %1104 = vmatpush1.bf16.msra.mxu0 %v1096
  %1105 = vmatprep.subr.bf16.mxu0 0
  %1106 = vmatpush1.bf16.msra.mxu0 %v1097
  %1107 = vmatprep.subr.bf16.mxu0 0
  %1108 = vmatpush1.bf16.msra.mxu0 0
  %1109 = vmatprep.subr.bf16.mxu0 0
  %1110 = vmatpush1.bf16.msra.mxu0 0
  %1111 = vmatprep.subr.bf16.mxu0 0
  %1112 = vmatpush1.bf16.msra.mxu0 0
  %1113 = vmatprep.subr.bf16.mxu0 0
  %1114 = vmatpush1.bf16.msra.mxu0 0
  %1115 = vmatprep.subr.bf16.mxu0 0
  %1116 = vmatpush1.bf16.msra.mxu0 0
  %1117 = vmatprep.subr.bf16.mxu0 0
  %1118 = vmatpush1.bf16.msra.mxu0 0
  %1119 = vmatprep.subr.bf16.mxu0 0
  %1120 = vmatpush1.bf16.msra.mxu0 0
  %1121 = vmatprep.subr.bf16.mxu0 0
  %1122 = vmatpush1.bf16.msra.mxu0 0
  %1123 = vmatprep.subr.bf16.mxu0 0
  %1124 = vmatpush1.bf16.msra.mxu0 0
  %1125 = vmatprep.subr.bf16.mxu0 0
  %1126 = vmatpush1.bf16.msra.mxu0 0
  %1127 = vmatprep.subr.bf16.mxu0 0
  %1128 = vmatpush1.bf16.msra.mxu0 0
  %1129 = vmatprep.subr.bf16.mxu0 0
  %1130 = vmatpush1.bf16.msra.mxu0 0
  %1131 = vmatprep.subr.bf16.mxu0 0
  %1132 = vmatpush1.bf16.msra.mxu0 0
  %1133 = vmatprep.subr.bf16.mxu0 0
  %1134 = vmatpush1.bf16.msra.mxu0 0
  %1135 = vmatprep.mubr.bf16.mxu0 0
  %1136 = vmatmul.mubr.bf16.gmra.mrb[0].mxu0 %v1101
  %v1137 = vpop.f32.mrb[0].mxu0
  %v1138 = vadd.f32 0.0, %v1137
  %v1139 = vpop.f32.mrb[0].mxu0
  %v1140 = vpop.f32.mrb[0].mxu0
  %v1141 = vpop.f32.mrb[0].mxu0
  %1142 = vdwg.mxu0
  %v1143 = vadd.f32 %v1080, %v1138
  %v1144 = vld [vmem:[#allocation4] sm:$0xff]
  %v1145 = vpack.c.bf16 %v1144, %v1144
  %v1146 = vld [vmem:[%s2] sm:$0xf]
  %v1147 = vld [vmem:[%s2 + $0x4] sm:$0xf]
  %v1148 = vld [vmem:[%s2 + $0x8] sm:$0xf]
  %v1149 = vld [vmem:[%s2 + $0xc] sm:$0xf]
  %v1154 = vunpack.c.l.b16 %v1146
  %v1155 = vunpack.c.l.b16 %v1147
  %v1156 = vunpack.c.l.b16 %v1148
  %v1157 = vunpack.c.l.b16 %v1149
  %v1158 = vpack.c.b16 %v1155, %v1154
  %v1159 = vpack.c.b16 %v1157, %v1156
  %v1163 = vsel %vm15, %v1145, 0
  %1165 = vmatprep.subr.bf16.mxu0 0
  %1166 = vmatpush1.bf16.msra.mxu0 %v1158
  %1167 = vmatprep.subr.bf16.mxu0 0
  %1168 = vmatpush1.bf16.msra.mxu0 %v1159
  %1169 = vmatprep.subr.bf16.mxu0 0
  %1170 = vmatpush1.bf16.msra.mxu0 0
  %1171 = vmatprep.subr.bf16.mxu0 0
  %1172 = vmatpush1.bf16.msra.mxu0 0
  %1173 = vmatprep.subr.bf16.mxu0 0
  %1174 = vmatpush1.bf16.msra.mxu0 0
  %1175 = vmatprep.subr.bf16.mxu0 0
  %1176 = vmatpush1.bf16.msra.mxu0 0
  %1177 = vmatprep.subr.bf16.mxu0 0
  %1178 = vmatpush1.bf16.msra.mxu0 0
  %1179 = vmatprep.subr.bf16.mxu0 0
  %1180 = vmatpush1.bf16.msra.mxu0 0
  %1181 = vmatprep.subr.bf16.mxu0 0
  %1182 = vmatpush1.bf16.msra.mxu0 0
  %1183 = vmatprep.subr.bf16.mxu0 0
  %1184 = vmatpush1.bf16.msra.mxu0 0
  %1185 = vmatprep.subr.bf16.mxu0 0
  %1186 = vmatpush1.bf16.msra.mxu0 0
  %1187 = vmatprep.subr.bf16.mxu0 0
  %1188 = vmatpush1.bf16.msra.mxu0 0
  %1189 = vmatprep.subr.bf16.mxu0 0
  %1190 = vmatpush1.bf16.msra.mxu0 0
  %1191 = vmatprep.subr.bf16.mxu0 0
  %1192 = vmatpush1.bf16.msra.mxu0 0
  %1193 = vmatprep.subr.bf16.mxu0 0
  %1194 = vmatpush1.bf16.msra.mxu0 0
  %1195 = vmatprep.subr.bf16.mxu0 0
  %1196 = vmatpush1.bf16.msra.mxu0 0
  %1197 = vmatprep.mubr.bf16.mxu0 0
  %1198 = vmatmul.mubr.bf16.gmra.mrb[0].mxu0 %v1163
  %v1199 = vpop.f32.mrb[0].mxu0
  %v1200 = vadd.f32 0.0, %v1199
  %v1201 = vpop.f32.mrb[0].mxu0
  %v1202 = vpop.f32.mrb[0].mxu0
  %v1203 = vpop.f32.mrb[0].mxu0
  %1204 = vdwg.mxu0
  %v1205 = vadd.f32 %v1081, %v1200
  %v1206 = vld [vmem:[#allocation3] sm:$0xff]
  %v1207 = vxor.u32 %v1143, 2147483648
  %v1208 = vmul.f32 %v1207, 1.442695
  %v1209 = vpow.pop %v1208
  %v1210 = vadd.f32 %v1209, 1.0
  %v1211 = vrcp.pop %v1210
  %v1212 = vmul.f32 1.0, %v1211
  %v1213 = vtanh.pop %v1143
  %1215 = vrot.lane.b32.xlu0 %v1206, 32
  %v1216 = vpop.permute.xlu0 %1215
  %v1218 = vmul.f32 %v1212, %v1216
  %1220 = vrot.lane.b32.xlu0 %v1213, 64
  %v1221 = vpop.permute.xlu0 %1220
  %v1223 = vmul.f32 %v1212, %v1221
  %1225 = vrot.lane.b32.xlu0 %v1223, 32
  %v1226 = vpop.permute.xlu0 %1225
  %v1228 = vadd.f32 %v1218, %v1226
  %v1229 = vtanh.pop %v1228
  %1231 = vrot.lane.b32.xlu0 %v1229, 64
  %v1232 = vpop.permute.xlu0 %1231
  %v1234 = vmul.f32 %v1212, %v1232
  %v1235 = vld [vmem:[#allocation5] sm:$0xff]
  %v1236 = vxor.u32 %v1205, 2147483648
  %v1237 = vmul.f32 %v1236, 1.442695
  %v1238 = vpow.pop %v1237
  %v1239 = vadd.f32 %v1238, 1.0
  %v1240 = vrcp.pop %v1239
  %v1241 = vmul.f32 1.0, %v1240
  %v1242 = vtanh.pop %v1205
  %1244 = vrot.lane.b32.xlu0 %v1235, 32
  %v1245 = vpop.permute.xlu0 %1244
  %v1247 = vmul.f32 %v1241, %v1245
  %1249 = vrot.lane.b32.xlu0 %v1242, 64
  %v1250 = vpop.permute.xlu0 %1249
  %v1252 = vmul.f32 %v1241, %v1250
  %1254 = vrot.lane.b32.xlu0 %v1252, 32
  %v1255 = vpop.permute.xlu0 %1254
  %v1257 = vadd.f32 %v1247, %v1255
  %v1258 = vtanh.pop %v1257
  %1260 = vrot.lane.b32.xlu0 %v1258, 64
  %v1261 = vpop.permute.xlu0 %1260
  %v1263 = vmul.f32 %v1241, %v1261
  %1265 = vrot.lane.b32.xlu0 %v1234, 32
  %v1266 = vpop.permute.xlu0 %1265
  %1268 = vst.msk [vmem:[#allocation2] sm:$0xff] %vm15, %v1266
  %1270 = vrot.lane.b32.xlu0 %v1228, 96
  %v1271 = vpop.permute.xlu0 %1270
  %1273 = vst.msk [vmem:[#allocation3] sm:$0xff] %vm15, %v1271
  %1275 = vrot.lane.b32.xlu0 %v1263, 32
  %v1276 = vpop.permute.xlu0 %1275
  %1278 = vst.msk [vmem:[#allocation4] sm:$0xff] %vm15, %v1276
  %1280 = vrot.lane.b32.xlu0 %v1257, 96
  %v1281 = vpop.permute.xlu0 %1280
  %1283 = vst.msk [vmem:[#allocation5] sm:$0xff] %vm15, %v1281
  %1284 = vst.msk [vmem:[%s656] sm:$0xff] %vm15, %v1266
  %1285 = vrot.lane.b32.xlu0 %v1263, 64
  %v1286 = vpop.permute.xlu0 %1285
  %1288 = vst.msk [vmem:[%s651] sm:$0xff] %vm230, %v1286
  %v1289 = vld [vmem:[%s234] sm:$0xff]
  %v1290 = vld [vmem:[%s232 + $0x8] sm:$0xff]
  %v1291 = vld [vmem:[#allocation2] sm:$0xff]
  %v1292 = vpack.c.bf16 %v1291, %v1291
  %v1293 = vld [vmem:[%s1] sm:$0xf]
  %v1294 = vld [vmem:[%s1 + $0x4] sm:$0xf]
  %v1295 = vld [vmem:[%s1 + $0x8] sm:$0xf]
  %v1296 = vld [vmem:[%s1 + $0xc] sm:$0xf]
  %v1301 = vunpack.c.l.b16 %v1293
  %v1302 = vunpack.c.l.b16 %v1294
  %v1303 = vunpack.c.l.b16 %v1295
  %v1304 = vunpack.c.l.b16 %v1296
  %v1305 = vpack.c.b16 %v1302, %v1301
  %v1306 = vpack.c.b16 %v1304, %v1303
  %v1310 = vsel %vm15, %v1292, 0
  %1312 = vmatprep.subr.bf16.mxu0 0
  %1313 = vmatpush1.bf16.msra.mxu0 %v1305
  %1314 = vmatprep.subr.bf16.mxu0 0
  %1315 = vmatpush1.bf16.msra.mxu0 %v1306
  %1316 = vmatprep.subr.bf16.mxu0 0
  %1317 = vmatpush1.bf16.msra.mxu0 0
  %1318 = vmatprep.subr.bf16.mxu0 0
  %1319 = vmatpush1.bf16.msra.mxu0 0
  %1320 = vmatprep.subr.bf16.mxu0 0
  %1321 = vmatpush1.bf16.msra.mxu0 0
  %1322 = vmatprep.subr.bf16.mxu0 0
  %1323 = vmatpush1.bf16.msra.mxu0 0
  %1324 = vmatprep.subr.bf16.mxu0 0
  %1325 = vmatpush1.bf16.msra.mxu0 0
  %1326 = vmatprep.subr.bf16.mxu0 0
  %1327 = vmatpush1.bf16.msra.mxu0 0
  %1328 = vmatprep.subr.bf16.mxu0 0
  %1329 = vmatpush1.bf16.msra.mxu0 0
  %1330 = vmatprep.subr.bf16.mxu0 0
  %1331 = vmatpush1.bf16.msra.mxu0 0
  %1332 = vmatprep.subr.bf16.mxu0 0
  %1333 = vmatpush1.bf16.msra.mxu0 0
  %1334 = vmatprep.subr.bf16.mxu0 0
  %1335 = vmatpush1.bf16.msra.mxu0 0
  %1336 = vmatprep.subr.bf16.mxu0 0
  %1337 = vmatpush1.bf16.msra.mxu0 0
  %1338 = vmatprep.subr.bf16.mxu0 0
  %1339 = vmatpush1.bf16.msra.mxu0 0
  %1340 = vmatprep.subr.bf16.mxu0 0
  %1341 = vmatpush1.bf16.msra.mxu0 0
  %1342 = vmatprep.subr.bf16.mxu0 0
  %1343 = vmatpush1.bf16.msra.mxu0 0
  %1344 = vmatprep.mubr.bf16.mxu0 0
  %1345 = vmatmul.mubr.bf16.gmra.mrb[0].mxu0 %v1310
  %v1346 = vpop.f32.mrb[0].mxu0
  %v1347 = vadd.f32 0.0, %v1346
  %v1348 = vpop.f32.mrb[0].mxu0
  %v1349 = vpop.f32.mrb[0].mxu0
  %v1350 = vpop.f32.mrb[0].mxu0
  %1351 = vdwg.mxu0
  %v1352 = vadd.f32 %v1289, %v1347
  %v1353 = vld [vmem:[#allocation4] sm:$0xff]
  %v1354 = vpack.c.bf16 %v1353, %v1353
  %v1355 = vld [vmem:[%s2] sm:$0xf]
  %v1356 = vld [vmem:[%s2 + $0x4] sm:$0xf]
  %v1357 = vld [vmem:[%s2 + $0x8] sm:$0xf]
  %v1358 = vld [vmem:[%s2 + $0xc] sm:$0xf]
  %v1363 = vunpack.c.l.b16 %v1355
  %v1364 = vunpack.c.l.b16 %v1356
  %v1365 = vunpack.c.l.b16 %v1357
  %v1366 = vunpack.c.l.b16 %v1358
  %v1367 = vpack.c.b16 %v1364, %v1363
  %v1368 = vpack.c.b16 %v1366, %v1365
  %v1372 = vsel %vm15, %v1354, 0
  %1374 = vmatprep.subr.bf16.mxu0 0
  %1375 = vmatpush1.bf16.msra.mxu0 %v1367
  %1376 = vmatprep.subr.bf16.mxu0 0
  %1377 = vmatpush1.bf16.msra.mxu0 %v1368
  %1378 = vmatprep.subr.bf16.mxu0 0
  %1379 = vmatpush1.bf16.msra.mxu0 0
  %1380 = vmatprep.subr.bf16.mxu0 0
  %1381 = vmatpush1.bf16.msra.mxu0 0
  %1382 = vmatprep.subr.bf16.mxu0 0
  %1383 = vmatpush1.bf16.msra.mxu0 0
  %1384 = vmatprep.subr.bf16.mxu0 0
  %1385 = vmatpush1.bf16.msra.mxu0 0
  %1386 = vmatprep.subr.bf16.mxu0 0
  %1387 = vmatpush1.bf16.msra.mxu0 0
  %1388 = vmatprep.subr.bf16.mxu0 0
  %1389 = vmatpush1.bf16.msra.mxu0 0
  %1390 = vmatprep.subr.bf16.mxu0 0
  %1391 = vmatpush1.bf16.msra.mxu0 0
  %1392 = vmatprep.subr.bf16.mxu0 0
  %1393 = vmatpush1.bf16.msra.mxu0 0
  %1394 = vmatprep.subr.bf16.mxu0 0
  %1395 = vmatpush1.bf16.msra.mxu0 0
  %1396 = vmatprep.subr.bf16.mxu0 0
  %1397 = vmatpush1.bf16.msra.mxu0 0
  %1398 = vmatprep.subr.bf16.mxu0 0
  %1399 = vmatpush1.bf16.msra.mxu0 0
  %1400 = vmatprep.subr.bf16.mxu0 0
  %1401 = vmatpush1.bf16.msra.mxu0 0
  %1402 = vmatprep.subr.bf16.mxu0 0
  %1403 = vmatpush1.bf16.msra.mxu0 0
  %1404 = vmatprep.subr.bf16.mxu0 0
  %1405 = vmatpush1.bf16.msra.mxu0 0
  %1406 = vmatprep.mubr.bf16.mxu0 0
  %1407 = vmatmul.mubr.bf16.gmra.mrb[0].mxu0 %v1372
  %v1408 = vpop.f32.mrb[0].mxu0
  %v1409 = vadd.f32 0.0, %v1408
  %v1410 = vpop.f32.mrb[0].mxu0
  %v1411 = vpop.f32.mrb[0].mxu0
  %v1412 = vpop.f32.mrb[0].mxu0
  %1413 = vdwg.mxu0
  %v1414 = vadd.f32 %v1290, %v1409
  %v1415 = vld [vmem:[#allocation3] sm:$0xff]
  %v1416 = vxor.u32 %v1352, 2147483648
  %v1417 = vmul.f32 %v1416, 1.442695
  %v1418 = vpow.pop %v1417
  %v1419 = vadd.f32 %v1418, 1.0
  %v1420 = vrcp.pop %v1419
  %v1421 = vmul.f32 1.0, %v1420
  %v1422 = vtanh.pop %v1352
  %1424 = vrot.lane.b32.xlu0 %v1415, 32
  %v1425 = vpop.permute.xlu0 %1424
  %v1427 = vmul.f32 %v1421, %v1425
  %1429 = vrot.lane.b32.xlu0 %v1422, 64
  %v1430 = vpop.permute.xlu0 %1429
  %v1432 = vmul.f32 %v1421, %v1430
  %1434 = vrot.lane.b32.xlu0 %v1432, 32
  %v1435 = vpop.permute.xlu0 %1434
  %v1437 = vadd.f32 %v1427, %v1435
  %v1438 = vtanh.pop %v1437
  %1440 = vrot.lane.b32.xlu0 %v1438, 64
  %v1441 = vpop.permute.xlu0 %1440
  %v1443 = vmul.f32 %v1421, %v1441
  %v1444 = vld [vmem:[#allocation5] sm:$0xff]
  %v1445 = vxor.u32 %v1414, 2147483648
  %v1446 = vmul.f32 %v1445, 1.442695
  %v1447 = vpow.pop %v1446
  %v1448 = vadd.f32 %v1447, 1.0
  %v1449 = vrcp.pop %v1448
  %v1450 = vmul.f32 1.0, %v1449
  %v1451 = vtanh.pop %v1414
  %1453 = vrot.lane.b32.xlu0 %v1444, 32
  %v1454 = vpop.permute.xlu0 %1453
  %v1456 = vmul.f32 %v1450, %v1454
  %1458 = vrot.lane.b32.xlu0 %v1451, 64
  %v1459 = vpop.permute.xlu0 %1458
  %v1461 = vmul.f32 %v1450, %v1459
  %1463 = vrot.lane.b32.xlu0 %v1461, 32
  %v1464 = vpop.permute.xlu0 %1463
  %v1466 = vadd.f32 %v1456, %v1464
  %v1467 = vtanh.pop %v1466
  %1469 = vrot.lane.b32.xlu0 %v1467, 64
  %v1470 = vpop.permute.xlu0 %1469
  %v1472 = vmul.f32 %v1450, %v1470
  %1474 = vrot.lane.b32.xlu0 %v1443, 32
  %v1475 = vpop.permute.xlu0 %1474
  %1477 = vst.msk [vmem:[#allocation2] sm:$0xff] %vm15, %v1475
  %1479 = vrot.lane.b32.xlu0 %v1437, 96
  %v1480 = vpop.permute.xlu0 %1479
  %1482 = vst.msk [vmem:[#allocation3] sm:$0xff] %vm15, %v1480
  %1484 = vrot.lane.b32.xlu0 %v1472, 32
  %v1485 = vpop.permute.xlu0 %1484
  %1487 = vst.msk [vmem:[#allocation4] sm:$0xff] %vm15, %v1485
  %1489 = vrot.lane.b32.xlu0 %v1466, 96
  %v1490 = vpop.permute.xlu0 %1489
  %1492 = vst.msk [vmem:[#allocation5] sm:$0xff] %vm15, %v1490
  %1493 = vst.msk [vmem:[%s443] sm:$0xff] %vm15, %v1475
  %1494 = vrot.lane.b32.xlu0 %v1472, 64
  %v1495 = vpop.permute.xlu0 %1494
  %1497 = vst.msk [vmem:[%s438] sm:$0xff] %vm230, %v1495
  %v1498 = vld [vmem:[%s21] sm:$0xff]
  %v1499 = vld [vmem:[%s0 + $0x8] sm:$0xff]
  %v1500 = vld [vmem:[#allocation2] sm:$0xff]
  %v1501 = vpack.c.bf16 %v1500, %v1500
  %v1502 = vld [vmem:[%s1] sm:$0xf]
  %v1503 = vld [vmem:[%s1 + $0x4] sm:$0xf]
  %v1504 = vld [vmem:[%s1 + $0x8] sm:$0xf]
  %v1505 = vld [vmem:[%s1 + $0xc] sm:$0xf]
  %v1510 = vunpack.c.l.b16 %v1502
  %v1511 = vunpack.c.l.b16 %v1503
  %v1512 = vunpack.c.l.b16 %v1504
  %v1513 = vunpack.c.l.b16 %v1505
  %v1514 = vpack.c.b16 %v1511, %v1510
  %v1515 = vpack.c.b16 %v1513, %v1512
  %v1519 = vsel %vm15, %v1501, 0
  %1521 = vmatprep.subr.bf16.mxu0 0
  %1522 = vmatpush1.bf16.msra.mxu0 %v1514
  %1523 = vmatprep.subr.bf16.mxu0 0
  %1524 = vmatpush1.bf16.msra.mxu0 %v1515
  %1525 = vmatprep.subr.bf16.mxu0 0
  %1526 = vmatpush1.bf16.msra.mxu0 0
  %1527 = vmatprep.subr.bf16.mxu0 0
  %1528 = vmatpush1.bf16.msra.mxu0 0
  %1529 = vmatprep.subr.bf16.mxu0 0
  %1530 = vmatpush1.bf16.msra.mxu0 0
  %1531 = vmatprep.subr.bf16.mxu0 0
  %1532 = vmatpush1.bf16.msra.mxu0 0
  %1533 = vmatprep.subr.bf16.mxu0 0
  %1534 = vmatpush1.bf16.msra.mxu0 0
  %1535 = vmatprep.subr.bf16.mxu0 0
  %1536 = vmatpush1.bf16.msra.mxu0 0
  %1537 = vmatprep.subr.bf16.mxu0 0
  %1538 = vmatpush1.bf16.msra.mxu0 0
  %1539 = vmatprep.subr.bf16.mxu0 0
  %1540 = vmatpush1.bf16.msra.mxu0 0
  %1541 = vmatprep.subr.bf16.mxu0 0
  %1542 = vmatpush1.bf16.msra.mxu0 0
  %1543 = vmatprep.subr.bf16.mxu0 0
  %1544 = vmatpush1.bf16.msra.mxu0 0
  %1545 = vmatprep.subr.bf16.mxu0 0
  %1546 = vmatpush1.bf16.msra.mxu0 0
  %1547 = vmatprep.subr.bf16.mxu0 0
  %1548 = vmatpush1.bf16.msra.mxu0 0
  %1549 = vmatprep.subr.bf16.mxu0 0
  %1550 = vmatpush1.bf16.msra.mxu0 0
  %1551 = vmatprep.subr.bf16.mxu0 0
  %1552 = vmatpush1.bf16.msra.mxu0 0
  %1553 = vmatprep.mubr.bf16.mxu0 0
  %1554 = vmatmul.mubr.bf16.gmra.mrb[0].mxu0 %v1519
  %v1555 = vpop.f32.mrb[0].mxu0
  %v1556 = vadd.f32 0.0, %v1555
  %v1557 = vpop.f32.mrb[0].mxu0
  %v1558 = vpop.f32.mrb[0].mxu0
  %v1559 = vpop.f32.mrb[0].mxu0
  %1560 = vdwg.mxu0
  %v1561 = vadd.f32 %v1498, %v1556
  %v1562 = vld [vmem:[#allocation4] sm:$0xff]
  %v1563 = vpack.c.bf16 %v1562, %v1562
  %v1564 = vld [vmem:[%s2] sm:$0xf]
  %v1565 = vld [vmem:[%s2 + $0x4] sm:$0xf]
  %v1566 = vld [vmem:[%s2 + $0x8] sm:$0xf]
  %v1567 = vld [vmem:[%s2 + $0xc] sm:$0xf]
  %v1572 = vunpack.c.l.b16 %v1564
  %v1573 = vunpack.c.l.b16 %v1565
  %v1574 = vunpack.c.l.b16 %v1566
  %v1575 = vunpack.c.l.b16 %v1567
  %v1576 = vpack.c.b16 %v1573, %v1572
  %v1577 = vpack.c.b16 %v1575, %v1574
  %v1581 = vsel %vm15, %v1563, 0
  %1583 = vmatprep.subr.bf16.mxu0 0
  %1584 = vmatpush1.bf16.msra.mxu0 %v1576
  %1585 = vmatprep.subr.bf16.mxu0 0
  %1586 = vmatpush1.bf16.msra.mxu0 %v1577
  %1587 = vmatprep.subr.bf16.mxu0 0
  %1588 = vmatpush1.bf16.msra.mxu0 0
  %1589 = vmatprep.subr.bf16.mxu0 0
  %1590 = vmatpush1.bf16.msra.mxu0 0
  %1591 = vmatprep.subr.bf16.mxu0 0
  %1592 = vmatpush1.bf16.msra.mxu0 0
  %1593 = vmatprep.subr.bf16.mxu0 0
  %1594 = vmatpush1.bf16.msra.mxu0 0
  %1595 = vmatprep.subr.bf16.mxu0 0
  %1596 = vmatpush1.bf16.msra.mxu0 0
  %1597 = vmatprep.subr.bf16.mxu0 0
  %1598 = vmatpush1.bf16.msra.mxu0 0
  %1599 = vmatprep.subr.bf16.mxu0 0
  %1600 = vmatpush1.bf16.msra.mxu0 0
  %1601 = vmatprep.subr.bf16.mxu0 0
  %1602 = vmatpush1.bf16.msra.mxu0 0
  %1603 = vmatprep.subr.bf16.mxu0 0
  %1604 = vmatpush1.bf16.msra.mxu0 0
  %1605 = vmatprep.subr.bf16.mxu0 0
  %1606 = vmatpush1.bf16.msra.mxu0 0
  %1607 = vmatprep.subr.bf16.mxu0 0
  %1608 = vmatpush1.bf16.msra.mxu0 0
  %1609 = vmatprep.subr.bf16.mxu0 0
  %1610 = vmatpush1.bf16.msra.mxu0 0
  %1611 = vmatprep.subr.bf16.mxu0 0
  %1612 = vmatpush1.bf16.msra.mxu0 0
  %1613 = vmatprep.subr.bf16.mxu0 0
  %1614 = vmatpush1.bf16.msra.mxu0 0
  %1615 = vmatprep.mubr.bf16.mxu0 0
  %1616 = vmatmul.mubr.bf16.gmra.mrb[0].mxu0 %v1581
  %v1617 = vpop.f32.mrb[0].mxu0
  %v1618 = vadd.f32 0.0, %v1617
  %v1619 = vpop.f32.mrb[0].mxu0
  %v1620 = vpop.f32.mrb[0].mxu0
  %v1621 = vpop.f32.mrb[0].mxu0
  %1622 = vdwg.mxu0
  %v1623 = vadd.f32 %v1499, %v1618
  %v1624 = vld [vmem:[#allocation3] sm:$0xff]
  %v1625 = vxor.u32 %v1561, 2147483648
  %v1626 = vmul.f32 %v1625, 1.442695
  %v1627 = vpow.pop %v1626
  %v1628 = vadd.f32 %v1627, 1.0
  %v1629 = vrcp.pop %v1628
  %v1630 = vmul.f32 1.0, %v1629
  %v1631 = vtanh.pop %v1561
  %1633 = vrot.lane.b32.xlu0 %v1624, 32
  %v1634 = vpop.permute.xlu0 %1633
  %v1636 = vmul.f32 %v1630, %v1634
  %1638 = vrot.lane.b32.xlu0 %v1631, 64
  %v1639 = vpop.permute.xlu0 %1638
  %v1641 = vmul.f32 %v1630, %v1639
  %1643 = vrot.lane.b32.xlu0 %v1641, 32
  %v1644 = vpop.permute.xlu0 %1643
  %v1646 = vadd.f32 %v1636, %v1644
  %v1647 = vtanh.pop %v1646
  %1649 = vrot.lane.b32.xlu0 %v1647, 64
  %v1650 = vpop.permute.xlu0 %1649
  %v1652 = vmul.f32 %v1630, %v1650
  %v1653 = vld [vmem:[#allocation5] sm:$0xff]
  %v1654 = vxor.u32 %v1623, 2147483648
  %v1655 = vmul.f32 %v1654, 1.442695
  %v1656 = vpow.pop %v1655
  %v1657 = vadd.f32 %v1656, 1.0
  %v1658 = vrcp.pop %v1657
  %v1659 = vmul.f32 1.0, %v1658
  %v1660 = vtanh.pop %v1623
  %1662 = vrot.lane.b32.xlu0 %v1653, 32
  %v1663 = vpop.permute.xlu0 %1662
  %v1665 = vmul.f32 %v1659, %v1663
  %1667 = vrot.lane.b32.xlu0 %v1660, 64
  %v1668 = vpop.permute.xlu0 %1667
  %v1670 = vmul.f32 %v1659, %v1668
  %1672 = vrot.lane.b32.xlu0 %v1670, 32
  %v1673 = vpop.permute.xlu0 %1672
  %v1675 = vadd.f32 %v1665, %v1673
  %v1676 = vtanh.pop %v1675
  %1678 = vrot.lane.b32.xlu0 %v1676, 64
  %v1679 = vpop.permute.xlu0 %1678
  %v1681 = vmul.f32 %v1659, %v1679
  %1683 = vrot.lane.b32.xlu0 %v1652, 32
  %v1684 = vpop.permute.xlu0 %1683
  %1686 = vst.msk [vmem:[#allocation2] sm:$0xff] %vm15, %v1684
  %1688 = vrot.lane.b32.xlu0 %v1646, 96
  %v1689 = vpop.permute.xlu0 %1688
  %1691 = vst.msk [vmem:[#allocation3] sm:$0xff] %vm15, %v1689
  %1693 = vrot.lane.b32.xlu0 %v1681, 32
  %v1694 = vpop.permute.xlu0 %1693
  %1696 = vst.msk [vmem:[#allocation4] sm:$0xff] %vm15, %v1694
  %1698 = vrot.lane.b32.xlu0 %v1675, 96
  %v1699 = vpop.permute.xlu0 %1698
  %1701 = vst.msk [vmem:[#allocation5] sm:$0xff] %vm15, %v1699
  %1702 = vst.msk [vmem:[%s229] sm:$0xff] %vm15, %v1684
  %1703 = vrot.lane.b32.xlu0 %v1681, 64
  %v1704 = vpop.permute.xlu0 %1703
  %1706 = vst.msk [vmem:[%s3] sm:$0xff] %vm230, %v1704
  // Predicated region
  $region14: #{lipnet_multi_imu_forward.14} parent=0 // pred_check
    _
  $region15: #{lipnet_multi_imu_forward.14} parent=0 // pred_check_branch
    %1708 = sbr.rel (0) target = $region17
  $region16: #{lipnet_multi_imu_forward.14} parent=0 // pred_region
    _
  $region17: #{lipnet_multi_imu_forward.14} parent=0 // pred_fallthru
    _
  // Predicated region
  $region18: #{lipnet_multi_imu_forward.14} parent=0 // pred_check
    _
  $region19: #{lipnet_multi_imu_forward.14} parent=0 // pred_check_branch
    %1710 = sbr.rel (0) target = $region21
  $region20: #{lipnet_multi_imu_forward.14} parent=0 // pred_region
    _
  $region21: #{lipnet_multi_imu_forward.14} parent=0 // pred_fallthru
    _

</llo_original>
